<compile_context>
chip_gen: v7x
topology: tpu7x:2x2x1
jax: 0.10.0
libtpu: 0.0.40
codegen_flags: <defaults>
</compile_context>

<pallas_src>
import math

import jax
import jax.numpy as jnp
from jax import lax
from jax.experimental import pallas as pl
from jax.experimental.pallas import tpu as pltpu

# ----------------- module hyper-parameters (from __init__) -----------------
D_FEATS = 12
D_COND = 16
D_MODEL = 32
N_DEC_LAYERS = 2
N_HEAD = 4
D_K = 8
D_V = 8
MAX_TIMESTEPS = 32
D_INNER = 4 * D_MODEL            # FFN hidden
TIME_SIN_DIM = 64                # `dim = 64` in the module
TIME_HIDDEN = TIME_SIN_DIM * 4   # `time_dim = dim * 4`
HEAD_PAD = 128                   # fused lane-dense output head: [linear_out(12) | vis_out(2) | pad]
GELU_C = 0.044715

# ----------------- f32 vector-blob row layout (biases / LN params) -----------------
VEC_WIDTH = 256
VEC_TB1, VEC_TB2, VEC_MB, VEC_CB, VEC_HB = 0, 1, 2, 3, 4
VEC_LAYER0 = 5
VEC_PER_LAYER = 8        # qkv_b, bo, ln1_g, ln1_b, ffn_b1, ffn_b2, ln2_g, ln2_b
VEC_ROWS = VEC_LAYER0 + VEC_PER_LAYER * N_DEC_LAYERS


# ================================ fused Pallas kernel ================================
def _fused_forward_kernel(
    src_ref, temb_ref, imgs_ref, bias_ref, pos_ref,
    tw1_ref, tw2_ref, mw_ref, cw_ref,
    qkvw_ref, wow_ref, f1w_ref, f2w_ref, hw_ref, vec_ref,
    out_ref,
    qkv_scr, ctx_scr, hbuf,
):
    f32, bf16 = jnp.float32, jnp.bfloat16
    B = temb_ref.shape[1]            # batch rows in this block
    BT = src_ref.shape[1]            # B * T motion rows
    T = BT // B
    N = B + BT                       # flat rows: [time tokens | motion rows (batch-major)]
    KOFF = N_HEAD * D_K
    VOFF = 2 * N_HEAD * D_K
    gc = math.sqrt(2.0 / math.pi)

    def mm(a, w_bf16):               # bf16 MXU matmul, f32 accumulate
        return jnp.dot(a.astype(bf16), w_bf16, preferred_element_type=f32)

    def vrow(r, width):              # (1, width) f32 row from the packed vector blob
        return vec_ref[r:r + 1, 0:width]

    def layer_norm(x, g, b):
        mu = jnp.mean(x, axis=-1, keepdims=True)
        var = jnp.mean(jnp.square(x - mu), axis=-1, keepdims=True)
        return (x - mu) * lax.rsqrt(var + 1e-5) * g + b

    # ---- time MLP on all B rows at once: Linear(64,256) -> GELU(tanh) -> Linear(256,32)
    t = mm(temb_ref[0], tw1_ref[...]) + vrow(VEC_TB1, TIME_HIDDEN)
    t = 0.5 * t * (1.0 + jnp.tanh(gc * (t + GELU_C * t * t * t)))
    time_tok = mm(t, tw2_ref[...]) + vrow(VEC_TB2, D_MODEL)                 # (B, D_MODEL)

    # ---- motion + condition projections on the flattened (B*T, .) rows
    m = mm(src_ref[0], mw_ref[...]) + vrow(VEC_MB, D_MODEL)                 # (BT, D_MODEL)
    cond = mm(imgs_ref[0], cw_ref[...]) + vrow(VEC_CB, D_MODEL)             # (B, D_MODEL)
    row = lax.broadcasted_iota(jnp.int32, (BT, D_MODEL), 0)
    cbc = jnp.zeros((BT, D_MODEL), f32)
    for b in range(B):               # broadcast each batch's cond row over its T motion rows
        cbc = jnp.where((row >= b * T) & (row < (b + 1) * T), cond[b:b + 1, :], cbc)
    m = m + cbc

    # assemble [time tokens | motion rows] via a VMEM scratch, then add positional embeddings
    hbuf[0:B, :] = time_tok
    hbuf[B:N, :] = m
    h = hbuf[...] + pos_ref[...]                                            # (N, D_MODEL) f32

    bias = bias_ref[0]                                                      # (N, N) additive mask

    for l in range(N_DEC_LAYERS):
        base = VEC_LAYER0 + l * VEC_PER_LAYER
        # fused QKV projection (one lane-dense matmul); per-head slices are static lane windows
        qkv_scr[...] = mm(h, qkvw_ref[l]) + vrow(base + 0, 3 * N_HEAD * D_K)
        for hh in range(N_HEAD):
            q = qkv_scr[:, hh * D_K:(hh + 1) * D_K]                         # (N, D_K) f32
            k = qkv_scr[:, KOFF + hh * D_K:KOFF + (hh + 1) * D_K]
            v = qkv_scr[:, VOFF + hh * D_V:VOFF + (hh + 1) * D_V]
            s = lax.dot_general(q.astype(bf16), k.astype(bf16),
                                (((1,), (1,)), ((), ())),
                                preferred_element_type=f32) + bias          # (N, N)
            s = s - jnp.max(s, axis=-1, keepdims=True)
            p = jnp.exp(s)
            p = p / jnp.sum(p, axis=-1, keepdims=True)                      # exact softmax
            ctx_scr[:, hh * D_V:(hh + 1) * D_V] = jnp.dot(
                p.astype(bf16), v.astype(bf16), preferred_element_type=f32)
        attn = mm(ctx_scr[...], wow_ref[l]) + vrow(base + 1, D_MODEL)       # single Wo matmul
        h = layer_norm(h + attn, vrow(base + 2, D_MODEL), vrow(base + 3, D_MODEL))

        ffn = jnp.maximum(mm(h, f1w_ref[l]) + vrow(base + 4, D_INNER), 0.0)
        ffn = mm(ffn, f2w_ref[l]) + vrow(base + 5, D_MODEL)
        h = layer_norm(h + ffn, vrow(base + 6, D_MODEL), vrow(base + 7, D_MODEL))

    # fused lane-dense output head: cols [0:12]=linear_out, [12:14]=vis_out, rest zero
    out_ref[0] = (mm(h, hw_ref[...]) + vrow(VEC_HB, HEAD_PAD)).astype(out_ref.dtype)


# ================================ parameters ================================
def sinusoid_pos_table(n_position, d_model):
    pos = jnp.arange(n_position, dtype=jnp.float32)[:, None]
    i = jnp.arange(d_model, dtype=jnp.float32)[None, :]
    angle = pos / jnp.power(10000.0, (2.0 * jnp.floor(i / 2.0)) / d_model)
    even = (jnp.arange(d_model) % 2) == 0
    return jnp.where(even[None, :], jnp.sin(angle), jnp.cos(angle)).astype(jnp.float32)


def _time_sinusoid(noise_t):
    half = TIME_SIN_DIM // 2
    emb = math.log(10000.0) / (half - 1)
    freqs = jnp.exp(jnp.arange(half, dtype=jnp.float32) * -emb)
    ang = noise_t.astype(jnp.float32)[:, None] * freqs[None, :]
    return jnp.concatenate([jnp.sin(ang), jnp.cos(ang)], axis=-1)           # (bs, 64)


def init_params(key):
    ks = jax.random.split(key, 28)
    it = iter(ks)

    def rnd(shape):
        return 0.05 * jax.random.normal(next(it), shape, jnp.float32)

    L, H = N_DEC_LAYERS, N_HEAD
    return {
        "time_w1": rnd((TIME_SIN_DIM, TIME_HIDDEN)), "time_b1": rnd((1, TIME_HIDDEN)),
        "time_w2": rnd((TIME_HIDDEN, D_MODEL)),      "time_b2": rnd((1, D_MODEL)),
        "motion_w": rnd((D_FEATS, D_MODEL)), "motion_b": rnd((1, D_MODEL)),
        "cond_w":   rnd((D_COND, D_MODEL)),  "cond_b":   rnd((1, D_MODEL)),
        "wq": rnd((L, H, D_MODEL, D_K)), "bq": rnd((L, H, 1, D_K)),
        "wk": rnd((L, H, D_MODEL, D_K)), "bk": rnd((L, H, 1, D_K)),
        "wv": rnd((L, H, D_MODEL, D_V)), "bv": rnd((L, H, 1, D_V)),
        "wo": rnd((L, H, D_V, D_MODEL)), "bo": rnd((L, 1, D_MODEL)),
        "ln1_g": jnp.ones((L, 1, D_MODEL), jnp.float32),
        "ln1_b": jnp.zeros((L, 1, D_MODEL), jnp.float32),
        "ffn_w1": rnd((L, D_MODEL, D_INNER)), "ffn_b1": rnd((L, 1, D_INNER)),
        "ffn_w2": rnd((L, D_INNER, D_MODEL)), "ffn_b2": rnd((L, 1, D_MODEL)),
        "ln2_g": jnp.ones((L, 1, D_MODEL), jnp.float32),
        "ln2_b": jnp.zeros((L, 1, D_MODEL), jnp.float32),
        "out_w": rnd((D_MODEL, D_FEATS)), "out_b": rnd((1, D_FEATS)),
        "vis_w": rnd((D_MODEL, 2)),       "vis_b": rnd((1, 2)),
    }


def pack_params(p):
    """Pack raw params into a handful of bf16 weight blobs + one f32 vector blob."""
    bf16 = jnp.bfloat16
    L, H = N_DEC_LAYERS, N_HEAD
    scale = 1.0 / math.sqrt(D_K)
    wq_s = p["wq"] * scale                               # fold 1/sqrt(d_k) into Q
    bq_s = p["bq"] * scale

    def heads_to_cols(w):                                # (L,H,Din,Dout) -> (L,Din,H*Dout)
        return jnp.transpose(w, (0, 2, 1, 3)).reshape(L, D_MODEL, -1)

    qkv_w = jnp.concatenate(
        [heads_to_cols(wq_s), heads_to_cols(p["wk"]), heads_to_cols(p["wv"])], axis=-1)   # (L,32,96)
    qkv_b = jnp.concatenate(
        [bq_s.reshape(L, -1), p["bk"].reshape(L, -1), p["bv"].reshape(L, -1)], axis=-1)   # (L,96)
    wo_w = p["wo"].reshape(L, H * D_V, D_MODEL)                                           # (L,32,32)

    head_w = jnp.zeros((D_MODEL, HEAD_PAD), jnp.float32)
    head_w = head_w.at[:, :D_FEATS].set(p["out_w"]).at[:, D_FEATS:D_FEATS + 2].set(p["vis_w"])
    head_b = jnp.zeros((HEAD_PAD,), jnp.float32)
    head_b = head_b.at[:D_FEATS].set(p["out_b"][0]).at[D_FEATS:D_FEATS + 2].set(p["vis_b"][0])

    vec = jnp.zeros((VEC_ROWS, VEC_WIDTH), jnp.float32)
    vec = vec.at[VEC_TB1, :TIME_HIDDEN].set(p["time_b1"][0])
    vec = vec.at[VEC_TB2, :D_MODEL].set(p["time_b2"][0])
    vec = vec.at[VEC_MB, :D_MODEL].set(p["motion_b"][0])
    vec = vec.at[VEC_CB, :D_MODEL].set(p["cond_b"][0])
    vec = vec.at[VEC_HB, :HEAD_PAD].set(head_b)
    for l in range(L):
        base = VEC_LAYER0 + l * VEC_PER_LAYER
        vec = vec.at[base + 0, :3 * H * D_K].set(qkv_b[l])
        vec = vec.at[base + 1, :D_MODEL].set(p["bo"][l, 0])
        vec = vec.at[base + 2, :D_MODEL].set(p["ln1_g"][l, 0])
        vec = vec.at[base + 3, :D_MODEL].set(p["ln1_b"][l, 0])
        vec = vec.at[base + 4, :D_INNER].set(p["ffn_b1"][l, 0])
        vec = vec.at[base + 5, :D_MODEL].set(p["ffn_b2"][l, 0])
        vec = vec.at[base + 6, :D_MODEL].set(p["ln2_g"][l, 0])
        vec = vec.at[base + 7, :D_MODEL].set(p["ln2_b"][l, 0])

    return {
        "tw1": p["time_w1"].astype(bf16), "tw2": p["time_w2"].astype(bf16),
        "mw": p["motion_w"].astype(bf16), "cw": p["cond_w"].astype(bf16),
        "qkv_w": qkv_w.astype(bf16), "wo_w": wo_w.astype(bf16),
        "f1w": p["ffn_w1"].astype(bf16), "f2w": p["ffn_w2"].astype(bf16),
        "head_w": head_w.astype(bf16), "vec": vec,
    }


# ================================ forward (one fused pallas_call) ================================
def transformer_diffusion_forward(packed, src, imgs_feat, noise_t, padding_mask=None):
    """src: (bs, T, d_feats); imgs_feat: (bs, d_cond); noise_t: (bs,)."""
    bs, T, _ = src.shape
    S = T + 1

    # batch blocking: whole batch per grid step for small bs, blocks of 8 rows otherwise
    B_BLK = bs if bs <= 8 else 8
    n_blk = -(-bs // B_BLK)
    bs_pad = n_blk * B_BLK
    if bs_pad != bs:
        pad = bs_pad - bs
        src = jnp.concatenate([src, jnp.zeros((pad, T, D_FEATS), src.dtype)], axis=0)
        imgs_feat = jnp.concatenate([imgs_feat, jnp.zeros((pad, D_COND), imgs_feat.dtype)], axis=0)
        noise_t = jnp.concatenate([noise_t, jnp.zeros((pad,), noise_t.dtype)], axis=0)
        if padding_mask is not None:
            padding_mask = jnp.concatenate(
                [padding_mask, jnp.ones((pad, 1, S), dtype=bool)], axis=0)

    BT = B_BLK * T
    N = B_BLK * S

    temb = _time_sinusoid(noise_t)                                         # (bs_pad, 64)
    src3 = src.astype(jnp.float32).reshape(n_blk, BT, D_FEATS)
    temb3 = temb.reshape(n_blk, B_BLK, TIME_SIN_DIM)
    imgs3 = imgs_feat.astype(jnp.float32).reshape(n_blk, B_BLK, D_COND)

    # compile-time constants (static shapes only -> folded by XLA, no runtime cost)
    tbl = sinusoid_pos_table(T + 2, D_MODEL)
    pos_flat = jnp.concatenate(
        [jnp.broadcast_to(tbl[1:2], (B_BLK, D_MODEL)),
         jnp.broadcast_to(tbl[None, 2:T + 2], (B_BLK, T, D_MODEL)).reshape(BT, D_MODEL)],
        axis=0)                                                            # (N, D_MODEL)
    seq_id = jnp.concatenate([jnp.arange(B_BLK), jnp.repeat(jnp.arange(B_BLK), T)])   # (N,)
    struct = jnp.where(seq_id[:, None] == seq_id[None, :], 0.0, -1e9).astype(jnp.float32)

    if padding_mask is None:
        # specialization: purely structural (cross-sequence) bias, shared by every block
        bias = struct[None]                                                # (1, N, N)
        bias_spec = pl.BlockSpec((1, N, N), lambda g: (0, 0, 0))
    else:
        pm = padding_mask[:, 0, :].reshape(n_blk, B_BLK, S)
        key_p = jnp.concatenate(
            [jnp.zeros((B_BLK,), jnp.int32), jnp.tile(jnp.arange(1, S), B_BLK)])
        keymask = pm[:, seq_id, key_p]                                     # (n_blk, N)
        bias = struct[None] + jnp.where(keymask, 0.0, -1e9)[:, None, :].astype(jnp.float32)
        bias_spec = pl.BlockSpec((1, N, N), lambda g: (g, 0, 0))

    weights = (packed["tw1"], packed["tw2"], packed["mw"], packed["cw"],
               packed["qkv_w"], packed["wo_w"], packed["f1w"], packed["f2w"],
               packed["head_w"], packed["vec"])

    def full_spec(a):   # whole array, constant index_map -> VMEM-resident across the grid
        if a.ndim == 2:
            return pl.BlockSpec(a.shape, lambda g: (0, 0))
        return pl.BlockSpec(a.shape, lambda g: (0, 0, 0))

    in_specs = [
        pl.BlockSpec((1, BT, D_FEATS), lambda g: (g, 0, 0)),               # src (flattened rows)
        pl.BlockSpec((1, B_BLK, TIME_SIN_DIM), lambda g: (g, 0, 0)),       # time sinusoid
        pl.BlockSpec((1, B_BLK, D_COND), lambda g: (g, 0, 0)),             # imgs_feat
        bias_spec,                                                         # attention bias
        full_spec(pos_flat),                                               # positional rows
    ] + [full_spec(w) for w in weights]

    out = pl.pallas_call(
        _fused_forward_kernel,
        out_shape=jax.ShapeDtypeStruct((n_blk, N, HEAD_PAD), jnp.float32),
        grid=(n_blk,),
        in_specs=in_specs,
        out_specs=pl.BlockSpec((1, N, HEAD_PAD), lambda g: (g, 0, 0)),
        scratch_shapes=[
            pltpu.VMEM((N, 3 * N_HEAD * D_K), jnp.float32),   # fused QKV
            pltpu.VMEM((N, N_HEAD * D_V), jnp.float32),       # per-head contexts
            pltpu.VMEM((N, D_MODEL), jnp.float32),            # [time tokens | motion rows]
        ],
        compiler_params=pltpu.CompilerParams(
            dimension_semantics=("parallel",) if n_blk > 1 else ("arbitrary",),
        ),
    )(src3, temb3, imgs3, bias, pos_flat, *weights)

    out = out[:, B_BLK:, :].reshape(bs_pad, T, HEAD_PAD)[:bs]              # drop time-token rows
    return out[..., :D_FEATS], out[..., D_FEATS:D_FEATS + 2]


# ================================ pure-JAX reference (same math / dtypes) ================================
def reference_forward(p, src, imgs_feat, noise_t, padding_mask=None):
    bs, T, _ = src.shape
    S = T + 1
    bf16 = jnp.bfloat16
    gc = math.sqrt(2.0 / math.pi)

    def dot(a, w):
        return jnp.dot(a.astype(bf16), w.astype(bf16), preferred_element_type=jnp.float32)

    def ln(x, g, b):
        mu = x.mean(-1, keepdims=True)
        var = jnp.square(x - mu).mean(-1, keepdims=True)
        return (x - mu) * lax.rsqrt(var + 1e-5) * g + b

    t = dot(_time_sinusoid(noise_t), p["time_w1"]) + p["time_b1"]
    t = 0.5 * t * (1.0 + jnp.tanh(gc * (t + GELU_C * t * t * t)))
    time_tok = dot(t, p["time_w2"]) + p["time_b2"]

    h = dot(src, p["motion_w"]) + p["motion_b"]
    h = h + (dot(imgs_feat, p["cond_w"]) + p["cond_b"])[:, None, :]
    h = jnp.concatenate([time_tok[:, None, :], h], axis=1)
    h = h + sinusoid_pos_table(T + 2, D_MODEL)[None, 1:S + 1]

    if padding_mask is None:
        bias = jnp.zeros((bs, 1, S), jnp.float32)
    else:
        bias = jnp.where(padding_mask, 0.0, -1e9).astype(jnp.float32)

    scale = 1.0 / math.sqrt(D_K)
    for l in range(N_DEC_LAYERS):
        attn = jnp.zeros_like(h)
        for hh in range(N_HEAD):
            q = dot(h, p["wq"][l, hh] * scale) + p["bq"][l, hh] * scale
            k = dot(h, p["wk"][l, hh]) + p["bk"][l, hh]
            v = dot(h, p["wv"][l, hh]) + p["bv"][l, hh]
            s = jnp.einsum("bqd,bkd->bqk", q.astype(bf16), k.astype(bf16),
                           preferred_element_type=jnp.float32) + bias
            s = s - s.max(-1, keepdims=True)
            pr = jnp.exp(s)
            pr = pr / pr.sum(-1, keepdims=True)
            ctx = jnp.einsum("bqk,bkd->bqd", pr.astype(bf16), v.astype(bf16),
                             preferred_element_type=jnp.float32)
            attn = attn + dot(ctx, p["wo"][l, hh])
        attn = attn + p["bo"][l]
        h = ln(h + attn, p["ln1_g"][l], p["ln1_b"][l])
        f = jnp.maximum(dot(h, p["ffn_w1"][l]) + p["ffn_b1"][l], 0.0)
        f = dot(f, p["ffn_w2"][l]) + p["ffn_b2"][l]
        h = ln(h + f, p["ln2_g"][l], p["ln2_b"][l])

    feat = h[:, 1:]
    output = dot(feat, p["out_w"]) + p["out_b"]
    vis_e = dot(feat, p["vis_w"]) + p["vis_b"]
    return output, vis_e


# ================================ main ================================
if __name__ == "__main__":
    key = jax.random.PRNGKey(0)
    pkey, k1, k2, k3 = jax.random.split(key, 4)
    params = init_params(pkey)
    packed = pack_params(params)   # one-time host-side packing (bf16 weights, fused QKV/Wo/head)

    bs, T = 2, 8
    src = jax.random.normal(k1, (bs, T, D_FEATS), jnp.float32)
    imgs_feat = jax.random.normal(k2, (bs, D_COND), jnp.float32)
    noise_t = jax.random.randint(k3, (bs,), 0, MAX_TIMESTEPS).astype(jnp.float32)

    fwd = jax.jit(transformer_diffusion_forward)
    output, vis_e = fwd(packed, src, imgs_feat, noise_t)
    jax.block_until_ready((output, vis_e))

    assert output.shape == (bs, T, D_FEATS), output.shape
    assert vis_e.shape == (bs, T, 2), vis_e.shape
    assert bool(jnp.all(jnp.isfinite(output))) and bool(jnp.all(jnp.isfinite(vis_e)))

    # parity vs. plain-JAX reference using identical bf16 matmul / f32 VPU numerics
    ref_out, ref_vis = reference_forward(params, src, imgs_feat, noise_t)
    err_out = float(jnp.max(jnp.abs(output - ref_out)))
    err_vis = float(jnp.max(jnp.abs(vis_e - ref_vis)))
    assert bool(jnp.allclose(output, ref_out, atol=1e-2, rtol=1e-2)), err_out
    assert bool(jnp.allclose(vis_e, ref_vis, atol=1e-2, rtol=1e-2)), err_vis

    print("KERNEL_OK")
</pallas_src>

<mosaic_0001>
module attributes {stable_mosaic.version = 11 : i64} {
  func.func @_fused_forward_kernel(%arg0: i32, %arg1: memref<1x16x12xf32, #tpu.memory_space<vmem>>, %arg2: memref<1x2x64xf32, #tpu.memory_space<vmem>>, %arg3: memref<1x2x16xf32, #tpu.memory_space<vmem>>, %arg4: memref<1x18x18xf32, #tpu.memory_space<vmem>>, %arg5: memref<18x32xf32, #tpu.memory_space<vmem>>, %arg6: memref<64x256xbf16, #tpu.memory_space<vmem>>, %arg7: memref<256x32xbf16, #tpu.memory_space<vmem>>, %arg8: memref<12x32xbf16, #tpu.memory_space<vmem>>, %arg9: memref<16x32xbf16, #tpu.memory_space<vmem>>, %arg10: memref<2x32x96xbf16, #tpu.memory_space<vmem>>, %arg11: memref<2x32x32xbf16, #tpu.memory_space<vmem>>, %arg12: memref<2x32x128xbf16, #tpu.memory_space<vmem>>, %arg13: memref<2x128x32xbf16, #tpu.memory_space<vmem>>, %arg14: memref<32x128xbf16, #tpu.memory_space<vmem>>, %arg15: memref<21x256xf32, #tpu.memory_space<vmem>>, %arg16: memref<1x18x128xf32, #tpu.memory_space<vmem>>, %arg17: memref<18x96xf32, #tpu.memory_space<vmem>>, %arg18: memref<18x32xf32, #tpu.memory_space<vmem>>, %arg19: memref<18x32xf32, #tpu.memory_space<vmem>>) attributes {dimension_semantics = [#tpu.dimension_semantics<arbitrary>], iteration_bounds = array<i64: 1>, scalar_prefetch = 0 : i64, scratch_operands = 3 : i64, tpu.core_type = #tpu.core_type<tc>, window_params = [{transform_indices = @transform_0, window_bounds = array<i64: 1, 16, 12>}, {transform_indices = @transform_1, window_bounds = array<i64: 1, 2, 64>}, {transform_indices = @transform_2, window_bounds = array<i64: 1, 2, 16>}, {pipeline_mode = #tpu.pipeline_mode<synchronous>, transform_indices = @transform_3, window_bounds = array<i64: 1, 18, 18>}, {pipeline_mode = #tpu.pipeline_mode<synchronous>, transform_indices = @transform_4, window_bounds = array<i64: 18, 32>}, {pipeline_mode = #tpu.pipeline_mode<synchronous>, transform_indices = @transform_5, window_bounds = array<i64: 64, 256>}, {pipeline_mode = #tpu.pipeline_mode<synchronous>, transform_indices = @transform_6, window_bounds = array<i64: 256, 32>}, {pipeline_mode = #tpu.pipeline_mode<synchronous>, transform_indices = @transform_7, window_bounds = array<i64: 12, 32>}, {pipeline_mode = #tpu.pipeline_mode<synchronous>, transform_indices = @transform_8, window_bounds = array<i64: 16, 32>}, {pipeline_mode = #tpu.pipeline_mode<synchronous>, transform_indices = @transform_9, window_bounds = array<i64: 2, 32, 96>}, {pipeline_mode = #tpu.pipeline_mode<synchronous>, transform_indices = @transform_10, window_bounds = array<i64: 2, 32, 32>}, {pipeline_mode = #tpu.pipeline_mode<synchronous>, transform_indices = @transform_11, window_bounds = array<i64: 2, 32, 128>}, {pipeline_mode = #tpu.pipeline_mode<synchronous>, transform_indices = @transform_12, window_bounds = array<i64: 2, 128, 32>}, {pipeline_mode = #tpu.pipeline_mode<synchronous>, transform_indices = @transform_13, window_bounds = array<i64: 32, 128>}, {pipeline_mode = #tpu.pipeline_mode<synchronous>, transform_indices = @transform_14, window_bounds = array<i64: 21, 256>}, {transform_indices = @transform_15, window_bounds = array<i64: 1, 18, 128>}]} {
    %c0 = arith.constant 0 : index
    %c0_0 = arith.constant 0 : index
    %c0_1 = arith.constant 0 : index
    %0 = vector.load %arg2[%c0, %c0_0, %c0_1] : memref<1x2x64xf32, #tpu.memory_space<vmem>>, vector<1x2x64xf32>
    %1 = vector.shape_cast %0 : vector<1x2x64xf32> to vector<2x64xf32>
    %c0_2 = arith.constant 0 : index
    %c0_3 = arith.constant 0 : index
    %2 = vector.load %arg6[%c0_2, %c0_3] : memref<64x256xbf16, #tpu.memory_space<vmem>>, vector<64x256xbf16>
    %3 = arith.truncf %1 : vector<2x64xf32> to vector<2x64xbf16>
    %cst = arith.constant dense<0.000000e+00> : vector<2x256xf32>
    %4 = tpu.matmul %3, %2, %cst {dimension_numbers = #tpu.dot_dimension_numbers<[1], [0], [0], [1], [0, 0, 1, 1], [], []>} : vector<2x64xbf16>, vector<64x256xbf16>, vector<2x256xf32> -> vector<2x256xf32>
    %c0_4 = arith.constant 0 : index
    %c0_5 = arith.constant 0 : index
    %5 = vector.load %arg15[%c0_4, %c0_5] : memref<21x256xf32, #tpu.memory_space<vmem>>, vector<1x256xf32>
    %6 = vector.broadcast %5 : vector<1x256xf32> to vector<2x256xf32>
    %7 = arith.addf %4, %6 : vector<2x256xf32>
    %cst_6 = arith.constant 5.000000e-01 : f32
    %8 = vector.broadcast %cst_6 : f32 to vector<2x256xf32>
    %9 = arith.mulf %8, %7 : vector<2x256xf32>
    %cst_7 = arith.constant 4.471500e-02 : f32
    %10 = vector.broadcast %cst_7 : f32 to vector<2x256xf32>
    %11 = arith.mulf %10, %7 : vector<2x256xf32>
    %12 = arith.mulf %11, %7 : vector<2x256xf32>
    %13 = arith.mulf %12, %7 : vector<2x256xf32>
    %14 = arith.addf %7, %13 : vector<2x256xf32>
    %cst_8 = arith.constant 0.797884583 : f32
    %15 = vector.broadcast %cst_8 : f32 to vector<2x256xf32>
    %16 = arith.mulf %15, %14 : vector<2x256xf32>
    %17 = math.tanh %16 : vector<2x256xf32>
    %cst_9 = arith.constant 1.000000e+00 : f32
    %18 = vector.broadcast %cst_9 : f32 to vector<2x256xf32>
    %19 = arith.addf %18, %17 : vector<2x256xf32>
    %20 = arith.mulf %9, %19 : vector<2x256xf32>
    %c0_10 = arith.constant 0 : index
    %c0_11 = arith.constant 0 : index
    %21 = vector.load %arg7[%c0_10, %c0_11] : memref<256x32xbf16, #tpu.memory_space<vmem>>, vector<256x32xbf16>
    %22 = arith.truncf %20 : vector<2x256xf32> to vector<2x256xbf16>
    %cst_12 = arith.constant dense<0.000000e+00> : vector<2x32xf32>
    %23 = tpu.matmul %22, %21, %cst_12 {dimension_numbers = #tpu.dot_dimension_numbers<[1], [0], [0], [1], [0, 0, 1, 1], [], []>} : vector<2x256xbf16>, vector<256x32xbf16>, vector<2x32xf32> -> vector<2x32xf32>
    %c1 = arith.constant 1 : index
    %c0_13 = arith.constant 0 : index
    %24 = vector.load %arg15[%c1, %c0_13] : memref<21x256xf32, #tpu.memory_space<vmem>>, vector<1x32xf32>
    %25 = vector.broadcast %24 : vector<1x32xf32> to vector<2x32xf32>
    %26 = arith.addf %23, %25 : vector<2x32xf32>
    %c0_14 = arith.constant 0 : index
    %c0_15 = arith.constant 0 : index
    %c0_16 = arith.constant 0 : index
    %27 = vector.load %arg1[%c0_14, %c0_15, %c0_16] : memref<1x16x12xf32, #tpu.memory_space<vmem>>, vector<1x16x12xf32>
    %28 = vector.shape_cast %27 : vector<1x16x12xf32> to vector<16x12xf32>
    %c0_17 = arith.constant 0 : index
    %c0_18 = arith.constant 0 : index
    %29 = vector.load %arg8[%c0_17, %c0_18] : memref<12x32xbf16, #tpu.memory_space<vmem>>, vector<12x32xbf16>
    %30 = arith.truncf %28 : vector<16x12xf32> to vector<16x12xbf16>
    %cst_19 = arith.constant dense<0.000000e+00> : vector<16x32xf32>
    %31 = tpu.matmul %30, %29, %cst_19 {dimension_numbers = #tpu.dot_dimension_numbers<[1], [0], [0], [1], [0, 0, 1, 1], [], []>} : vector<16x12xbf16>, vector<12x32xbf16>, vector<16x32xf32> -> vector<16x32xf32>
    %c2 = arith.constant 2 : index
    %c0_20 = arith.constant 0 : index
    %32 = vector.load %arg15[%c2, %c0_20] : memref<21x256xf32, #tpu.memory_space<vmem>>, vector<1x32xf32>
    %33 = vector.broadcast %32 : vector<1x32xf32> to vector<16x32xf32>
    %34 = arith.addf %31, %33 : vector<16x32xf32>
    %c0_21 = arith.constant 0 : index
    %c0_22 = arith.constant 0 : index
    %c0_23 = arith.constant 0 : index
    %35 = vector.load %arg3[%c0_21, %c0_22, %c0_23] : memref<1x2x16xf32, #tpu.memory_space<vmem>>, vector<1x2x16xf32>
    %36 = vector.shape_cast %35 : vector<1x2x16xf32> to vector<2x16xf32>
    %c0_24 = arith.constant 0 : index
    %c0_25 = arith.constant 0 : index
    %37 = vector.load %arg9[%c0_24, %c0_25] : memref<16x32xbf16, #tpu.memory_space<vmem>>, vector<16x32xbf16>
    %38 = arith.truncf %36 : vector<2x16xf32> to vector<2x16xbf16>
    %cst_26 = arith.constant dense<0.000000e+00> : vector<2x32xf32>
    %39 = tpu.matmul %38, %37, %cst_26 {dimension_numbers = #tpu.dot_dimension_numbers<[1], [0], [0], [1], [0, 0, 1, 1], [], []>} : vector<2x16xbf16>, vector<16x32xbf16>, vector<2x32xf32> -> vector<2x32xf32>
    %c3 = arith.constant 3 : index
    %c0_27 = arith.constant 0 : index
    %40 = vector.load %arg15[%c3, %c0_27] : memref<21x256xf32, #tpu.memory_space<vmem>>, vector<1x32xf32>
    %41 = vector.broadcast %40 : vector<1x32xf32> to vector<2x32xf32>
    %42 = arith.addf %39, %41 : vector<2x32xf32>
    %43 = tpu.iota {dimensions = array<i32: 0>} : vector<16x32xi32>
    %cst_28 = arith.constant 0.000000e+00 : f32
    %44 = vector.broadcast %cst_28 : f32 to vector<16x32xf32>
    %c0_i32 = arith.constant 0 : i32
    %45 = vector.broadcast %c0_i32 : i32 to vector<16x32xi32>
    %46 = arith.cmpi sge, %43, %45 : vector<16x32xi32>
    %c8_i32 = arith.constant 8 : i32
    %47 = vector.broadcast %c8_i32 : i32 to vector<16x32xi32>
    %48 = arith.cmpi slt, %43, %47 : vector<16x32xi32>
    %49 = arith.andi %46, %48 : vector<16x32xi1>
    %50 = vector.extract_strided_slice %42 {offsets = [0, 0], sizes = [1, 32], strides = [1, 1]} : vector<2x32xf32> to vector<1x32xf32>
    %51 = vector.shape_cast %50 : vector<1x32xf32> to vector<1x32xf32>
    %52 = vector.broadcast %51 : vector<1x32xf32> to vector<16x32xf32>
    %53 = arith.select %49, %52, %44 : vector<16x32xi1>, vector<16x32xf32>
    %c8_i32_29 = arith.constant 8 : i32
    %54 = vector.broadcast %c8_i32_29 : i32 to vector<16x32xi32>
    %55 = arith.cmpi sge, %43, %54 : vector<16x32xi32>
    %c16_i32 = arith.constant 16 : i32
    %56 = vector.broadcast %c16_i32 : i32 to vector<16x32xi32>
    %57 = arith.cmpi slt, %43, %56 : vector<16x32xi32>
    %58 = arith.andi %55, %57 : vector<16x32xi1>
    %59 = vector.extract_strided_slice %42 {offsets = [1, 0], sizes = [1, 32], strides = [1, 1]} : vector<2x32xf32> to vector<1x32xf32>
    %60 = vector.shape_cast %59 : vector<1x32xf32> to vector<1x32xf32>
    %61 = vector.broadcast %60 : vector<1x32xf32> to vector<16x32xf32>
    %62 = arith.select %58, %61, %53 : vector<16x32xi1>, vector<16x32xf32>
    %63 = arith.addf %34, %62 : vector<16x32xf32>
    %c0_30 = arith.constant 0 : index
    %c0_31 = arith.constant 0 : index
    %64 = vector.load %arg19[%c0_30, %c0_31] : memref<18x32xf32, #tpu.memory_space<vmem>>, vector<2x32xf32>
    tpu.vector_store %arg19[%c0_30, %c0_31], %26 {strides = array<i32>} : memref<18x32xf32, #tpu.memory_space<vmem>>, vector<2x32xf32>,
    %c2_32 = arith.constant 2 : index
    %c0_33 = arith.constant 0 : index
    %65 = vector.load %arg19[%c2_32, %c0_33] : memref<18x32xf32, #tpu.memory_space<vmem>>, vector<16x32xf32>
    tpu.vector_store %arg19[%c2_32, %c0_33], %63 {strides = array<i32>} : memref<18x32xf32, #tpu.memory_space<vmem>>, vector<16x32xf32>,
    %c0_34 = arith.constant 0 : index
    %c0_35 = arith.constant 0 : index
    %66 = vector.load %arg19[%c0_34, %c0_35] : memref<18x32xf32, #tpu.memory_space<vmem>>, vector<18x32xf32>
    %c0_36 = arith.constant 0 : index
    %c0_37 = arith.constant 0 : index
    %67 = vector.load %arg5[%c0_36, %c0_37] : memref<18x32xf32, #tpu.memory_space<vmem>>, vector<18x32xf32>
    %68 = arith.addf %66, %67 : vector<18x32xf32>
    %c0_38 = arith.constant 0 : index
    %c0_39 = arith.constant 0 : index
    %c0_40 = arith.constant 0 : index
    %69 = vector.load %arg4[%c0_38, %c0_39, %c0_40] : memref<1x18x18xf32, #tpu.memory_space<vmem>>, vector<1x18x18xf32>
    %70 = vector.shape_cast %69 : vector<1x18x18xf32> to vector<18x18xf32>
    %c0_41 = arith.constant 0 : index
    %c0_42 = arith.constant 0 : index
    %c0_43 = arith.constant 0 : index
    %71 = vector.load %arg10[%c0_41, %c0_42, %c0_43] : memref<2x32x96xbf16, #tpu.memory_space<vmem>>, vector<1x32x96xbf16>
    %72 = vector.shape_cast %71 : vector<1x32x96xbf16> to vector<32x96xbf16>
    %73 = arith.truncf %68 : vector<18x32xf32> to vector<18x32xbf16>
    %cst_44 = arith.constant dense<0.000000e+00> : vector<18x96xf32>
    %74 = tpu.matmul %73, %72, %cst_44 {dimension_numbers = #tpu.dot_dimension_numbers<[1], [0], [0], [1], [0, 0, 1, 1], [], []>} : vector<18x32xbf16>, vector<32x96xbf16>, vector<18x96xf32> -> vector<18x96xf32>
    %c5 = arith.constant 5 : index
    %c0_45 = arith.constant 0 : index
    %75 = vector.load %arg15[%c5, %c0_45] : memref<21x256xf32, #tpu.memory_space<vmem>>, vector<1x96xf32>
    %76 = vector.broadcast %75 : vector<1x96xf32> to vector<18x96xf32>
    %77 = arith.addf %74, %76 : vector<18x96xf32>
    %c0_46 = arith.constant 0 : index
    %c0_47 = arith.constant 0 : index
    %78 = vector.load %arg17[%c0_46, %c0_47] : memref<18x96xf32, #tpu.memory_space<vmem>>, vector<18x96xf32>
    tpu.vector_store %arg17[%c0_46, %c0_47], %77 {strides = array<i32>} : memref<18x96xf32, #tpu.memory_space<vmem>>, vector<18x96xf32>,
    %c0_48 = arith.constant 0 : index
    %c0_49 = arith.constant 0 : index
    %79 = vector.load %arg17[%c0_48, %c0_49] : memref<18x96xf32, #tpu.memory_space<vmem>>, vector<18x8xf32>
    %c0_50 = arith.constant 0 : index
    %c32 = arith.constant 32 : index
    %80 = vector.load %arg17[%c0_50, %c32] : memref<18x96xf32, #tpu.memory_space<vmem>>, vector<18x8xf32>
    %c0_51 = arith.constant 0 : index
    %c64 = arith.constant 64 : index
    %81 = vector.load %arg17[%c0_51, %c64] : memref<18x96xf32, #tpu.memory_space<vmem>>, vector<18x8xf32>
    %82 = arith.truncf %79 : vector<18x8xf32> to vector<18x8xbf16>
    %83 = arith.truncf %80 : vector<18x8xf32> to vector<18x8xbf16>
    %cst_52 = arith.constant dense<0.000000e+00> : vector<18x18xf32>
    %84 = tpu.matmul %82, %83, %cst_52 {dimension_numbers = #tpu.dot_dimension_numbers<[1], [1], [0], [0], [0, 0, 1, 0], [], []>} : vector<18x8xbf16>, vector<18x8xbf16>, vector<18x18xf32> -> vector<18x18xf32>
    %85 = arith.addf %84, %70 : vector<18x18xf32>
    %cst_53 = arith.constant dense<0xFF800000> : vector<18xf32>
    %86 = vector.multi_reduction <maximumf>, %85, %cst_53 [1] : vector<18x18xf32> to vector<18xf32>
    %87 = vector.shape_cast %86 : vector<18xf32> to vector<18x1xf32>
    %88 = vector.broadcast %87 : vector<18x1xf32> to vector<18x18xf32>
    %89 = arith.subf %85, %88 : vector<18x18xf32>
    %90 = math.exp %89 : vector<18x18xf32>
    %cst_54 = arith.constant dense<0.000000e+00> : vector<18xf32>
    %91 = vector.multi_reduction <add>, %90, %cst_54 [1] : vector<18x18xf32> to vector<18xf32>
    %92 = vector.shape_cast %91 : vector<18xf32> to vector<18x1xf32>
    %93 = vector.broadcast %92 : vector<18x1xf32> to vector<18x18xf32>
    %94 = arith.divf %90, %93 : vector<18x18xf32>
    %95 = arith.truncf %94 : vector<18x18xf32> to vector<18x18xbf16>
    %96 = arith.truncf %81 : vector<18x8xf32> to vector<18x8xbf16>
    %cst_55 = arith.constant dense<0.000000e+00> : vector<18x8xf32>
    %97 = tpu.matmul %95, %96, %cst_55 {dimension_numbers = #tpu.dot_dimension_numbers<[1], [0], [0], [1], [0, 0, 1, 1], [], []>} : vector<18x18xbf16>, vector<18x8xbf16>, vector<18x8xf32> -> vector<18x8xf32>
    %c0_56 = arith.constant 0 : index
    %c0_57 = arith.constant 0 : index
    %98 = vector.load %arg18[%c0_56, %c0_57] : memref<18x32xf32, #tpu.memory_space<vmem>>, vector<18x8xf32>
    tpu.vector_store %arg18[%c0_56, %c0_57], %97 {strides = array<i32>} : memref<18x32xf32, #tpu.memory_space<vmem>>, vector<18x8xf32>,
    %c0_58 = arith.constant 0 : index
    %c8 = arith.constant 8 : index
    %99 = vector.load %arg17[%c0_58, %c8] : memref<18x96xf32, #tpu.memory_space<vmem>>, vector<18x8xf32>
    %c0_59 = arith.constant 0 : index
    %c40 = arith.constant 40 : index
    %100 = vector.load %arg17[%c0_59, %c40] : memref<18x96xf32, #tpu.memory_space<vmem>>, vector<18x8xf32>
    %c0_60 = arith.constant 0 : index
    %c72 = arith.constant 72 : index
    %101 = vector.load %arg17[%c0_60, %c72] : memref<18x96xf32, #tpu.memory_space<vmem>>, vector<18x8xf32>
    %102 = arith.truncf %99 : vector<18x8xf32> to vector<18x8xbf16>
    %103 = arith.truncf %100 : vector<18x8xf32> to vector<18x8xbf16>
    %cst_61 = arith.constant dense<0.000000e+00> : vector<18x18xf32>
    %104 = tpu.matmul %102, %103, %cst_61 {dimension_numbers = #tpu.dot_dimension_numbers<[1], [1], [0], [0], [0, 0, 1, 0], [], []>} : vector<18x8xbf16>, vector<18x8xbf16>, vector<18x18xf32> -> vector<18x18xf32>
    %105 = arith.addf %104, %70 : vector<18x18xf32>
    %cst_62 = arith.constant dense<0xFF800000> : vector<18xf32>
    %106 = vector.multi_reduction <maximumf>, %105, %cst_62 [1] : vector<18x18xf32> to vector<18xf32>
    %107 = vector.shape_cast %106 : vector<18xf32> to vector<18x1xf32>
    %108 = vector.broadcast %107 : vector<18x1xf32> to vector<18x18xf32>
    %109 = arith.subf %105, %108 : vector<18x18xf32>
    %110 = math.exp %109 : vector<18x18xf32>
    %cst_63 = arith.constant dense<0.000000e+00> : vector<18xf32>
    %111 = vector.multi_reduction <add>, %110, %cst_63 [1] : vector<18x18xf32> to vector<18xf32>
    %112 = vector.shape_cast %111 : vector<18xf32> to vector<18x1xf32>
    %113 = vector.broadcast %112 : vector<18x1xf32> to vector<18x18xf32>
    %114 = arith.divf %110, %113 : vector<18x18xf32>
    %115 = arith.truncf %114 : vector<18x18xf32> to vector<18x18xbf16>
    %116 = arith.truncf %101 : vector<18x8xf32> to vector<18x8xbf16>
    %cst_64 = arith.constant dense<0.000000e+00> : vector<18x8xf32>
    %117 = tpu.matmul %115, %116, %cst_64 {dimension_numbers = #tpu.dot_dimension_numbers<[1], [0], [0], [1], [0, 0, 1, 1], [], []>} : vector<18x18xbf16>, vector<18x8xbf16>, vector<18x8xf32> -> vector<18x8xf32>
    %c0_65 = arith.constant 0 : index
    %c8_66 = arith.constant 8 : index
    %118 = vector.load %arg18[%c0_65, %c8_66] : memref<18x32xf32, #tpu.memory_space<vmem>>, vector<18x8xf32>
    tpu.vector_store %arg18[%c0_65, %c8_66], %117 {strides = array<i32>} : memref<18x32xf32, #tpu.memory_space<vmem>>, vector<18x8xf32>,
    %c0_67 = arith.constant 0 : index
    %c16 = arith.constant 16 : index
    %119 = vector.load %arg17[%c0_67, %c16] : memref<18x96xf32, #tpu.memory_space<vmem>>, vector<18x8xf32>
    %c0_68 = arith.constant 0 : index
    %c48 = arith.constant 48 : index
    %120 = vector.load %arg17[%c0_68, %c48] : memref<18x96xf32, #tpu.memory_space<vmem>>, vector<18x8xf32>
    %c0_69 = arith.constant 0 : index
    %c80 = arith.constant 80 : index
    %121 = vector.load %arg17[%c0_69, %c80] : memref<18x96xf32, #tpu.memory_space<vmem>>, vector<18x8xf32>
    %122 = arith.truncf %119 : vector<18x8xf32> to vector<18x8xbf16>
    %123 = arith.truncf %120 : vector<18x8xf32> to vector<18x8xbf16>
    %cst_70 = arith.constant dense<0.000000e+00> : vector<18x18xf32>
    %124 = tpu.matmul %122, %123, %cst_70 {dimension_numbers = #tpu.dot_dimension_numbers<[1], [1], [0], [0], [0, 0, 1, 0], [], []>} : vector<18x8xbf16>, vector<18x8xbf16>, vector<18x18xf32> -> vector<18x18xf32>
    %125 = arith.addf %124, %70 : vector<18x18xf32>
    %cst_71 = arith.constant dense<0xFF800000> : vector<18xf32>
    %126 = vector.multi_reduction <maximumf>, %125, %cst_71 [1] : vector<18x18xf32> to vector<18xf32>
    %127 = vector.shape_cast %126 : vector<18xf32> to vector<18x1xf32>
    %128 = vector.broadcast %127 : vector<18x1xf32> to vector<18x18xf32>
    %129 = arith.subf %125, %128 : vector<18x18xf32>
    %130 = math.exp %129 : vector<18x18xf32>
    %cst_72 = arith.constant dense<0.000000e+00> : vector<18xf32>
    %131 = vector.multi_reduction <add>, %130, %cst_72 [1] : vector<18x18xf32> to vector<18xf32>
    %132 = vector.shape_cast %131 : vector<18xf32> to vector<18x1xf32>
    %133 = vector.broadcast %132 : vector<18x1xf32> to vector<18x18xf32>
    %134 = arith.divf %130, %133 : vector<18x18xf32>
    %135 = arith.truncf %134 : vector<18x18xf32> to vector<18x18xbf16>
    %136 = arith.truncf %121 : vector<18x8xf32> to vector<18x8xbf16>
    %cst_73 = arith.constant dense<0.000000e+00> : vector<18x8xf32>
    %137 = tpu.matmul %135, %136, %cst_73 {dimension_numbers = #tpu.dot_dimension_numbers<[1], [0], [0], [1], [0, 0, 1, 1], [], []>} : vector<18x18xbf16>, vector<18x8xbf16>, vector<18x8xf32> -> vector<18x8xf32>
    %c0_74 = arith.constant 0 : index
    %c16_75 = arith.constant 16 : index
    %138 = vector.load %arg18[%c0_74, %c16_75] : memref<18x32xf32, #tpu.memory_space<vmem>>, vector<18x8xf32>
    tpu.vector_store %arg18[%c0_74, %c16_75], %137 {strides = array<i32>} : memref<18x32xf32, #tpu.memory_space<vmem>>, vector<18x8xf32>,
    %c0_76 = arith.constant 0 : index
    %c24 = arith.constant 24 : index
    %139 = vector.load %arg17[%c0_76, %c24] : memref<18x96xf32, #tpu.memory_space<vmem>>, vector<18x8xf32>
    %c0_77 = arith.constant 0 : index
    %c56 = arith.constant 56 : index
    %140 = vector.load %arg17[%c0_77, %c56] : memref<18x96xf32, #tpu.memory_space<vmem>>, vector<18x8xf32>
    %c0_78 = arith.constant 0 : index
    %c88 = arith.constant 88 : index
    %141 = vector.load %arg17[%c0_78, %c88] : memref<18x96xf32, #tpu.memory_space<vmem>>, vector<18x8xf32>
    %142 = arith.truncf %139 : vector<18x8xf32> to vector<18x8xbf16>
    %143 = arith.truncf %140 : vector<18x8xf32> to vector<18x8xbf16>
    %cst_79 = arith.constant dense<0.000000e+00> : vector<18x18xf32>
    %144 = tpu.matmul %142, %143, %cst_79 {dimension_numbers = #tpu.dot_dimension_numbers<[1], [1], [0], [0], [0, 0, 1, 0], [], []>} : vector<18x8xbf16>, vector<18x8xbf16>, vector<18x18xf32> -> vector<18x18xf32>
    %145 = arith.addf %144, %70 : vector<18x18xf32>
    %cst_80 = arith.constant dense<0xFF800000> : vector<18xf32>
    %146 = vector.multi_reduction <maximumf>, %145, %cst_80 [1] : vector<18x18xf32> to vector<18xf32>
    %147 = vector.shape_cast %146 : vector<18xf32> to vector<18x1xf32>
    %148 = vector.broadcast %147 : vector<18x1xf32> to vector<18x18xf32>
    %149 = arith.subf %145, %148 : vector<18x18xf32>
    %150 = math.exp %149 : vector<18x18xf32>
    %cst_81 = arith.constant dense<0.000000e+00> : vector<18xf32>
    %151 = vector.multi_reduction <add>, %150, %cst_81 [1] : vector<18x18xf32> to vector<18xf32>
    %152 = vector.shape_cast %151 : vector<18xf32> to vector<18x1xf32>
    %153 = vector.broadcast %152 : vector<18x1xf32> to vector<18x18xf32>
    %154 = arith.divf %150, %153 : vector<18x18xf32>
    %155 = arith.truncf %154 : vector<18x18xf32> to vector<18x18xbf16>
    %156 = arith.truncf %141 : vector<18x8xf32> to vector<18x8xbf16>
    %cst_82 = arith.constant dense<0.000000e+00> : vector<18x8xf32>
    %157 = tpu.matmul %155, %156, %cst_82 {dimension_numbers = #tpu.dot_dimension_numbers<[1], [0], [0], [1], [0, 0, 1, 1], [], []>} : vector<18x18xbf16>, vector<18x8xbf16>, vector<18x8xf32> -> vector<18x8xf32>
    %c0_83 = arith.constant 0 : index
    %c24_84 = arith.constant 24 : index
    %158 = vector.load %arg18[%c0_83, %c24_84] : memref<18x32xf32, #tpu.memory_space<vmem>>, vector<18x8xf32>
    tpu.vector_store %arg18[%c0_83, %c24_84], %157 {strides = array<i32>} : memref<18x32xf32, #tpu.memory_space<vmem>>, vector<18x8xf32>,
    %c0_85 = arith.constant 0 : index
    %c0_86 = arith.constant 0 : index
    %159 = vector.load %arg18[%c0_85, %c0_86] : memref<18x32xf32, #tpu.memory_space<vmem>>, vector<18x32xf32>
    %c0_87 = arith.constant 0 : index
    %c0_88 = arith.constant 0 : index
    %c0_89 = arith.constant 0 : index
    %160 = vector.load %arg11[%c0_87, %c0_88, %c0_89] : memref<2x32x32xbf16, #tpu.memory_space<vmem>>, vector<1x32x32xbf16>
    %161 = vector.shape_cast %160 : vector<1x32x32xbf16> to vector<32x32xbf16>
    %162 = arith.truncf %159 : vector<18x32xf32> to vector<18x32xbf16>
    %cst_90 = arith.constant dense<0.000000e+00> : vector<18x32xf32>
    %163 = tpu.matmul %162, %161, %cst_90 {dimension_numbers = #tpu.dot_dimension_numbers<[1], [0], [0], [1], [0, 0, 1, 1], [], []>} : vector<18x32xbf16>, vector<32x32xbf16>, vector<18x32xf32> -> vector<18x32xf32>
    %c6 = arith.constant 6 : index
    %c0_91 = arith.constant 0 : index
    %164 = vector.load %arg15[%c6, %c0_91] : memref<21x256xf32, #tpu.memory_space<vmem>>, vector<1x32xf32>
    %165 = vector.broadcast %164 : vector<1x32xf32> to vector<18x32xf32>
    %166 = arith.addf %163, %165 : vector<18x32xf32>
    %167 = arith.addf %68, %166 : vector<18x32xf32>
    %c7 = arith.constant 7 : index
    %c0_92 = arith.constant 0 : index
    %168 = vector.load %arg15[%c7, %c0_92] : memref<21x256xf32, #tpu.memory_space<vmem>>, vector<1x32xf32>
    %c8_93 = arith.constant 8 : index
    %c0_94 = arith.constant 0 : index
    %169 = vector.load %arg15[%c8_93, %c0_94] : memref<21x256xf32, #tpu.memory_space<vmem>>, vector<1x32xf32>
    %cst_95 = arith.constant dense<0.000000e+00> : vector<18xf32>
    %170 = vector.multi_reduction <add>, %167, %cst_95 [1] : vector<18x32xf32> to vector<18xf32>
    %171 = vector.shape_cast %170 : vector<18xf32> to vector<18x1xf32>
    %cst_96 = arith.constant 3.200000e+01 : f32
    %172 = vector.broadcast %cst_96 : f32 to vector<18x1xf32>
    %173 = arith.divf %171, %172 : vector<18x1xf32>
    %174 = vector.broadcast %173 : vector<18x1xf32> to vector<18x32xf32>
    %175 = arith.subf %167, %174 : vector<18x32xf32>
    %176 = arith.mulf %175, %175 : vector<18x32xf32>
    %cst_97 = arith.constant dense<0.000000e+00> : vector<18xf32>
    %177 = vector.multi_reduction <add>, %176, %cst_97 [1] : vector<18x32xf32> to vector<18xf32>
    %178 = vector.shape_cast %177 : vector<18xf32> to vector<18x1xf32>
    %cst_98 = arith.constant 3.200000e+01 : f32
    %179 = vector.broadcast %cst_98 : f32 to vector<18x1xf32>
    %180 = arith.divf %178, %179 : vector<18x1xf32>
    %181 = vector.broadcast %173 : vector<18x1xf32> to vector<18x32xf32>
    %182 = arith.subf %167, %181 : vector<18x32xf32>
    %cst_99 = arith.constant 9.99999974E-6 : f32
    %183 = vector.broadcast %cst_99 : f32 to vector<18x1xf32>
    %184 = arith.addf %180, %183 : vector<18x1xf32>
    %185 = math.rsqrt %184 : vector<18x1xf32>
    %186 = vector.broadcast %185 : vector<18x1xf32> to vector<18x32xf32>
    %187 = arith.mulf %182, %186 : vector<18x32xf32>
    %188 = vector.broadcast %168 : vector<1x32xf32> to vector<18x32xf32>
    %189 = arith.mulf %187, %188 : vector<18x32xf32>
    %190 = vector.broadcast %169 : vector<1x32xf32> to vector<18x32xf32>
    %191 = arith.addf %189, %190 : vector<18x32xf32>
    %c0_100 = arith.constant 0 : index
    %c0_101 = arith.constant 0 : index
    %c0_102 = arith.constant 0 : index
    %192 = vector.load %arg12[%c0_100, %c0_101, %c0_102] : memref<2x32x128xbf16, #tpu.memory_space<vmem>>, vector<1x32x128xbf16>
    %193 = vector.shape_cast %192 : vector<1x32x128xbf16> to vector<32x128xbf16>
    %194 = arith.truncf %191 : vector<18x32xf32> to vector<18x32xbf16>
    %cst_103 = arith.constant dense<0.000000e+00> : vector<18x128xf32>
    %195 = tpu.matmul %194, %193, %cst_103 {dimension_numbers = #tpu.dot_dimension_numbers<[1], [0], [0], [1], [0, 0, 1, 1], [], []>} : vector<18x32xbf16>, vector<32x128xbf16>, vector<18x128xf32> -> vector<18x128xf32>
    %c9 = arith.constant 9 : index
    %c0_104 = arith.constant 0 : index
    %196 = vector.load %arg15[%c9, %c0_104] : memref<21x256xf32, #tpu.memory_space<vmem>>, vector<1x128xf32>
    %197 = vector.broadcast %196 : vector<1x128xf32> to vector<18x128xf32>
    %198 = arith.addf %195, %197 : vector<18x128xf32>
    %cst_105 = arith.constant 0.000000e+00 : f32
    %199 = vector.broadcast %cst_105 : f32 to vector<18x128xf32>
    %200 = arith.maximumf %198, %199 : vector<18x128xf32>
    %c0_106 = arith.constant 0 : index
    %c0_107 = arith.constant 0 : index
    %c0_108 = arith.constant 0 : index
    %201 = vector.load %arg13[%c0_106, %c0_107, %c0_108] : memref<2x128x32xbf16, #tpu.memory_space<vmem>>, vector<1x128x32xbf16>
    %202 = vector.shape_cast %201 : vector<1x128x32xbf16> to vector<128x32xbf16>
    %203 = arith.truncf %200 : vector<18x128xf32> to vector<18x128xbf16>
    %cst_109 = arith.constant dense<0.000000e+00> : vector<18x32xf32>
    %204 = tpu.matmul %203, %202, %cst_109 {dimension_numbers = #tpu.dot_dimension_numbers<[1], [0], [0], [1], [0, 0, 1, 1], [], []>} : vector<18x128xbf16>, vector<128x32xbf16>, vector<18x32xf32> -> vector<18x32xf32>
    %c10 = arith.constant 10 : index
    %c0_110 = arith.constant 0 : index
    %205 = vector.load %arg15[%c10, %c0_110] : memref<21x256xf32, #tpu.memory_space<vmem>>, vector<1x32xf32>
    %206 = vector.broadcast %205 : vector<1x32xf32> to vector<18x32xf32>
    %207 = arith.addf %204, %206 : vector<18x32xf32>
    %208 = arith.addf %191, %207 : vector<18x32xf32>
    %c11 = arith.constant 11 : index
    %c0_111 = arith.constant 0 : index
    %209 = vector.load %arg15[%c11, %c0_111] : memref<21x256xf32, #tpu.memory_space<vmem>>, vector<1x32xf32>
    %c12 = arith.constant 12 : index
    %c0_112 = arith.constant 0 : index
    %210 = vector.load %arg15[%c12, %c0_112] : memref<21x256xf32, #tpu.memory_space<vmem>>, vector<1x32xf32>
    %cst_113 = arith.constant dense<0.000000e+00> : vector<18xf32>
    %211 = vector.multi_reduction <add>, %208, %cst_113 [1] : vector<18x32xf32> to vector<18xf32>
    %212 = vector.shape_cast %211 : vector<18xf32> to vector<18x1xf32>
    %cst_114 = arith.constant 3.200000e+01 : f32
    %213 = vector.broadcast %cst_114 : f32 to vector<18x1xf32>
    %214 = arith.divf %212, %213 : vector<18x1xf32>
    %215 = vector.broadcast %214 : vector<18x1xf32> to vector<18x32xf32>
    %216 = arith.subf %208, %215 : vector<18x32xf32>
    %217 = arith.mulf %216, %216 : vector<18x32xf32>
    %cst_115 = arith.constant dense<0.000000e+00> : vector<18xf32>
    %218 = vector.multi_reduction <add>, %217, %cst_115 [1] : vector<18x32xf32> to vector<18xf32>
    %219 = vector.shape_cast %218 : vector<18xf32> to vector<18x1xf32>
    %cst_116 = arith.constant 3.200000e+01 : f32
    %220 = vector.broadcast %cst_116 : f32 to vector<18x1xf32>
    %221 = arith.divf %219, %220 : vector<18x1xf32>
    %222 = vector.broadcast %214 : vector<18x1xf32> to vector<18x32xf32>
    %223 = arith.subf %208, %222 : vector<18x32xf32>
    %cst_117 = arith.constant 9.99999974E-6 : f32
    %224 = vector.broadcast %cst_117 : f32 to vector<18x1xf32>
    %225 = arith.addf %221, %224 : vector<18x1xf32>
    %226 = math.rsqrt %225 : vector<18x1xf32>
    %227 = vector.broadcast %226 : vector<18x1xf32> to vector<18x32xf32>
    %228 = arith.mulf %223, %227 : vector<18x32xf32>
    %229 = vector.broadcast %209 : vector<1x32xf32> to vector<18x32xf32>
    %230 = arith.mulf %228, %229 : vector<18x32xf32>
    %231 = vector.broadcast %210 : vector<1x32xf32> to vector<18x32xf32>
    %232 = arith.addf %230, %231 : vector<18x32xf32>
    %c1_118 = arith.constant 1 : index
    %c0_119 = arith.constant 0 : index
    %c0_120 = arith.constant 0 : index
    %233 = vector.load %arg10[%c1_118, %c0_119, %c0_120] : memref<2x32x96xbf16, #tpu.memory_space<vmem>>, vector<1x32x96xbf16>
    %234 = vector.shape_cast %233 : vector<1x32x96xbf16> to vector<32x96xbf16>
    %235 = arith.truncf %232 : vector<18x32xf32> to vector<18x32xbf16>
    %cst_121 = arith.constant dense<0.000000e+00> : vector<18x96xf32>
    %236 = tpu.matmul %235, %234, %cst_121 {dimension_numbers = #tpu.dot_dimension_numbers<[1], [0], [0], [1], [0, 0, 1, 1], [], []>} : vector<18x32xbf16>, vector<32x96xbf16>, vector<18x96xf32> -> vector<18x96xf32>
    %c13 = arith.constant 13 : index
    %c0_122 = arith.constant 0 : index
    %237 = vector.load %arg15[%c13, %c0_122] : memref<21x256xf32, #tpu.memory_space<vmem>>, vector<1x96xf32>
    %238 = vector.broadcast %237 : vector<1x96xf32> to vector<18x96xf32>
    %239 = arith.addf %236, %238 : vector<18x96xf32>
    %c0_123 = arith.constant 0 : index
    %c0_124 = arith.constant 0 : index
    %240 = vector.load %arg17[%c0_123, %c0_124] : memref<18x96xf32, #tpu.memory_space<vmem>>, vector<18x96xf32>
    tpu.vector_store %arg17[%c0_123, %c0_124], %239 {strides = array<i32>} : memref<18x96xf32, #tpu.memory_space<vmem>>, vector<18x96xf32>,
    %c0_125 = arith.constant 0 : index
    %c0_126 = arith.constant 0 : index
    %241 = vector.load %arg17[%c0_125, %c0_126] : memref<18x96xf32, #tpu.memory_space<vmem>>, vector<18x8xf32>
    %c0_127 = arith.constant 0 : index
    %c32_128 = arith.constant 32 : index
    %242 = vector.load %arg17[%c0_127, %c32_128] : memref<18x96xf32, #tpu.memory_space<vmem>>, vector<18x8xf32>
    %c0_129 = arith.constant 0 : index
    %c64_130 = arith.constant 64 : index
    %243 = vector.load %arg17[%c0_129, %c64_130] : memref<18x96xf32, #tpu.memory_space<vmem>>, vector<18x8xf32>
    %244 = arith.truncf %241 : vector<18x8xf32> to vector<18x8xbf16>
    %245 = arith.truncf %242 : vector<18x8xf32> to vector<18x8xbf16>
    %cst_131 = arith.constant dense<0.000000e+00> : vector<18x18xf32>
    %246 = tpu.matmul %244, %245, %cst_131 {dimension_numbers = #tpu.dot_dimension_numbers<[1], [1], [0], [0], [0, 0, 1, 0], [], []>} : vector<18x8xbf16>, vector<18x8xbf16>, vector<18x18xf32> -> vector<18x18xf32>
    %247 = arith.addf %246, %70 : vector<18x18xf32>
    %cst_132 = arith.constant dense<0xFF800000> : vector<18xf32>
    %248 = vector.multi_reduction <maximumf>, %247, %cst_132 [1] : vector<18x18xf32> to vector<18xf32>
    %249 = vector.shape_cast %248 : vector<18xf32> to vector<18x1xf32>
    %250 = vector.broadcast %249 : vector<18x1xf32> to vector<18x18xf32>
    %251 = arith.subf %247, %250 : vector<18x18xf32>
    %252 = math.exp %251 : vector<18x18xf32>
    %cst_133 = arith.constant dense<0.000000e+00> : vector<18xf32>
    %253 = vector.multi_reduction <add>, %252, %cst_133 [1] : vector<18x18xf32> to vector<18xf32>
    %254 = vector.shape_cast %253 : vector<18xf32> to vector<18x1xf32>
    %255 = vector.broadcast %254 : vector<18x1xf32> to vector<18x18xf32>
    %256 = arith.divf %252, %255 : vector<18x18xf32>
    %257 = arith.truncf %256 : vector<18x18xf32> to vector<18x18xbf16>
    %258 = arith.truncf %243 : vector<18x8xf32> to vector<18x8xbf16>
    %cst_134 = arith.constant dense<0.000000e+00> : vector<18x8xf32>
    %259 = tpu.matmul %257, %258, %cst_134 {dimension_numbers = #tpu.dot_dimension_numbers<[1], [0], [0], [1], [0, 0, 1, 1], [], []>} : vector<18x18xbf16>, vector<18x8xbf16>, vector<18x8xf32> -> vector<18x8xf32>
    %c0_135 = arith.constant 0 : index
    %c0_136 = arith.constant 0 : index
    %260 = vector.load %arg18[%c0_135, %c0_136] : memref<18x32xf32, #tpu.memory_space<vmem>>, vector<18x8xf32>
    tpu.vector_store %arg18[%c0_135, %c0_136], %259 {strides = array<i32>} : memref<18x32xf32, #tpu.memory_space<vmem>>, vector<18x8xf32>,
    %c0_137 = arith.constant 0 : index
    %c8_138 = arith.constant 8 : index
    %261 = vector.load %arg17[%c0_137, %c8_138] : memref<18x96xf32, #tpu.memory_space<vmem>>, vector<18x8xf32>
    %c0_139 = arith.constant 0 : index
    %c40_140 = arith.constant 40 : index
    %262 = vector.load %arg17[%c0_139, %c40_140] : memref<18x96xf32, #tpu.memory_space<vmem>>, vector<18x8xf32>
    %c0_141 = arith.constant 0 : index
    %c72_142 = arith.constant 72 : index
    %263 = vector.load %arg17[%c0_141, %c72_142] : memref<18x96xf32, #tpu.memory_space<vmem>>, vector<18x8xf32>
    %264 = arith.truncf %261 : vector<18x8xf32> to vector<18x8xbf16>
    %265 = arith.truncf %262 : vector<18x8xf32> to vector<18x8xbf16>
    %cst_143 = arith.constant dense<0.000000e+00> : vector<18x18xf32>
    %266 = tpu.matmul %264, %265, %cst_143 {dimension_numbers = #tpu.dot_dimension_numbers<[1], [1], [0], [0], [0, 0, 1, 0], [], []>} : vector<18x8xbf16>, vector<18x8xbf16>, vector<18x18xf32> -> vector<18x18xf32>
    %267 = arith.addf %266, %70 : vector<18x18xf32>
    %cst_144 = arith.constant dense<0xFF800000> : vector<18xf32>
    %268 = vector.multi_reduction <maximumf>, %267, %cst_144 [1] : vector<18x18xf32> to vector<18xf32>
    %269 = vector.shape_cast %268 : vector<18xf32> to vector<18x1xf32>
    %270 = vector.broadcast %269 : vector<18x1xf32> to vector<18x18xf32>
    %271 = arith.subf %267, %270 : vector<18x18xf32>
    %272 = math.exp %271 : vector<18x18xf32>
    %cst_145 = arith.constant dense<0.000000e+00> : vector<18xf32>
    %273 = vector.multi_reduction <add>, %272, %cst_145 [1] : vector<18x18xf32> to vector<18xf32>
    %274 = vector.shape_cast %273 : vector<18xf32> to vector<18x1xf32>
    %275 = vector.broadcast %274 : vector<18x1xf32> to vector<18x18xf32>
    %276 = arith.divf %272, %275 : vector<18x18xf32>
    %277 = arith.truncf %276 : vector<18x18xf32> to vector<18x18xbf16>
    %278 = arith.truncf %263 : vector<18x8xf32> to vector<18x8xbf16>
    %cst_146 = arith.constant dense<0.000000e+00> : vector<18x8xf32>
    %279 = tpu.matmul %277, %278, %cst_146 {dimension_numbers = #tpu.dot_dimension_numbers<[1], [0], [0], [1], [0, 0, 1, 1], [], []>} : vector<18x18xbf16>, vector<18x8xbf16>, vector<18x8xf32> -> vector<18x8xf32>
    %c0_147 = arith.constant 0 : index
    %c8_148 = arith.constant 8 : index
    %280 = vector.load %arg18[%c0_147, %c8_148] : memref<18x32xf32, #tpu.memory_space<vmem>>, vector<18x8xf32>
    tpu.vector_store %arg18[%c0_147, %c8_148], %279 {strides = array<i32>} : memref<18x32xf32, #tpu.memory_space<vmem>>, vector<18x8xf32>,
    %c0_149 = arith.constant 0 : index
    %c16_150 = arith.constant 16 : index
    %281 = vector.load %arg17[%c0_149, %c16_150] : memref<18x96xf32, #tpu.memory_space<vmem>>, vector<18x8xf32>
    %c0_151 = arith.constant 0 : index
    %c48_152 = arith.constant 48 : index
    %282 = vector.load %arg17[%c0_151, %c48_152] : memref<18x96xf32, #tpu.memory_space<vmem>>, vector<18x8xf32>
    %c0_153 = arith.constant 0 : index
    %c80_154 = arith.constant 80 : index
    %283 = vector.load %arg17[%c0_153, %c80_154] : memref<18x96xf32, #tpu.memory_space<vmem>>, vector<18x8xf32>
    %284 = arith.truncf %281 : vector<18x8xf32> to vector<18x8xbf16>
    %285 = arith.truncf %282 : vector<18x8xf32> to vector<18x8xbf16>
    %cst_155 = arith.constant dense<0.000000e+00> : vector<18x18xf32>
    %286 = tpu.matmul %284, %285, %cst_155 {dimension_numbers = #tpu.dot_dimension_numbers<[1], [1], [0], [0], [0, 0, 1, 0], [], []>} : vector<18x8xbf16>, vector<18x8xbf16>, vector<18x18xf32> -> vector<18x18xf32>
    %287 = arith.addf %286, %70 : vector<18x18xf32>
    %cst_156 = arith.constant dense<0xFF800000> : vector<18xf32>
    %288 = vector.multi_reduction <maximumf>, %287, %cst_156 [1] : vector<18x18xf32> to vector<18xf32>
    %289 = vector.shape_cast %288 : vector<18xf32> to vector<18x1xf32>
    %290 = vector.broadcast %289 : vector<18x1xf32> to vector<18x18xf32>
    %291 = arith.subf %287, %290 : vector<18x18xf32>
    %292 = math.exp %291 : vector<18x18xf32>
    %cst_157 = arith.constant dense<0.000000e+00> : vector<18xf32>
    %293 = vector.multi_reduction <add>, %292, %cst_157 [1] : vector<18x18xf32> to vector<18xf32>
    %294 = vector.shape_cast %293 : vector<18xf32> to vector<18x1xf32>
    %295 = vector.broadcast %294 : vector<18x1xf32> to vector<18x18xf32>
    %296 = arith.divf %292, %295 : vector<18x18xf32>
    %297 = arith.truncf %296 : vector<18x18xf32> to vector<18x18xbf16>
    %298 = arith.truncf %283 : vector<18x8xf32> to vector<18x8xbf16>
    %cst_158 = arith.constant dense<0.000000e+00> : vector<18x8xf32>
    %299 = tpu.matmul %297, %298, %cst_158 {dimension_numbers = #tpu.dot_dimension_numbers<[1], [0], [0], [1], [0, 0, 1, 1], [], []>} : vector<18x18xbf16>, vector<18x8xbf16>, vector<18x8xf32> -> vector<18x8xf32>
    %c0_159 = arith.constant 0 : index
    %c16_160 = arith.constant 16 : index
    %300 = vector.load %arg18[%c0_159, %c16_160] : memref<18x32xf32, #tpu.memory_space<vmem>>, vector<18x8xf32>
    tpu.vector_store %arg18[%c0_159, %c16_160], %299 {strides = array<i32>} : memref<18x32xf32, #tpu.memory_space<vmem>>, vector<18x8xf32>,
    %c0_161 = arith.constant 0 : index
    %c24_162 = arith.constant 24 : index
    %301 = vector.load %arg17[%c0_161, %c24_162] : memref<18x96xf32, #tpu.memory_space<vmem>>, vector<18x8xf32>
    %c0_163 = arith.constant 0 : index
    %c56_164 = arith.constant 56 : index
    %302 = vector.load %arg17[%c0_163, %c56_164] : memref<18x96xf32, #tpu.memory_space<vmem>>, vector<18x8xf32>
    %c0_165 = arith.constant 0 : index
    %c88_166 = arith.constant 88 : index
    %303 = vector.load %arg17[%c0_165, %c88_166] : memref<18x96xf32, #tpu.memory_space<vmem>>, vector<18x8xf32>
    %304 = arith.truncf %301 : vector<18x8xf32> to vector<18x8xbf16>
    %305 = arith.truncf %302 : vector<18x8xf32> to vector<18x8xbf16>
    %cst_167 = arith.constant dense<0.000000e+00> : vector<18x18xf32>
    %306 = tpu.matmul %304, %305, %cst_167 {dimension_numbers = #tpu.dot_dimension_numbers<[1], [1], [0], [0], [0, 0, 1, 0], [], []>} : vector<18x8xbf16>, vector<18x8xbf16>, vector<18x18xf32> -> vector<18x18xf32>
    %307 = arith.addf %306, %70 : vector<18x18xf32>
    %cst_168 = arith.constant dense<0xFF800000> : vector<18xf32>
    %308 = vector.multi_reduction <maximumf>, %307, %cst_168 [1] : vector<18x18xf32> to vector<18xf32>
    %309 = vector.shape_cast %308 : vector<18xf32> to vector<18x1xf32>
    %310 = vector.broadcast %309 : vector<18x1xf32> to vector<18x18xf32>
    %311 = arith.subf %307, %310 : vector<18x18xf32>
    %312 = math.exp %311 : vector<18x18xf32>
    %cst_169 = arith.constant dense<0.000000e+00> : vector<18xf32>
    %313 = vector.multi_reduction <add>, %312, %cst_169 [1] : vector<18x18xf32> to vector<18xf32>
    %314 = vector.shape_cast %313 : vector<18xf32> to vector<18x1xf32>
    %315 = vector.broadcast %314 : vector<18x1xf32> to vector<18x18xf32>
    %316 = arith.divf %312, %315 : vector<18x18xf32>
    %317 = arith.truncf %316 : vector<18x18xf32> to vector<18x18xbf16>
    %318 = arith.truncf %303 : vector<18x8xf32> to vector<18x8xbf16>
    %cst_170 = arith.constant dense<0.000000e+00> : vector<18x8xf32>
    %319 = tpu.matmul %317, %318, %cst_170 {dimension_numbers = #tpu.dot_dimension_numbers<[1], [0], [0], [1], [0, 0, 1, 1], [], []>} : vector<18x18xbf16>, vector<18x8xbf16>, vector<18x8xf32> -> vector<18x8xf32>
    %c0_171 = arith.constant 0 : index
    %c24_172 = arith.constant 24 : index
    %320 = vector.load %arg18[%c0_171, %c24_172] : memref<18x32xf32, #tpu.memory_space<vmem>>, vector<18x8xf32>
    tpu.vector_store %arg18[%c0_171, %c24_172], %319 {strides = array<i32>} : memref<18x32xf32, #tpu.memory_space<vmem>>, vector<18x8xf32>,
    %c0_173 = arith.constant 0 : index
    %c0_174 = arith.constant 0 : index
    %321 = vector.load %arg18[%c0_173, %c0_174] : memref<18x32xf32, #tpu.memory_space<vmem>>, vector<18x32xf32>
    %c1_175 = arith.constant 1 : index
    %c0_176 = arith.constant 0 : index
    %c0_177 = arith.constant 0 : index
    %322 = vector.load %arg11[%c1_175, %c0_176, %c0_177] : memref<2x32x32xbf16, #tpu.memory_space<vmem>>, vector<1x32x32xbf16>
    %323 = vector.shape_cast %322 : vector<1x32x32xbf16> to vector<32x32xbf16>
    %324 = arith.truncf %321 : vector<18x32xf32> to vector<18x32xbf16>
    %cst_178 = arith.constant dense<0.000000e+00> : vector<18x32xf32>
    %325 = tpu.matmul %324, %323, %cst_178 {dimension_numbers = #tpu.dot_dimension_numbers<[1], [0], [0], [1], [0, 0, 1, 1], [], []>} : vector<18x32xbf16>, vector<32x32xbf16>, vector<18x32xf32> -> vector<18x32xf32>
    %c14 = arith.constant 14 : index
    %c0_179 = arith.constant 0 : index
    %326 = vector.load %arg15[%c14, %c0_179] : memref<21x256xf32, #tpu.memory_space<vmem>>, vector<1x32xf32>
    %327 = vector.broadcast %326 : vector<1x32xf32> to vector<18x32xf32>
    %328 = arith.addf %325, %327 : vector<18x32xf32>
    %329 = arith.addf %232, %328 : vector<18x32xf32>
    %c15 = arith.constant 15 : index
    %c0_180 = arith.constant 0 : index
    %330 = vector.load %arg15[%c15, %c0_180] : memref<21x256xf32, #tpu.memory_space<vmem>>, vector<1x32xf32>
    %c16_181 = arith.constant 16 : index
    %c0_182 = arith.constant 0 : index
    %331 = vector.load %arg15[%c16_181, %c0_182] : memref<21x256xf32, #tpu.memory_space<vmem>>, vector<1x32xf32>
    %cst_183 = arith.constant dense<0.000000e+00> : vector<18xf32>
    %332 = vector.multi_reduction <add>, %329, %cst_183 [1] : vector<18x32xf32> to vector<18xf32>
    %333 = vector.shape_cast %332 : vector<18xf32> to vector<18x1xf32>
    %cst_184 = arith.constant 3.200000e+01 : f32
    %334 = vector.broadcast %cst_184 : f32 to vector<18x1xf32>
    %335 = arith.divf %333, %334 : vector<18x1xf32>
    %336 = vector.broadcast %335 : vector<18x1xf32> to vector<18x32xf32>
    %337 = arith.subf %329, %336 : vector<18x32xf32>
    %338 = arith.mulf %337, %337 : vector<18x32xf32>
    %cst_185 = arith.constant dense<0.000000e+00> : vector<18xf32>
    %339 = vector.multi_reduction <add>, %338, %cst_185 [1] : vector<18x32xf32> to vector<18xf32>
    %340 = vector.shape_cast %339 : vector<18xf32> to vector<18x1xf32>
    %cst_186 = arith.constant 3.200000e+01 : f32
    %341 = vector.broadcast %cst_186 : f32 to vector<18x1xf32>
    %342 = arith.divf %340, %341 : vector<18x1xf32>
    %343 = vector.broadcast %335 : vector<18x1xf32> to vector<18x32xf32>
    %344 = arith.subf %329, %343 : vector<18x32xf32>
    %cst_187 = arith.constant 9.99999974E-6 : f32
    %345 = vector.broadcast %cst_187 : f32 to vector<18x1xf32>
    %346 = arith.addf %342, %345 : vector<18x1xf32>
    %347 = math.rsqrt %346 : vector<18x1xf32>
    %348 = vector.broadcast %347 : vector<18x1xf32> to vector<18x32xf32>
    %349 = arith.mulf %344, %348 : vector<18x32xf32>
    %350 = vector.broadcast %330 : vector<1x32xf32> to vector<18x32xf32>
    %351 = arith.mulf %349, %350 : vector<18x32xf32>
    %352 = vector.broadcast %331 : vector<1x32xf32> to vector<18x32xf32>
    %353 = arith.addf %351, %352 : vector<18x32xf32>
    %c1_188 = arith.constant 1 : index
    %c0_189 = arith.constant 0 : index
    %c0_190 = arith.constant 0 : index
    %354 = vector.load %arg12[%c1_188, %c0_189, %c0_190] : memref<2x32x128xbf16, #tpu.memory_space<vmem>>, vector<1x32x128xbf16>
    %355 = vector.shape_cast %354 : vector<1x32x128xbf16> to vector<32x128xbf16>
    %356 = arith.truncf %353 : vector<18x32xf32> to vector<18x32xbf16>
    %cst_191 = arith.constant dense<0.000000e+00> : vector<18x128xf32>
    %357 = tpu.matmul %356, %355, %cst_191 {dimension_numbers = #tpu.dot_dimension_numbers<[1], [0], [0], [1], [0, 0, 1, 1], [], []>} : vector<18x32xbf16>, vector<32x128xbf16>, vector<18x128xf32> -> vector<18x128xf32>
    %c17 = arith.constant 17 : index
    %c0_192 = arith.constant 0 : index
    %358 = vector.load %arg15[%c17, %c0_192] : memref<21x256xf32, #tpu.memory_space<vmem>>, vector<1x128xf32>
    %359 = vector.broadcast %358 : vector<1x128xf32> to vector<18x128xf32>
    %360 = arith.addf %357, %359 : vector<18x128xf32>
    %cst_193 = arith.constant 0.000000e+00 : f32
    %361 = vector.broadcast %cst_193 : f32 to vector<18x128xf32>
    %362 = arith.maximumf %360, %361 : vector<18x128xf32>
    %c1_194 = arith.constant 1 : index
    %c0_195 = arith.constant 0 : index
    %c0_196 = arith.constant 0 : index
    %363 = vector.load %arg13[%c1_194, %c0_195, %c0_196] : memref<2x128x32xbf16, #tpu.memory_space<vmem>>, vector<1x128x32xbf16>
    %364 = vector.shape_cast %363 : vector<1x128x32xbf16> to vector<128x32xbf16>
    %365 = arith.truncf %362 : vector<18x128xf32> to vector<18x128xbf16>
    %cst_197 = arith.constant dense<0.000000e+00> : vector<18x32xf32>
    %366 = tpu.matmul %365, %364, %cst_197 {dimension_numbers = #tpu.dot_dimension_numbers<[1], [0], [0], [1], [0, 0, 1, 1], [], []>} : vector<18x128xbf16>, vector<128x32xbf16>, vector<18x32xf32> -> vector<18x32xf32>
    %c18 = arith.constant 18 : index
    %c0_198 = arith.constant 0 : index
    %367 = vector.load %arg15[%c18, %c0_198] : memref<21x256xf32, #tpu.memory_space<vmem>>, vector<1x32xf32>
    %368 = vector.broadcast %367 : vector<1x32xf32> to vector<18x32xf32>
    %369 = arith.addf %366, %368 : vector<18x32xf32>
    %370 = arith.addf %353, %369 : vector<18x32xf32>
    %c19 = arith.constant 19 : index
    %c0_199 = arith.constant 0 : index
    %371 = vector.load %arg15[%c19, %c0_199] : memref<21x256xf32, #tpu.memory_space<vmem>>, vector<1x32xf32>
    %c20 = arith.constant 20 : index
    %c0_200 = arith.constant 0 : index
    %372 = vector.load %arg15[%c20, %c0_200] : memref<21x256xf32, #tpu.memory_space<vmem>>, vector<1x32xf32>
    %cst_201 = arith.constant dense<0.000000e+00> : vector<18xf32>
    %373 = vector.multi_reduction <add>, %370, %cst_201 [1] : vector<18x32xf32> to vector<18xf32>
    %374 = vector.shape_cast %373 : vector<18xf32> to vector<18x1xf32>
    %cst_202 = arith.constant 3.200000e+01 : f32
    %375 = vector.broadcast %cst_202 : f32 to vector<18x1xf32>
    %376 = arith.divf %374, %375 : vector<18x1xf32>
    %377 = vector.broadcast %376 : vector<18x1xf32> to vector<18x32xf32>
    %378 = arith.subf %370, %377 : vector<18x32xf32>
    %379 = arith.mulf %378, %378 : vector<18x32xf32>
    %cst_203 = arith.constant dense<0.000000e+00> : vector<18xf32>
    %380 = vector.multi_reduction <add>, %379, %cst_203 [1] : vector<18x32xf32> to vector<18xf32>
    %381 = vector.shape_cast %380 : vector<18xf32> to vector<18x1xf32>
    %cst_204 = arith.constant 3.200000e+01 : f32
    %382 = vector.broadcast %cst_204 : f32 to vector<18x1xf32>
    %383 = arith.divf %381, %382 : vector<18x1xf32>
    %384 = vector.broadcast %376 : vector<18x1xf32> to vector<18x32xf32>
    %385 = arith.subf %370, %384 : vector<18x32xf32>
    %cst_205 = arith.constant 9.99999974E-6 : f32
    %386 = vector.broadcast %cst_205 : f32 to vector<18x1xf32>
    %387 = arith.addf %383, %386 : vector<18x1xf32>
    %388 = math.rsqrt %387 : vector<18x1xf32>
    %389 = vector.broadcast %388 : vector<18x1xf32> to vector<18x32xf32>
    %390 = arith.mulf %385, %389 : vector<18x32xf32>
    %391 = vector.broadcast %371 : vector<1x32xf32> to vector<18x32xf32>
    %392 = arith.mulf %390, %391 : vector<18x32xf32>
    %393 = vector.broadcast %372 : vector<1x32xf32> to vector<18x32xf32>
    %394 = arith.addf %392, %393 : vector<18x32xf32>
    %c0_206 = arith.constant 0 : index
    %c0_207 = arith.constant 0 : index
    %395 = vector.load %arg14[%c0_206, %c0_207] : memref<32x128xbf16, #tpu.memory_space<vmem>>, vector<32x128xbf16>
    %396 = arith.truncf %394 : vector<18x32xf32> to vector<18x32xbf16>
    %cst_208 = arith.constant dense<0.000000e+00> : vector<18x128xf32>
    %397 = tpu.matmul %396, %395, %cst_208 {dimension_numbers = #tpu.dot_dimension_numbers<[1], [0], [0], [1], [0, 0, 1, 1], [], []>} : vector<18x32xbf16>, vector<32x128xbf16>, vector<18x128xf32> -> vector<18x128xf32>
    %c4 = arith.constant 4 : index
    %c0_209 = arith.constant 0 : index
    %398 = vector.load %arg15[%c4, %c0_209] : memref<21x256xf32, #tpu.memory_space<vmem>>, vector<1x128xf32>
    %399 = vector.broadcast %398 : vector<1x128xf32> to vector<18x128xf32>
    %400 = arith.addf %397, %399 : vector<18x128xf32>
    %c0_210 = arith.constant 0 : index
    %c0_211 = arith.constant 0 : index
    %c0_212 = arith.constant 0 : index
    %401 = vector.load %arg16[%c0_210, %c0_211, %c0_212] : memref<1x18x128xf32, #tpu.memory_space<vmem>>, vector<1x18x128xf32>
    %402 = vector.shape_cast %401 : vector<1x18x128xf32> to vector<18x128xf32>
    %403 = vector.shape_cast %400 : vector<18x128xf32> to vector<1x18x128xf32>
    tpu.vector_store %arg16[%c0_210, %c0_211, %c0_212], %403 {strides = array<i32>} : memref<1x18x128xf32, #tpu.memory_space<vmem>>, vector<1x18x128xf32>,
    return
  }
  func.func @transform_0(%arg0: i32) -> (i32, i32, i32) {
    %c0_i32 = arith.constant 0 : i32
    %c0_i32_0 = arith.constant 0 : i32
    %c0_i32_1 = arith.constant 0 : i32
    return %arg0, %c0_i32, %c0_i32_0 : i32, i32, i32
  }
  func.func @transform_1(%arg0: i32) -> (i32, i32, i32) {
    %c0_i32 = arith.constant 0 : i32
    %c0_i32_0 = arith.constant 0 : i32
    %c0_i32_1 = arith.constant 0 : i32
    return %arg0, %c0_i32, %c0_i32_0 : i32, i32, i32
  }
  func.func @transform_2(%arg0: i32) -> (i32, i32, i32) {
    %c0_i32 = arith.constant 0 : i32
    %c0_i32_0 = arith.constant 0 : i32
    %c0_i32_1 = arith.constant 0 : i32
    return %arg0, %c0_i32, %c0_i32_0 : i32, i32, i32
  }
  func.func @transform_3(%arg0: i32) -> (i32, i32, i32) {
    %c0_i32 = arith.constant 0 : i32
    %c0_i32_0 = arith.constant 0 : i32
    %c0_i32_1 = arith.constant 0 : i32
    %c0_i32_2 = arith.constant 0 : i32
    return %c0_i32, %c0_i32_0, %c0_i32_1 : i32, i32, i32
  }
  func.func @transform_4(%arg0: i32) -> (i32, i32) {
    %c0_i32 = arith.constant 0 : i32
    %c0_i32_0 = arith.constant 0 : i32
    %c0_i32_1 = arith.constant 0 : i32
    return %c0_i32, %c0_i32_0 : i32, i32
  }
  func.func @transform_5(%arg0: i32) -> (i32, i32) {
    %c0_i32 = arith.constant 0 : i32
    %c0_i32_0 = arith.constant 0 : i32
    %c0_i32_1 = arith.constant 0 : i32
    return %c0_i32, %c0_i32_0 : i32, i32
  }
  func.func @transform_6(%arg0: i32) -> (i32, i32) {
    %c0_i32 = arith.constant 0 : i32
    %c0_i32_0 = arith.constant 0 : i32
    %c0_i32_1 = arith.constant 0 : i32
    return %c0_i32, %c0_i32_0 : i32, i32
  }
  func.func @transform_7(%arg0: i32) -> (i32, i32) {
    %c0_i32 = arith.constant 0 : i32
    %c0_i32_0 = arith.constant 0 : i32
    %c0_i32_1 = arith.constant 0 : i32
    return %c0_i32, %c0_i32_0 : i32, i32
  }
  func.func @transform_8(%arg0: i32) -> (i32, i32) {
    %c0_i32 = arith.constant 0 : i32
    %c0_i32_0 = arith.constant 0 : i32
    %c0_i32_1 = arith.constant 0 : i32
    return %c0_i32, %c0_i32_0 : i32, i32
  }
  func.func @transform_9(%arg0: i32) -> (i32, i32, i32) {
    %c0_i32 = arith.constant 0 : i32
    %c0_i32_0 = arith.constant 0 : i32
    %c0_i32_1 = arith.constant 0 : i32
    %c0_i32_2 = arith.constant 0 : i32
    return %c0_i32, %c0_i32_0, %c0_i32_1 : i32, i32, i32
  }
  func.func @transform_10(%arg0: i32) -> (i32, i32, i32) {
    %c0_i32 = arith.constant 0 : i32
    %c0_i32_0 = arith.constant 0 : i32
    %c0_i32_1 = arith.constant 0 : i32
    %c0_i32_2 = arith.constant 0 : i32
    return %c0_i32, %c0_i32_0, %c0_i32_1 : i32, i32, i32
  }
  func.func @transform_11(%arg0: i32) -> (i32, i32, i32) {
    %c0_i32 = arith.constant 0 : i32
    %c0_i32_0 = arith.constant 0 : i32
    %c0_i32_1 = arith.constant 0 : i32
    %c0_i32_2 = arith.constant 0 : i32
    return %c0_i32, %c0_i32_0, %c0_i32_1 : i32, i32, i32
  }
  func.func @transform_12(%arg0: i32) -> (i32, i32, i32) {
    %c0_i32 = arith.constant 0 : i32
    %c0_i32_0 = arith.constant 0 : i32
    %c0_i32_1 = arith.constant 0 : i32
    %c0_i32_2 = arith.constant 0 : i32
    return %c0_i32, %c0_i32_0, %c0_i32_1 : i32, i32, i32
  }
  func.func @transform_13(%arg0: i32) -> (i32, i32) {
    %c0_i32 = arith.constant 0 : i32
    %c0_i32_0 = arith.constant 0 : i32
    %c0_i32_1 = arith.constant 0 : i32
    return %c0_i32, %c0_i32_0 : i32, i32
  }
  func.func @transform_14(%arg0: i32) -> (i32, i32) {
    %c0_i32 = arith.constant 0 : i32
    %c0_i32_0 = arith.constant 0 : i32
    %c0_i32_1 = arith.constant 0 : i32
    return %c0_i32, %c0_i32_0 : i32, i32
  }
  func.func @transform_15(%arg0: i32) -> (i32, i32, i32) {
    %c0_i32 = arith.constant 0 : i32
    %c0_i32_0 = arith.constant 0 : i32
    %c0_i32_1 = arith.constant 0 : i32
    return %arg0, %c0_i32, %c0_i32_0 : i32, i32, i32
  }
}

</mosaic_0001>

<llo_original>
// kernel: transformer_diffusion_forward.1
$region0: #{transformer_diffusion_forward.1}
  #allocation0 [shape = 'u32[]', space=smem, size = 0x4, offset = 0x4, fixed_abs, tag = 'smem constant byte address 0x4 - core index']
  #allocation1 [shape = 'u32[144,128]{1,0:T(1,128)}', space=vmem, size = 0x12000, scoped, tag = 'internal scratch']
  #allocation2 [shape = 'f32[18,96]{1,0:T(8,128)}', space=vmem, size = 0x3000, scoped, tag = 'scratch operand']
  #allocation3 [shape = 'f32[18,32]{1,0:T(8,128)}', space=vmem, size = 0x3000, scoped, tag = 'scratch operand']
  #allocation4 [shape = 'f32[18,32]{1,0:T(8,128)}', space=vmem, size = 0x3000, scoped, tag = 'scratch operand']
  %s0 = inlined_call_operand.vmem [shape: f32[1,16,12], index: 0, kind: input, shape index: {}]
  %s1 = inlined_call_operand.vmem [shape: f32[1,2,64], index: 1, kind: input, shape index: {}]
  %s2 = inlined_call_operand.vmem [shape: f32[1,2,16], index: 2, kind: input, shape index: {}]
  %s3 = inlined_call_operand.vmem [shape: f32[1,18,18], index: 3, kind: input, shape index: {}]
  %s4 = inlined_call_operand.vmem [shape: f32[18,32], index: 4, kind: input, shape index: {}]
  %s5 = inlined_call_operand.vmem [shape: bf16[64,256], index: 5, kind: input, shape index: {}]
  %s6 = inlined_call_operand.vmem [shape: bf16[256,32], index: 6, kind: input, shape index: {}]
  %s7 = inlined_call_operand.vmem [shape: bf16[12,32], index: 7, kind: input, shape index: {}]
  %s8 = inlined_call_operand.vmem [shape: bf16[16,32], index: 8, kind: input, shape index: {}]
  %s9 = inlined_call_operand.vmem [shape: bf16[2,32,96], index: 9, kind: input, shape index: {}]
  %s10 = inlined_call_operand.vmem [shape: bf16[2,32,32], index: 10, kind: input, shape index: {}]
  %s11 = inlined_call_operand.vmem [shape: bf16[2,32,128], index: 11, kind: input, shape index: {}]
  %s12 = inlined_call_operand.vmem [shape: bf16[2,128,32], index: 12, kind: input, shape index: {}]
  %s13 = inlined_call_operand.vmem [shape: bf16[32,128], index: 13, kind: input, shape index: {}]
  %s14 = inlined_call_operand.vmem [shape: f32[21,256], index: 14, kind: input, shape index: {}]
  %s15 = inlined_call_operand.vmem [shape: f32[1,18,128], index: 15, kind: output, shape index: {}]
  %s16 = sld [smem:[#allocation0]]
  $region70: #{transformer_diffusion_forward.1} parent=0
    _
  %s18 = ssub.s32 1, %s16
  %s19 = scalar_select 0, %s18, %s16
  // Predicated region
  $region2: #{transformer_diffusion_forward.1} parent=0 // pred_check
    _
  $region3: #{transformer_diffusion_forward.1} parent=0 // pred_check_branch
    %21 = sbr.rel (0) target = $region5
  $region4: #{transformer_diffusion_forward.1} parent=0 // pred_region
    _
  $region5: #{transformer_diffusion_forward.1} parent=0 // pred_fallthru
    _
  // Predicated region
  $region6: #{transformer_diffusion_forward.1} parent=0 // pred_check
    _
  $region7: #{transformer_diffusion_forward.1} parent=0 // pred_check_branch
    %23 = sbr.rel (0) target = $region9
  $region8: #{transformer_diffusion_forward.1} parent=0 // pred_region
    _
  $region9: #{transformer_diffusion_forward.1} parent=0 // pred_fallthru
    _
  // Predicated region
  $region10: #{transformer_diffusion_forward.1} parent=0 // pred_check
    _
  $region11: #{transformer_diffusion_forward.1} parent=0 // pred_check_branch
    %25 = sbr.rel (0) target = $region13
  $region12: #{transformer_diffusion_forward.1} parent=0 // pred_region
    _
  $region13: #{transformer_diffusion_forward.1} parent=0 // pred_fallthru
    _
  // Predicated region
  $region14: #{transformer_diffusion_forward.1} parent=0 // pred_check
    _
  $region15: #{transformer_diffusion_forward.1} parent=0 // pred_check_branch
    %27 = sbr.rel (0) target = $region17
  $region16: #{transformer_diffusion_forward.1} parent=0 // pred_region
    _
  $region17: #{transformer_diffusion_forward.1} parent=0 // pred_fallthru
    _
  // Predicated region
  $region18: #{transformer_diffusion_forward.1} parent=0 // pred_check
    _
  $region19: #{transformer_diffusion_forward.1} parent=0 // pred_check_branch
    %29 = sbr.rel (0) target = $region21
  $region20: #{transformer_diffusion_forward.1} parent=0 // pred_region
    _
  $region21: #{transformer_diffusion_forward.1} parent=0 // pred_fallthru
    _
  // Predicated region
  $region22: #{transformer_diffusion_forward.1} parent=0 // pred_check
    _
  $region23: #{transformer_diffusion_forward.1} parent=0 // pred_check_branch
    %31 = sbr.rel (0) target = $region25
  $region24: #{transformer_diffusion_forward.1} parent=0 // pred_region
    _
  $region25: #{transformer_diffusion_forward.1} parent=0 // pred_fallthru
    _
  // Predicated region
  $region26: #{transformer_diffusion_forward.1} parent=0 // pred_check
    _
  $region27: #{transformer_diffusion_forward.1} parent=0 // pred_check_branch
    %33 = sbr.rel (0) target = $region29
  $region28: #{transformer_diffusion_forward.1} parent=0 // pred_region
    _
  $region29: #{transformer_diffusion_forward.1} parent=0 // pred_fallthru
    _
  // Predicated region
  $region30: #{transformer_diffusion_forward.1} parent=0 // pred_check
    _
  $region31: #{transformer_diffusion_forward.1} parent=0 // pred_check_branch
    %35 = sbr.rel (0) target = $region33
  $region32: #{transformer_diffusion_forward.1} parent=0 // pred_region
    _
  $region33: #{transformer_diffusion_forward.1} parent=0 // pred_fallthru
    _
  // Predicated region
  $region34: #{transformer_diffusion_forward.1} parent=0 // pred_check
    _
  $region35: #{transformer_diffusion_forward.1} parent=0 // pred_check_branch
    %37 = sbr.rel (0) target = $region37
  $region36: #{transformer_diffusion_forward.1} parent=0 // pred_region
    _
  $region37: #{transformer_diffusion_forward.1} parent=0 // pred_fallthru
    _
  // Predicated region
  $region38: #{transformer_diffusion_forward.1} parent=0 // pred_check
    _
  $region39: #{transformer_diffusion_forward.1} parent=0 // pred_check_branch
    %39 = sbr.rel (0) target = $region41
  $region40: #{transformer_diffusion_forward.1} parent=0 // pred_region
    _
  $region41: #{transformer_diffusion_forward.1} parent=0 // pred_fallthru
    _
  // Predicated region
  $region42: #{transformer_diffusion_forward.1} parent=0 // pred_check
    _
  $region43: #{transformer_diffusion_forward.1} parent=0 // pred_check_branch
    %41 = sbr.rel (0) target = $region45
  $region44: #{transformer_diffusion_forward.1} parent=0 // pred_region
    _
  $region45: #{transformer_diffusion_forward.1} parent=0 // pred_fallthru
    _
  // Predicated region
  $region46: #{transformer_diffusion_forward.1} parent=0 // pred_check
    _
  $region47: #{transformer_diffusion_forward.1} parent=0 // pred_check_branch
    %43 = sbr.rel (0) target = $region49
  $region48: #{transformer_diffusion_forward.1} parent=0 // pred_region
    _
  $region49: #{transformer_diffusion_forward.1} parent=0 // pred_fallthru
    _
  // Predicated region
  $region50: #{transformer_diffusion_forward.1} parent=0 // pred_check
    _
  $region51: #{transformer_diffusion_forward.1} parent=0 // pred_check_branch
    %45 = sbr.rel (0) target = $region53
  $region52: #{transformer_diffusion_forward.1} parent=0 // pred_region
    _
  $region53: #{transformer_diffusion_forward.1} parent=0 // pred_fallthru
    _
  // Predicated region
  $region54: #{transformer_diffusion_forward.1} parent=0 // pred_check
    _
  $region55: #{transformer_diffusion_forward.1} parent=0 // pred_check_branch
    %47 = sbr.rel (0) target = $region57
  $region56: #{transformer_diffusion_forward.1} parent=0 // pred_region
    _
  $region57: #{transformer_diffusion_forward.1} parent=0 // pred_fallthru
    _
  // Predicated region
  $region58: #{transformer_diffusion_forward.1} parent=0 // pred_check
    _
  $region59: #{transformer_diffusion_forward.1} parent=0 // pred_check_branch
    %49 = sbr.rel (0) target = $region61
  $region60: #{transformer_diffusion_forward.1} parent=0 // pred_region
    _
  $region61: #{transformer_diffusion_forward.1} parent=0 // pred_fallthru
    _
  %v51 = vld [vmem:[%s1] sm:$0x3]
  %v52 = vld [vmem:[%s5] sm:$0xff]
  %v53 = vld [vmem:[%s5 + $0x8] sm:$0xff]
  %v54 = vld [vmem:[%s5 + $0x10] sm:$0xff]
  %v55 = vld [vmem:[%s5 + $0x18] sm:$0xff]
  %v56 = vld [vmem:[%s5 + $0x20] sm:$0xff]
  %v57 = vld [vmem:[%s5 + $0x28] sm:$0xff]
  %v58 = vld [vmem:[%s5 + $0x30] sm:$0xff]
  %v59 = vld [vmem:[%s5 + $0x38] sm:$0xff]
  %v60 = vpack.c.bf16 %v51, %v51
  %v61 = vld [vmem:[%s14] ss:$8 sm:$0x3]
  %v63 = vlaneseq
  %v64 = vshrl.u32 %v63, 7
  %v65 = vsub.s32 0, %v64
  %v66 = vrot.slane %v61, %v65
  %v67 = vlaneseq
  %v68 = vshrl.u32 %v67, 7
  %v69 = vsub.s32 1, %v68
  %v70 = vrot.slane %v61, %v69
  %v81 = vunpack.c.l.b16 %v52
  %v82 = vunpack.c.h.b16 %v52
  %v83 = vunpack.c.l.b16 %v53
  %v84 = vunpack.c.h.b16 %v53
  %v85 = vunpack.c.l.b16 %v54
  %v86 = vunpack.c.h.b16 %v54
  %v87 = vunpack.c.l.b16 %v55
  %v88 = vunpack.c.h.b16 %v55
  %v89 = vunpack.c.l.b16 %v56
  %v90 = vunpack.c.h.b16 %v56
  %v91 = vunpack.c.l.b16 %v57
  %v92 = vunpack.c.h.b16 %v57
  %v93 = vunpack.c.l.b16 %v58
  %v94 = vunpack.c.h.b16 %v58
  %v95 = vunpack.c.l.b16 %v59
  %v96 = vunpack.c.h.b16 %v59
  %v97 = vpack.c.b16 %v83, %v81
  %v98 = vpack.c.b16 %v84, %v82
  %v99 = vpack.c.b16 %v87, %v85
  %v100 = vpack.c.b16 %v88, %v86
  %v101 = vpack.c.b16 %v91, %v89
  %v102 = vpack.c.b16 %v92, %v90
  %v103 = vpack.c.b16 %v95, %v93
  %v104 = vpack.c.b16 %v96, %v94
  %vm113 = vcmask 523264
  %v115 = vsel %vm113, %v60, 0
  %117 = vmatprep.subr.bf16.mxu0 %v98
  %118 = vmatpush1.bf16.msra.mxu0 %v97
  %119 = vmatprep.subr.bf16.mxu0 %v100
  %120 = vmatpush1.bf16.msra.mxu0 %v99
  %121 = vmatprep.subr.bf16.mxu0 %v102
  %122 = vmatpush1.bf16.msra.mxu0 %v101
  %123 = vmatprep.subr.bf16.mxu0 %v104
  %124 = vmatpush1.bf16.msra.mxu0 %v103
  %125 = vmatprep.subr.bf16.mxu0 0
  %126 = vmatpush1.bf16.msra.mxu0 0
  %127 = vmatprep.subr.bf16.mxu0 0
  %128 = vmatpush1.bf16.msra.mxu0 0
  %129 = vmatprep.subr.bf16.mxu0 0
  %130 = vmatpush1.bf16.msra.mxu0 0
  %131 = vmatprep.subr.bf16.mxu0 0
  %132 = vmatpush1.bf16.msra.mxu0 0
  %133 = vmatprep.subr.bf16.mxu0 0
  %134 = vmatpush1.bf16.msra.mxu0 0
  %135 = vmatprep.subr.bf16.mxu0 0
  %136 = vmatpush1.bf16.msra.mxu0 0
  %137 = vmatprep.subr.bf16.mxu0 0
  %138 = vmatpush1.bf16.msra.mxu0 0
  %139 = vmatprep.subr.bf16.mxu0 0
  %140 = vmatpush1.bf16.msra.mxu0 0
  %141 = vmatprep.subr.bf16.mxu0 0
  %142 = vmatpush1.bf16.msra.mxu0 0
  %143 = vmatprep.subr.bf16.mxu0 0
  %144 = vmatpush1.bf16.msra.mxu0 0
  %145 = vmatprep.subr.bf16.mxu0 0
  %146 = vmatpush1.bf16.msra.mxu0 0
  %147 = vmatprep.subr.bf16.mxu0 0
  %148 = vmatpush1.bf16.msra.mxu0 0
  %149 = vmatprep.mubr.bf16.mxu0 0
  %150 = vmatmul.mubr.bf16.gmra.mrb[0].mxu0 %v115
  %v151 = vpop.f32.mrb[0].mxu0
  %v152 = vadd.f32 %v66, %v151
  %v153 = vpop.f32.mrb[0].mxu0
  %v154 = vadd.f32 %v70, %v153
  %v155 = vpop.f32.mrb[0].mxu0
  %v156 = vpop.f32.mrb[0].mxu0
  %157 = vdwg.mxu0
  %v158 = vmul.f32 %v152, 0.5
  %v159 = vmul.f32 %v154, 0.5
  %v160 = vmul.f32 %v152, 0.044715
  %v161 = vmul.f32 %v154, 0.044715
  %v162 = vmul.f32 %v160, %v152
  %v163 = vmul.f32 %v161, %v154
  %v164 = vmul.f32 %v162, %v152
  %v165 = vmul.f32 %v163, %v154
  %v166 = vadd.f32 %v152, %v164
  %v167 = vadd.f32 %v154, %v165
  %v168 = vmul.f32 %v166, 0.7978846
  %v169 = vmul.f32 %v167, 0.7978846
  %v170 = vtanh.pop %v168
  %v171 = vtanh.pop %v169
  %v172 = vadd.f32 %v170, 1.0
  %v173 = vadd.f32 %v171, 1.0
  %v174 = vmul.f32 %v158, %v172
  %v175 = vmul.f32 %v159, %v173
  %v176 = vld [vmem:[%s6] sm:$0xf]
  %v177 = vld [vmem:[%s6 + $0x4] sm:$0xf]
  %v178 = vld [vmem:[%s6 + $0x8] sm:$0xf]
  %v179 = vld [vmem:[%s6 + $0xc] sm:$0xf]
  %v180 = vld [vmem:[%s6 + $0x10] sm:$0xf]
  %v181 = vld [vmem:[%s6 + $0x14] sm:$0xf]
  %v182 = vld [vmem:[%s6 + $0x18] sm:$0xf]
  %v183 = vld [vmem:[%s6 + $0x1c] sm:$0xf]
  %v184 = vld [vmem:[%s6 + $0x20] sm:$0xf]
  %v185 = vld [vmem:[%s6 + $0x24] sm:$0xf]
  %v186 = vld [vmem:[%s6 + $0x28] sm:$0xf]
  %v187 = vld [vmem:[%s6 + $0x2c] sm:$0xf]
  %v188 = vld [vmem:[%s6 + $0x30] sm:$0xf]
  %v189 = vld [vmem:[%s6 + $0x34] sm:$0xf]
  %v190 = vld [vmem:[%s6 + $0x38] sm:$0xf]
  %v191 = vld [vmem:[%s6 + $0x3c] sm:$0xf]
  %v192 = vld [vmem:[%s6 + $0x40] sm:$0xf]
  %v193 = vld [vmem:[%s6 + $0x44] sm:$0xf]
  %v194 = vld [vmem:[%s6 + $0x48] sm:$0xf]
  %v195 = vld [vmem:[%s6 + $0x4c] sm:$0xf]
  %v196 = vld [vmem:[%s6 + $0x50] sm:$0xf]
  %v197 = vld [vmem:[%s6 + $0x54] sm:$0xf]
  %v198 = vld [vmem:[%s6 + $0x58] sm:$0xf]
  %v199 = vld [vmem:[%s6 + $0x5c] sm:$0xf]
  %v200 = vld [vmem:[%s6 + $0x60] sm:$0xf]
  %v201 = vld [vmem:[%s6 + $0x64] sm:$0xf]
  %v202 = vld [vmem:[%s6 + $0x68] sm:$0xf]
  %v203 = vld [vmem:[%s6 + $0x6c] sm:$0xf]
  %v204 = vld [vmem:[%s6 + $0x70] sm:$0xf]
  %v205 = vld [vmem:[%s6 + $0x74] sm:$0xf]
  %v206 = vld [vmem:[%s6 + $0x78] sm:$0xf]
  %v207 = vld [vmem:[%s6 + $0x7c] sm:$0xf]
  %v208 = vpack.c.bf16 %v174, %v174
  %v209 = vpack.c.bf16 %v175, %v175
  %v210 = vld [vmem:[%s14 + $0x1] ss:$0 sm:$0xff]
  %v243 = vunpack.c.l.b16 %v176
  %v244 = vunpack.c.l.b16 %v177
  %v245 = vunpack.c.l.b16 %v178
  %v246 = vunpack.c.l.b16 %v179
  %v247 = vunpack.c.l.b16 %v180
  %v248 = vunpack.c.l.b16 %v181
  %v249 = vunpack.c.l.b16 %v182
  %v250 = vunpack.c.l.b16 %v183
  %v251 = vunpack.c.l.b16 %v184
  %v252 = vunpack.c.l.b16 %v185
  %v253 = vunpack.c.l.b16 %v186
  %v254 = vunpack.c.l.b16 %v187
  %v255 = vunpack.c.l.b16 %v188
  %v256 = vunpack.c.l.b16 %v189
  %v257 = vunpack.c.l.b16 %v190
  %v258 = vunpack.c.l.b16 %v191
  %v259 = vunpack.c.l.b16 %v192
  %v260 = vunpack.c.l.b16 %v193
  %v261 = vunpack.c.l.b16 %v194
  %v262 = vunpack.c.l.b16 %v195
  %v263 = vunpack.c.l.b16 %v196
  %v264 = vunpack.c.l.b16 %v197
  %v265 = vunpack.c.l.b16 %v198
  %v266 = vunpack.c.l.b16 %v199
  %v267 = vunpack.c.l.b16 %v200
  %v268 = vunpack.c.l.b16 %v201
  %v269 = vunpack.c.l.b16 %v202
  %v270 = vunpack.c.l.b16 %v203
  %v271 = vunpack.c.l.b16 %v204
  %v272 = vunpack.c.l.b16 %v205
  %v273 = vunpack.c.l.b16 %v206
  %v274 = vunpack.c.l.b16 %v207
  %v275 = vpack.c.b16 %v244, %v243
  %v276 = vpack.c.b16 %v246, %v245
  %v277 = vpack.c.b16 %v248, %v247
  %v278 = vpack.c.b16 %v250, %v249
  %v279 = vpack.c.b16 %v252, %v251
  %v280 = vpack.c.b16 %v254, %v253
  %v281 = vpack.c.b16 %v256, %v255
  %v282 = vpack.c.b16 %v258, %v257
  %v283 = vpack.c.b16 %v260, %v259
  %v284 = vpack.c.b16 %v262, %v261
  %v285 = vpack.c.b16 %v264, %v263
  %v286 = vpack.c.b16 %v266, %v265
  %v287 = vpack.c.b16 %v268, %v267
  %v288 = vpack.c.b16 %v270, %v269
  %v289 = vpack.c.b16 %v272, %v271
  %v290 = vpack.c.b16 %v274, %v273
  %307 = vmatprep.subr.bf16.mxu0 0
  %308 = vmatpush1.bf16.msra.mxu0 %v275
  %309 = vmatprep.subr.bf16.mxu0 0
  %310 = vmatpush1.bf16.msra.mxu0 %v276
  %311 = vmatprep.subr.bf16.mxu0 0
  %312 = vmatpush1.bf16.msra.mxu0 %v277
  %313 = vmatprep.subr.bf16.mxu0 0
  %314 = vmatpush1.bf16.msra.mxu0 %v278
  %315 = vmatprep.subr.bf16.mxu0 0
  %316 = vmatpush1.bf16.msra.mxu0 %v279
  %317 = vmatprep.subr.bf16.mxu0 0
  %318 = vmatpush1.bf16.msra.mxu0 %v280
  %319 = vmatprep.subr.bf16.mxu0 0
  %320 = vmatpush1.bf16.msra.mxu0 %v281
  %321 = vmatprep.subr.bf16.mxu0 0
  %322 = vmatpush1.bf16.msra.mxu0 %v282
  %323 = vmatprep.subr.bf16.mxu0 0
  %324 = vmatpush1.bf16.msra.mxu0 %v283
  %325 = vmatprep.subr.bf16.mxu0 0
  %326 = vmatpush1.bf16.msra.mxu0 %v284
  %327 = vmatprep.subr.bf16.mxu0 0
  %328 = vmatpush1.bf16.msra.mxu0 %v285
  %329 = vmatprep.subr.bf16.mxu0 0
  %330 = vmatpush1.bf16.msra.mxu0 %v286
  %331 = vmatprep.subr.bf16.mxu0 0
  %332 = vmatpush1.bf16.msra.mxu0 %v287
  %333 = vmatprep.subr.bf16.mxu0 0
  %334 = vmatpush1.bf16.msra.mxu0 %v288
  %335 = vmatprep.subr.bf16.mxu0 0
  %336 = vmatpush1.bf16.msra.mxu0 %v289
  %337 = vmatprep.subr.bf16.mxu0 0
  %338 = vmatpush1.bf16.msra.mxu0 %v290
  %339 = vmatprep.mubr.bf16.mxu0 %v209
  %340 = vmatmul.mubr.bf16.gmra.mrb[0].mxu0 %v208
  %v341 = vpop.f32.mrb[0].mxu0
  %v342 = vadd.f32 %v210, %v341
  %v343 = vpop.f32.mrb[0].mxu0
  %v344 = vpop.f32.mrb[0].mxu0
  %v345 = vpop.f32.mrb[0].mxu0
  %346 = vdwg.mxu0
  %v347 = vld [vmem:[%s0] sm:$0xff]
  %v348 = vld [vmem:[%s0 + $0x8] sm:$0xff]
  %v349 = vld [vmem:[%s7] sm:$0xf]
  %v350 = vld [vmem:[%s7 + $0x4] sm:$0x3]
  %v351 = vpack.c.bf16 %v348, %v347
  %v352 = vld [vmem:[%s14 + $0x2] ss:$0 sm:$0xff]
  %v355 = vunpack.c.l.b16 %v349
  %v356 = vunpack.c.l.b16 %v350
  %v357 = vpack.c.b16 %v356, %v355
  %vm358 = vcmask 97280
  %v360 = vsel %vm358, %v351, 0
  %vm362 = vcmask 1045504
  %v364 = vsel %vm362, %v357, 0
  %366 = vmatprep.subr.bf16.mxu0 0
  %367 = vmatpush1.bf16.msra.mxu0 %v364
  %368 = vmatprep.subr.bf16.mxu0 0
  %369 = vmatpush1.bf16.msra.mxu0 0
  %370 = vmatprep.subr.bf16.mxu0 0
  %371 = vmatpush1.bf16.msra.mxu0 0
  %372 = vmatprep.subr.bf16.mxu0 0
  %373 = vmatpush1.bf16.msra.mxu0 0
  %374 = vmatprep.subr.bf16.mxu0 0
  %375 = vmatpush1.bf16.msra.mxu0 0
  %376 = vmatprep.subr.bf16.mxu0 0
  %377 = vmatpush1.bf16.msra.mxu0 0
  %378 = vmatprep.subr.bf16.mxu0 0
  %379 = vmatpush1.bf16.msra.mxu0 0
  %380 = vmatprep.subr.bf16.mxu0 0
  %381 = vmatpush1.bf16.msra.mxu0 0
  %382 = vmatprep.subr.bf16.mxu0 0
  %383 = vmatpush1.bf16.msra.mxu0 0
  %384 = vmatprep.subr.bf16.mxu0 0
  %385 = vmatpush1.bf16.msra.mxu0 0
  %386 = vmatprep.subr.bf16.mxu0 0
  %387 = vmatpush1.bf16.msra.mxu0 0
  %388 = vmatprep.subr.bf16.mxu0 0
  %389 = vmatpush1.bf16.msra.mxu0 0
  %390 = vmatprep.subr.bf16.mxu0 0
  %391 = vmatpush1.bf16.msra.mxu0 0
  %392 = vmatprep.subr.bf16.mxu0 0
  %393 = vmatpush1.bf16.msra.mxu0 0
  %394 = vmatprep.subr.bf16.mxu0 0
  %395 = vmatpush1.bf16.msra.mxu0 0
  %396 = vmatprep.subr.bf16.mxu0 0
  %397 = vmatpush1.bf16.msra.mxu0 0
  %398 = vmatprep.mubr.bf16.mxu0 0
  %399 = vmatmul.mubr.bf16.gmra.mrb[0].mxu0 %v360
  %v400 = vpop.f32.mrb[0].mxu0
  %v401 = vadd.f32 %v352, %v400
  %v402 = vpop.f32.mrb[0].mxu0
  %v403 = vpop.f32.mrb[0].mxu0
  %v404 = vadd.f32 %v352, %v403
  %v405 = vpop.f32.mrb[0].mxu0
  %406 = vdwg.mxu0
  %v407 = vld [vmem:[%s2] sm:$0x3]
  %v408 = vld [vmem:[%s8] sm:$0xf]
  %v409 = vld [vmem:[%s8 + $0x4] sm:$0xf]
  %v410 = vpack.c.bf16 %v407, %v407
  %v411 = vld [vmem:[%s14 + $0x3] ss:$0 sm:$0xff]
  %v414 = vunpack.c.l.b16 %v408
  %v415 = vunpack.c.l.b16 %v409
  %v416 = vpack.c.b16 %v415, %v414
  %vm418 = vcmask 130048
  %v420 = vsel %vm418, %v410, 0
  %422 = vmatprep.subr.bf16.mxu0 0
  %423 = vmatpush1.bf16.msra.mxu0 %v416
  %424 = vmatprep.subr.bf16.mxu0 0
  %425 = vmatpush1.bf16.msra.mxu0 0
  %426 = vmatprep.subr.bf16.mxu0 0
  %427 = vmatpush1.bf16.msra.mxu0 0
  %428 = vmatprep.subr.bf16.mxu0 0
  %429 = vmatpush1.bf16.msra.mxu0 0
  %430 = vmatprep.subr.bf16.mxu0 0
  %431 = vmatpush1.bf16.msra.mxu0 0
  %432 = vmatprep.subr.bf16.mxu0 0
  %433 = vmatpush1.bf16.msra.mxu0 0
  %434 = vmatprep.subr.bf16.mxu0 0
  %435 = vmatpush1.bf16.msra.mxu0 0
  %436 = vmatprep.subr.bf16.mxu0 0
  %437 = vmatpush1.bf16.msra.mxu0 0
  %438 = vmatprep.subr.bf16.mxu0 0
  %439 = vmatpush1.bf16.msra.mxu0 0
  %440 = vmatprep.subr.bf16.mxu0 0
  %441 = vmatpush1.bf16.msra.mxu0 0
  %442 = vmatprep.subr.bf16.mxu0 0
  %443 = vmatpush1.bf16.msra.mxu0 0
  %444 = vmatprep.subr.bf16.mxu0 0
  %445 = vmatpush1.bf16.msra.mxu0 0
  %446 = vmatprep.subr.bf16.mxu0 0
  %447 = vmatpush1.bf16.msra.mxu0 0
  %448 = vmatprep.subr.bf16.mxu0 0
  %449 = vmatpush1.bf16.msra.mxu0 0
  %450 = vmatprep.subr.bf16.mxu0 0
  %451 = vmatpush1.bf16.msra.mxu0 0
  %452 = vmatprep.subr.bf16.mxu0 0
  %453 = vmatpush1.bf16.msra.mxu0 0
  %454 = vmatprep.mubr.bf16.mxu0 0
  %455 = vmatmul.mubr.bf16.gmra.mrb[0].mxu0 %v420
  %v456 = vpop.f32.mrb[0].mxu0
  %v457 = vadd.f32 %v411, %v456
  %v458 = vpop.f32.mrb[0].mxu0
  %v459 = vpop.f32.mrb[0].mxu0
  %v460 = vpop.f32.mrb[0].mxu0
  %461 = vdwg.mxu0
  %v462 = vlaneseq
  %v463 = vshrl.u32 %v462, 7
  %v464 = vadd.s32 %v463, 8
  %vm465 = vcmp.ge.s32.totalorder %v463, 0
  %vm466 = vcmp.ge.s32.totalorder %v464, 0
  %vm467 = vcmp.lt.s32.totalorder %v463, 8
  %vm468 = vcmp.lt.s32.totalorder %v464, 8
  %vm469 = vmand %vm465, %vm467
  %vm470 = vmand %vm466, %vm468
  %v471 = vlaneseq
  %v472 = vshrl.u32 %v471, 7
  %v473 = vsub.s32 0, %v472
  %v474 = vrot.slane %v457, %v473
  %v475 = vsel %vm469, %v474, 0.0
  %v476 = vsel %vm470, %v474, 0.0
  %vm477 = vcmp.ge.s32.totalorder %v463, 8
  %vm478 = vcmp.ge.s32.totalorder %v464, 8
  %vm479 = vcmp.lt.s32.totalorder %v463, 16
  %vm480 = vcmp.lt.s32.totalorder %v464, 16
  %vm481 = vmand %vm477, %vm479
  %vm482 = vmand %vm478, %vm480
  %v483 = vlaneseq
  %v484 = vshrl.u32 %v483, 7
  %v485 = vsub.s32 1, %v484
  %v486 = vrot.slane %v457, %v485
  %v487 = vsel %vm481, %v486, %v475
  %v488 = vsel %vm482, %v486, %v476
  %v489 = vadd.f32 %v401, %v487
  %v490 = vadd.f32 %v404, %v488
  %vm491 = vcmask 254976
  %492 = vst.msk [vmem:[#allocation4] sm:$0x3] %vm491, %v342
  %vm493 = vcmask 261120
  %494 = vst.msk [vmem:[#allocation4 + $0x2] sm:$0xff] %vm493, %v489
  %495 = vst.msk [vmem:[#allocation4 + $0xa] sm:$0xff] %vm493, %v490
  %v496 = vld [vmem:[#allocation4] sm:$0xff]
  %v497 = vld [vmem:[#allocation4 + $0x8] sm:$0xff]
  %v498 = vld [vmem:[#allocation4 + $0x10] sm:$0x3]
  %v499 = vld [vmem:[%s4] sm:$0xff]
  %v500 = vld [vmem:[%s4 + $0x8] sm:$0xff]
  %v501 = vld [vmem:[%s4 + $0x10] sm:$0x3]
  %v502 = vadd.f32 %v496, %v499
  %v503 = vadd.f32 %v497, %v500
  %v504 = vadd.f32 %v498, %v501
  %v505 = vld [vmem:[%s3] sm:$0xff]
  %v506 = vld [vmem:[%s3 + $0x8] sm:$0xff]
  %v507 = vld [vmem:[%s3 + $0x10] sm:$0x3]
  %v508 = vld [vmem:[%s9] sm:$0xf]
  %v509 = vld [vmem:[%s9 + $0x4] sm:$0xf]
  %v510 = vld [vmem:[%s9 + $0x8] sm:$0xf]
  %v511 = vld [vmem:[%s9 + $0xc] sm:$0xf]
  %v512 = vpack.c.bf16 %v503, %v502
  %v513 = vpack.c.bf16 %v504, %v504
  %v514 = vld [vmem:[%s14 + $0x5] ss:$0 sm:$0xff]
  %v519 = vunpack.c.l.b16 %v508
  %v520 = vunpack.c.l.b16 %v509
  %v521 = vunpack.c.l.b16 %v510
  %v522 = vunpack.c.l.b16 %v511
  %v523 = vpack.c.b16 %v520, %v519
  %v524 = vpack.c.b16 %v522, %v521
  %v528 = vsel %vm493, %v512, 0
  %v531 = vsel %vm493, %v513, 0
  %533 = vmatprep.subr.bf16.mxu0 0
  %534 = vmatpush1.bf16.msra.mxu0 %v523
  %535 = vmatprep.subr.bf16.mxu0 0
  %536 = vmatpush1.bf16.msra.mxu0 %v524
  %537 = vmatprep.subr.bf16.mxu0 0
  %538 = vmatpush1.bf16.msra.mxu0 0
  %539 = vmatprep.subr.bf16.mxu0 0
  %540 = vmatpush1.bf16.msra.mxu0 0
  %541 = vmatprep.subr.bf16.mxu0 0
  %542 = vmatpush1.bf16.msra.mxu0 0
  %543 = vmatprep.subr.bf16.mxu0 0
  %544 = vmatpush1.bf16.msra.mxu0 0
  %545 = vmatprep.subr.bf16.mxu0 0
  %546 = vmatpush1.bf16.msra.mxu0 0
  %547 = vmatprep.subr.bf16.mxu0 0
  %548 = vmatpush1.bf16.msra.mxu0 0
  %549 = vmatprep.subr.bf16.mxu0 0
  %550 = vmatpush1.bf16.msra.mxu0 0
  %551 = vmatprep.subr.bf16.mxu0 0
  %552 = vmatpush1.bf16.msra.mxu0 0
  %553 = vmatprep.subr.bf16.mxu0 0
  %554 = vmatpush1.bf16.msra.mxu0 0
  %555 = vmatprep.subr.bf16.mxu0 0
  %556 = vmatpush1.bf16.msra.mxu0 0
  %557 = vmatprep.subr.bf16.mxu0 0
  %558 = vmatpush1.bf16.msra.mxu0 0
  %559 = vmatprep.subr.bf16.mxu0 0
  %560 = vmatpush1.bf16.msra.mxu0 0
  %561 = vmatprep.subr.bf16.mxu0 0
  %562 = vmatpush1.bf16.msra.mxu0 0
  %563 = vmatprep.subr.bf16.mxu0 0
  %564 = vmatpush1.bf16.msra.mxu0 0
  %565 = vmatprep.mubr.bf16.mxu0 0
  %566 = vmatmul.mubr.bf16.gmra.mrb[0].mxu0 %v528
  %v567 = vpop.f32.mrb[0].mxu0
  %v568 = vadd.f32 %v514, %v567
  %v569 = vpop.f32.mrb[0].mxu0
  %v570 = vpop.f32.mrb[0].mxu0
  %v571 = vadd.f32 %v514, %v570
  %v572 = vpop.f32.mrb[0].mxu0
  %573 = vmatprep.mubr.bf16.mxu0 0
  %574 = vmatmul.mubr.bf16.gmra.mrb[0].mxu0 %v531
  %v575 = vpop.f32.mrb[0].mxu0
  %v576 = vadd.f32 %v514, %v575
  %v577 = vpop.f32.mrb[0].mxu0
  %v578 = vpop.f32.mrb[0].mxu0
  %v579 = vpop.f32.mrb[0].mxu0
  %580 = vdwg.mxu0
  %vm581 = vcmask 785408
  %582 = vst.msk [vmem:[#allocation2] sm:$0xff] %vm581, %v568
  %583 = vst.msk [vmem:[#allocation2 + $0x8] sm:$0xff] %vm581, %v571
  %vm584 = vcmask 779264
  %585 = vst.msk [vmem:[#allocation2 + $0x10] sm:$0x3] %vm584, %v576
  %v586 = vld [vmem:[#allocation2] sm:$0xff]
  %v587 = vld [vmem:[#allocation2 + $0x8] sm:$0xff]
  %v588 = vld [vmem:[#allocation2 + $0x10] sm:$0x3]
  %v589 = vpack.c.bf16 %v587, %v586
  %v590 = vpack.c.bf16 %v588, %v588
  %593 = vrot.lane.b32.xlu0 %v589, 96
  %v594 = vpop.permute.xlu0 %593
  %595 = vrot.lane.b32.xlu0 %v590, 96
  %v596 = vpop.permute.xlu0 %595
  %vm597 = vcmask 64512
  %v599 = vsel %vm597, %v589, 0
  %v602 = vsel %vm597, %v590, 0
  %v605 = vsel %vm597, %v594, 0
  %v608 = vsel %vm597, %v596, 0
  %610 = vmatprep.subr.bf16.mxu0 0
  %611 = vmatpush1.bf16.xpose.msra.mxu0 %v605
  %612 = vmatprep.subr.bf16.mxu0 0
  %613 = vmatpush1.bf16.xpose.msra.mxu0 %v608
  %614 = vmatprep.subr.bf16.mxu0 0
  %615 = vmatpush1.bf16.xpose.msra.mxu0 0
  %616 = vmatprep.subr.bf16.mxu0 0
  %617 = vmatpush1.bf16.xpose.msra.mxu0 0
  %618 = vmatprep.subr.bf16.mxu0 0
  %619 = vmatpush1.bf16.xpose.msra.mxu0 0
  %620 = vmatprep.subr.bf16.mxu0 0
  %621 = vmatpush1.bf16.xpose.msra.mxu0 0
  %622 = vmatprep.subr.bf16.mxu0 0
  %623 = vmatpush1.bf16.xpose.msra.mxu0 0
  %624 = vmatprep.subr.bf16.mxu0 0
  %625 = vmatpush1.bf16.xpose.msra.mxu0 0
  %626 = vmatprep.subr.bf16.mxu0 0
  %627 = vmatpush1.bf16.xpose.msra.mxu0 0
  %628 = vmatprep.subr.bf16.mxu0 0
  %629 = vmatpush1.bf16.xpose.msra.mxu0 0
  %630 = vmatprep.subr.bf16.mxu0 0
  %631 = vmatpush1.bf16.xpose.msra.mxu0 0
  %632 = vmatprep.subr.bf16.mxu0 0
  %633 = vmatpush1.bf16.xpose.msra.mxu0 0
  %634 = vmatprep.subr.bf16.mxu0 0
  %635 = vmatpush1.bf16.xpose.msra.mxu0 0
  %636 = vmatprep.subr.bf16.mxu0 0
  %637 = vmatpush1.bf16.xpose.msra.mxu0 0
  %638 = vmatprep.subr.bf16.mxu0 0
  %639 = vmatpush1.bf16.xpose.msra.mxu0 0
  %640 = vmatprep.subr.bf16.mxu0 0
  %641 = vmatpush1.bf16.xpose.msra.mxu0 0
  %642 = vmatprep.mubr.bf16.mxu0 0
  %643 = vmatmul.mubr.bf16.gmra.mrb[0].mxu0 %v599
  %v644 = vpop.f32.mrb[0].mxu0
  %v645 = vadd.f32 %v505, %v644
  %v646 = vpop.f32.mrb[0].mxu0
  %v647 = vpop.f32.mrb[0].mxu0
  %v648 = vadd.f32 %v506, %v647
  %v649 = vpop.f32.mrb[0].mxu0
  %650 = vmatprep.mubr.bf16.mxu0 0
  %651 = vmatmul.mubr.bf16.gmra.mrb[0].mxu0 %v602
  %v652 = vpop.f32.mrb[0].mxu0
  %v653 = vadd.f32 %v507, %v652
  %v654 = vpop.f32.mrb[0].mxu0
  %v655 = vpop.f32.mrb[0].mxu0
  %v656 = vpop.f32.mrb[0].mxu0
  %657 = vdwg.mxu0
  %vm658 = vcmask 146432
  %v659 = vsel %vm658, %v645, -inf
  %660 = vmax.xlane.f32.xlu0 %v659
  %v661 = vpop.xlane.xlu0 %660
  %v662 = vsel %vm658, %v648, -inf
  %663 = vmax.xlane.f32.xlu0 %v662
  %v664 = vpop.xlane.xlu0 %663
  %vm665 = vcmask 140288
  %v666 = vsel %vm665, %v653, -inf
  %667 = vmax.xlane.f32.xlu0 %v666
  %v668 = vpop.xlane.xlu0 %667
  %v669 = vsub.f32 %v645, %v661
  %v670 = vsub.f32 %v648, %v664
  %v671 = vsub.f32 %v653, %v668
  %v672 = vmul.f32 %v669, 1.442695
  %v673 = vpow.pop %v672
  %v674 = vmul.f32 %v670, 1.442695
  %v675 = vpow.pop %v674
  %v676 = vmul.f32 %v671, 1.442695
  %v677 = vpow.pop %v676
  %v678 = vsel %vm658, %v673, 0.0
  %679 = vadd.xlane.f32.xlu0 %v678
  %v680 = vpop.xlane.xlu0 %679
  %v681 = vsel %vm658, %v675, 0.0
  %682 = vadd.xlane.f32.xlu0 %v681
  %v683 = vpop.xlane.xlu0 %682
  %v684 = vsel %vm665, %v677, 0.0
  %685 = vadd.xlane.f32.xlu0 %v684
  %v686 = vpop.xlane.xlu0 %685
  %v687 = vrcp.pop %v680
  %v688 = vmul.f32 %v673, %v687
  %v689 = vrcp.pop %v683
  %v690 = vmul.f32 %v675, %v689
  %v691 = vrcp.pop %v686
  %v692 = vmul.f32 %v677, %v691
  %v693 = vpack.c.bf16 %v690, %v688
  %v694 = vpack.c.bf16 %v692, %v692
  %695 = vrot.lane.b32.xlu0 %v589, 64
  %v696 = vpop.permute.xlu0 %695
  %697 = vrot.lane.b32.xlu0 %v590, 64
  %v698 = vpop.permute.xlu0 %697
  %v701 = vsel %vm658, %v693, 0
  %v704 = vsel %vm658, %v694, 0
  %vm706 = vcmask 1040384
  %v708 = vsel %vm706, %v698, 0
  %710 = vmatprep.subr.bf16.mxu0 0
  %711 = vmatpush1.bf16.msra.mxu0 %v696
  %712 = vmatprep.subr.bf16.mxu0 0
  %713 = vmatpush1.bf16.msra.mxu0 %v708
  %714 = vmatprep.subr.bf16.mxu0 0
  %715 = vmatpush1.bf16.msra.mxu0 0
  %716 = vmatprep.subr.bf16.mxu0 0
  %717 = vmatpush1.bf16.msra.mxu0 0
  %718 = vmatprep.subr.bf16.mxu0 0
  %719 = vmatpush1.bf16.msra.mxu0 0
  %720 = vmatprep.subr.bf16.mxu0 0
  %721 = vmatpush1.bf16.msra.mxu0 0
  %722 = vmatprep.subr.bf16.mxu0 0
  %723 = vmatpush1.bf16.msra.mxu0 0
  %724 = vmatprep.subr.bf16.mxu0 0
  %725 = vmatpush1.bf16.msra.mxu0 0
  %726 = vmatprep.subr.bf16.mxu0 0
  %727 = vmatpush1.bf16.msra.mxu0 0
  %728 = vmatprep.subr.bf16.mxu0 0
  %729 = vmatpush1.bf16.msra.mxu0 0
  %730 = vmatprep.subr.bf16.mxu0 0
  %731 = vmatpush1.bf16.msra.mxu0 0
  %732 = vmatprep.subr.bf16.mxu0 0
  %733 = vmatpush1.bf16.msra.mxu0 0
  %734 = vmatprep.subr.bf16.mxu0 0
  %735 = vmatpush1.bf16.msra.mxu0 0
  %736 = vmatprep.subr.bf16.mxu0 0
  %737 = vmatpush1.bf16.msra.mxu0 0
  %738 = vmatprep.subr.bf16.mxu0 0
  %739 = vmatpush1.bf16.msra.mxu0 0
  %740 = vmatprep.subr.bf16.mxu0 0
  %741 = vmatpush1.bf16.msra.mxu0 0
  %742 = vmatprep.mubr.bf16.mxu0 0
  %743 = vmatmul.mubr.bf16.gmra.mrb[0].mxu0 %v701
  %v744 = vpop.f32.mrb[0].mxu0
  %v745 = vadd.f32 0.0, %v744
  %v746 = vpop.f32.mrb[0].mxu0
  %v747 = vpop.f32.mrb[0].mxu0
  %v748 = vadd.f32 0.0, %v747
  %v749 = vpop.f32.mrb[0].mxu0
  %750 = vmatprep.mubr.bf16.mxu0 0
  %751 = vmatmul.mubr.bf16.gmra.mrb[0].mxu0 %v704
  %v752 = vpop.f32.mrb[0].mxu0
  %v753 = vadd.f32 0.0, %v752
  %v754 = vpop.f32.mrb[0].mxu0
  %v755 = vpop.f32.mrb[0].mxu0
  %v756 = vpop.f32.mrb[0].mxu0
  %757 = vdwg.mxu0
  %758 = vst.msk [vmem:[#allocation3] sm:$0xff] %vm597, %v745
  %759 = vst.msk [vmem:[#allocation3 + $0x8] sm:$0xff] %vm597, %v748
  %vm760 = vcmask 58368
  %761 = vst.msk [vmem:[#allocation3 + $0x10] sm:$0x3] %vm760, %v753
  %v762 = vld [vmem:[#allocation2] sm:$0xff]
  %v763 = vld [vmem:[#allocation2 + $0x8] sm:$0xff]
  %v764 = vld [vmem:[#allocation2 + $0x10] sm:$0x3]
  %v765 = vpack.c.bf16 %v763, %v762
  %v766 = vpack.c.bf16 %v764, %v764
  %769 = vrot.lane.b32.xlu0 %v765, 120
  %v770 = vpop.permute.xlu0 %769
  %771 = vrot.lane.b32.xlu0 %v766, 120
  %v772 = vpop.permute.xlu0 %771
  %773 = vrot.lane.b32.xlu0 %v765, 88
  %v774 = vpop.permute.xlu0 %773
  %775 = vrot.lane.b32.xlu0 %v766, 88
  %v776 = vpop.permute.xlu0 %775
  %v778 = vsel %vm597, %v770, 0
  %v781 = vsel %vm597, %v772, 0
  %v784 = vsel %vm597, %v774, 0
  %v787 = vsel %vm597, %v776, 0
  %789 = vmatprep.subr.bf16.mxu0 0
  %790 = vmatpush1.bf16.xpose.msra.mxu0 %v784
  %791 = vmatprep.subr.bf16.mxu0 0
  %792 = vmatpush1.bf16.xpose.msra.mxu0 %v787
  %793 = vmatprep.subr.bf16.mxu0 0
  %794 = vmatpush1.bf16.xpose.msra.mxu0 0
  %795 = vmatprep.subr.bf16.mxu0 0
  %796 = vmatpush1.bf16.xpose.msra.mxu0 0
  %797 = vmatprep.subr.bf16.mxu0 0
  %798 = vmatpush1.bf16.xpose.msra.mxu0 0
  %799 = vmatprep.subr.bf16.mxu0 0
  %800 = vmatpush1.bf16.xpose.msra.mxu0 0
  %801 = vmatprep.subr.bf16.mxu0 0
  %802 = vmatpush1.bf16.xpose.msra.mxu0 0
  %803 = vmatprep.subr.bf16.mxu0 0
  %804 = vmatpush1.bf16.xpose.msra.mxu0 0
  %805 = vmatprep.subr.bf16.mxu0 0
  %806 = vmatpush1.bf16.xpose.msra.mxu0 0
  %807 = vmatprep.subr.bf16.mxu0 0
  %808 = vmatpush1.bf16.xpose.msra.mxu0 0
  %809 = vmatprep.subr.bf16.mxu0 0
  %810 = vmatpush1.bf16.xpose.msra.mxu0 0
  %811 = vmatprep.subr.bf16.mxu0 0
  %812 = vmatpush1.bf16.xpose.msra.mxu0 0
  %813 = vmatprep.subr.bf16.mxu0 0
  %814 = vmatpush1.bf16.xpose.msra.mxu0 0
  %815 = vmatprep.subr.bf16.mxu0 0
  %816 = vmatpush1.bf16.xpose.msra.mxu0 0
  %817 = vmatprep.subr.bf16.mxu0 0
  %818 = vmatpush1.bf16.xpose.msra.mxu0 0
  %819 = vmatprep.subr.bf16.mxu0 0
  %820 = vmatpush1.bf16.xpose.msra.mxu0 0
  %821 = vmatprep.mubr.bf16.mxu0 0
  %822 = vmatmul.mubr.bf16.gmra.mrb[0].mxu0 %v778
  %v823 = vpop.f32.mrb[0].mxu0
  %v824 = vadd.f32 %v505, %v823
  %v825 = vpop.f32.mrb[0].mxu0
  %v826 = vpop.f32.mrb[0].mxu0
  %v827 = vadd.f32 %v506, %v826
  %v828 = vpop.f32.mrb[0].mxu0
  %829 = vmatprep.mubr.bf16.mxu0 0
  %830 = vmatmul.mubr.bf16.gmra.mrb[0].mxu0 %v781
  %v831 = vpop.f32.mrb[0].mxu0
  %v832 = vadd.f32 %v507, %v831
  %v833 = vpop.f32.mrb[0].mxu0
  %v834 = vpop.f32.mrb[0].mxu0
  %v835 = vpop.f32.mrb[0].mxu0
  %836 = vdwg.mxu0
  %v837 = vsel %vm658, %v824, -inf
  %838 = vmax.xlane.f32.xlu0 %v837
  %v839 = vpop.xlane.xlu0 %838
  %v840 = vsel %vm658, %v827, -inf
  %841 = vmax.xlane.f32.xlu0 %v840
  %v842 = vpop.xlane.xlu0 %841
  %v843 = vsel %vm665, %v832, -inf
  %844 = vmax.xlane.f32.xlu0 %v843
  %v845 = vpop.xlane.xlu0 %844
  %v846 = vsub.f32 %v824, %v839
  %v847 = vsub.f32 %v827, %v842
  %v848 = vsub.f32 %v832, %v845
  %v849 = vmul.f32 %v846, 1.442695
  %v850 = vpow.pop %v849
  %v851 = vmul.f32 %v847, 1.442695
  %v852 = vpow.pop %v851
  %v853 = vmul.f32 %v848, 1.442695
  %v854 = vpow.pop %v853
  %v855 = vsel %vm658, %v850, 0.0
  %856 = vadd.xlane.f32.xlu0 %v855
  %v857 = vpop.xlane.xlu0 %856
  %v858 = vsel %vm658, %v852, 0.0
  %859 = vadd.xlane.f32.xlu0 %v858
  %v860 = vpop.xlane.xlu0 %859
  %v861 = vsel %vm665, %v854, 0.0
  %862 = vadd.xlane.f32.xlu0 %v861
  %v863 = vpop.xlane.xlu0 %862
  %v864 = vrcp.pop %v857
  %v865 = vmul.f32 %v850, %v864
  %v866 = vrcp.pop %v860
  %v867 = vmul.f32 %v852, %v866
  %v868 = vrcp.pop %v863
  %v869 = vmul.f32 %v854, %v868
  %v870 = vpack.c.bf16 %v867, %v865
  %v871 = vpack.c.bf16 %v869, %v869
  %872 = vrot.lane.b32.xlu0 %v765, 56
  %v873 = vpop.permute.xlu0 %872
  %874 = vrot.lane.b32.xlu0 %v766, 56
  %v875 = vpop.permute.xlu0 %874
  %v878 = vsel %vm658, %v870, 0
  %v881 = vsel %vm658, %v871, 0
  %v884 = vsel %vm706, %v875, 0
  %886 = vmatprep.subr.bf16.mxu0 0
  %887 = vmatpush1.bf16.msra.mxu0 %v873
  %888 = vmatprep.subr.bf16.mxu0 0
  %889 = vmatpush1.bf16.msra.mxu0 %v884
  %890 = vmatprep.subr.bf16.mxu0 0
  %891 = vmatpush1.bf16.msra.mxu0 0
  %892 = vmatprep.subr.bf16.mxu0 0
  %893 = vmatpush1.bf16.msra.mxu0 0
  %894 = vmatprep.subr.bf16.mxu0 0
  %895 = vmatpush1.bf16.msra.mxu0 0
  %896 = vmatprep.subr.bf16.mxu0 0
  %897 = vmatpush1.bf16.msra.mxu0 0
  %898 = vmatprep.subr.bf16.mxu0 0
  %899 = vmatpush1.bf16.msra.mxu0 0
  %900 = vmatprep.subr.bf16.mxu0 0
  %901 = vmatpush1.bf16.msra.mxu0 0
  %902 = vmatprep.subr.bf16.mxu0 0
  %903 = vmatpush1.bf16.msra.mxu0 0
  %904 = vmatprep.subr.bf16.mxu0 0
  %905 = vmatpush1.bf16.msra.mxu0 0
  %906 = vmatprep.subr.bf16.mxu0 0
  %907 = vmatpush1.bf16.msra.mxu0 0
  %908 = vmatprep.subr.bf16.mxu0 0
  %909 = vmatpush1.bf16.msra.mxu0 0
  %910 = vmatprep.subr.bf16.mxu0 0
  %911 = vmatpush1.bf16.msra.mxu0 0
  %912 = vmatprep.subr.bf16.mxu0 0
  %913 = vmatpush1.bf16.msra.mxu0 0
  %914 = vmatprep.subr.bf16.mxu0 0
  %915 = vmatpush1.bf16.msra.mxu0 0
  %916 = vmatprep.subr.bf16.mxu0 0
  %917 = vmatpush1.bf16.msra.mxu0 0
  %918 = vmatprep.mubr.bf16.mxu0 0
  %919 = vmatmul.mubr.bf16.gmra.mrb[0].mxu0 %v878
  %v920 = vpop.f32.mrb[0].mxu0
  %v921 = vadd.f32 0.0, %v920
  %v922 = vpop.f32.mrb[0].mxu0
  %v923 = vpop.f32.mrb[0].mxu0
  %v924 = vadd.f32 0.0, %v923
  %v925 = vpop.f32.mrb[0].mxu0
  %926 = vmatprep.mubr.bf16.mxu0 0
  %927 = vmatmul.mubr.bf16.gmra.mrb[0].mxu0 %v881
  %v928 = vpop.f32.mrb[0].mxu0
  %v929 = vadd.f32 0.0, %v928
  %v930 = vpop.f32.mrb[0].mxu0
  %v931 = vpop.f32.mrb[0].mxu0
  %v932 = vpop.f32.mrb[0].mxu0
  %933 = vdwg.mxu0
  %937 = vrot.lane.b32.xlu0 %v921, 8
  %v938 = vpop.permute.xlu0 %937
  %939 = vrot.lane.b32.xlu0 %v924, 8
  %v940 = vpop.permute.xlu0 %939
  %941 = vrot.lane.b32.xlu0 %v929, 8
  %v942 = vpop.permute.xlu0 %941
  %vm946 = vcmask 130112
  %947 = vst.msk [vmem:[#allocation3] sm:$0xff] %vm946, %v938
  %948 = vst.msk [vmem:[#allocation3 + $0x8] sm:$0xff] %vm946, %v940
  %vm949 = vcmask 123968
  %950 = vst.msk [vmem:[#allocation3 + $0x10] sm:$0x3] %vm949, %v942
  %v951 = vld [vmem:[#allocation2] sm:$0xff]
  %v952 = vld [vmem:[#allocation2 + $0x8] sm:$0xff]
  %v953 = vld [vmem:[#allocation2 + $0x10] sm:$0x3]
  %v954 = vpack.c.bf16 %v952, %v951
  %v955 = vpack.c.bf16 %v953, %v953
  %958 = vrot.lane.b32.xlu0 %v954, 112
  %v959 = vpop.permute.xlu0 %958
  %960 = vrot.lane.b32.xlu0 %v955, 112
  %v961 = vpop.permute.xlu0 %960
  %962 = vrot.lane.b32.xlu0 %v954, 80
  %v963 = vpop.permute.xlu0 %962
  %964 = vrot.lane.b32.xlu0 %v955, 80
  %v965 = vpop.permute.xlu0 %964
  %v967 = vsel %vm597, %v959, 0
  %v970 = vsel %vm597, %v961, 0
  %v973 = vsel %vm597, %v963, 0
  %v976 = vsel %vm597, %v965, 0
  %978 = vmatprep.subr.bf16.mxu0 0
  %979 = vmatpush1.bf16.xpose.msra.mxu0 %v973
  %980 = vmatprep.subr.bf16.mxu0 0
  %981 = vmatpush1.bf16.xpose.msra.mxu0 %v976
  %982 = vmatprep.subr.bf16.mxu0 0
  %983 = vmatpush1.bf16.xpose.msra.mxu0 0
  %984 = vmatprep.subr.bf16.mxu0 0
  %985 = vmatpush1.bf16.xpose.msra.mxu0 0
  %986 = vmatprep.subr.bf16.mxu0 0
  %987 = vmatpush1.bf16.xpose.msra.mxu0 0
  %988 = vmatprep.subr.bf16.mxu0 0
  %989 = vmatpush1.bf16.xpose.msra.mxu0 0
  %990 = vmatprep.subr.bf16.mxu0 0
  %991 = vmatpush1.bf16.xpose.msra.mxu0 0
  %992 = vmatprep.subr.bf16.mxu0 0
  %993 = vmatpush1.bf16.xpose.msra.mxu0 0
  %994 = vmatprep.subr.bf16.mxu0 0
  %995 = vmatpush1.bf16.xpose.msra.mxu0 0
  %996 = vmatprep.subr.bf16.mxu0 0
  %997 = vmatpush1.bf16.xpose.msra.mxu0 0
  %998 = vmatprep.subr.bf16.mxu0 0
  %999 = vmatpush1.bf16.xpose.msra.mxu0 0
  %1000 = vmatprep.subr.bf16.mxu0 0
  %1001 = vmatpush1.bf16.xpose.msra.mxu0 0
  %1002 = vmatprep.subr.bf16.mxu0 0
  %1003 = vmatpush1.bf16.xpose.msra.mxu0 0
  %1004 = vmatprep.subr.bf16.mxu0 0
  %1005 = vmatpush1.bf16.xpose.msra.mxu0 0
  %1006 = vmatprep.subr.bf16.mxu0 0
  %1007 = vmatpush1.bf16.xpose.msra.mxu0 0
  %1008 = vmatprep.subr.bf16.mxu0 0
  %1009 = vmatpush1.bf16.xpose.msra.mxu0 0
  %1010 = vmatprep.mubr.bf16.mxu0 0
  %1011 = vmatmul.mubr.bf16.gmra.mrb[0].mxu0 %v967
  %v1012 = vpop.f32.mrb[0].mxu0
  %v1013 = vadd.f32 %v505, %v1012
  %v1014 = vpop.f32.mrb[0].mxu0
  %v1015 = vpop.f32.mrb[0].mxu0
  %v1016 = vadd.f32 %v506, %v1015
  %v1017 = vpop.f32.mrb[0].mxu0
  %1018 = vmatprep.mubr.bf16.mxu0 0
  %1019 = vmatmul.mubr.bf16.gmra.mrb[0].mxu0 %v970
  %v1020 = vpop.f32.mrb[0].mxu0
  %v1021 = vadd.f32 %v507, %v1020
  %v1022 = vpop.f32.mrb[0].mxu0
  %v1023 = vpop.f32.mrb[0].mxu0
  %v1024 = vpop.f32.mrb[0].mxu0
  %1025 = vdwg.mxu0
  %v1026 = vsel %vm658, %v1013, -inf
  %1027 = vmax.xlane.f32.xlu0 %v1026
  %v1028 = vpop.xlane.xlu0 %1027
  %v1029 = vsel %vm658, %v1016, -inf
  %1030 = vmax.xlane.f32.xlu0 %v1029
  %v1031 = vpop.xlane.xlu0 %1030
  %v1032 = vsel %vm665, %v1021, -inf
  %1033 = vmax.xlane.f32.xlu0 %v1032
  %v1034 = vpop.xlane.xlu0 %1033
  %v1035 = vsub.f32 %v1013, %v1028
  %v1036 = vsub.f32 %v1016, %v1031
  %v1037 = vsub.f32 %v1021, %v1034
  %v1038 = vmul.f32 %v1035, 1.442695
  %v1039 = vpow.pop %v1038
  %v1040 = vmul.f32 %v1036, 1.442695
  %v1041 = vpow.pop %v1040
  %v1042 = vmul.f32 %v1037, 1.442695
  %v1043 = vpow.pop %v1042
  %v1044 = vsel %vm658, %v1039, 0.0
  %1045 = vadd.xlane.f32.xlu0 %v1044
  %v1046 = vpop.xlane.xlu0 %1045
  %v1047 = vsel %vm658, %v1041, 0.0
  %1048 = vadd.xlane.f32.xlu0 %v1047
  %v1049 = vpop.xlane.xlu0 %1048
  %v1050 = vsel %vm665, %v1043, 0.0
  %1051 = vadd.xlane.f32.xlu0 %v1050
  %v1052 = vpop.xlane.xlu0 %1051
  %v1053 = vrcp.pop %v1046
  %v1054 = vmul.f32 %v1039, %v1053
  %v1055 = vrcp.pop %v1049
  %v1056 = vmul.f32 %v1041, %v1055
  %v1057 = vrcp.pop %v1052
  %v1058 = vmul.f32 %v1043, %v1057
  %v1059 = vpack.c.bf16 %v1056, %v1054
  %v1060 = vpack.c.bf16 %v1058, %v1058
  %1061 = vrot.lane.b32.xlu0 %v954, 48
  %v1062 = vpop.permute.xlu0 %1061
  %1063 = vrot.lane.b32.xlu0 %v955, 48
  %v1064 = vpop.permute.xlu0 %1063
  %v1067 = vsel %vm658, %v1059, 0
  %v1070 = vsel %vm658, %v1060, 0
  %v1073 = vsel %vm706, %v1064, 0
  %1075 = vmatprep.subr.bf16.mxu0 0
  %1076 = vmatpush1.bf16.msra.mxu0 %v1062
  %1077 = vmatprep.subr.bf16.mxu0 0
  %1078 = vmatpush1.bf16.msra.mxu0 %v1073
  %1079 = vmatprep.subr.bf16.mxu0 0
  %1080 = vmatpush1.bf16.msra.mxu0 0
  %1081 = vmatprep.subr.bf16.mxu0 0
  %1082 = vmatpush1.bf16.msra.mxu0 0
  %1083 = vmatprep.subr.bf16.mxu0 0
  %1084 = vmatpush1.bf16.msra.mxu0 0
  %1085 = vmatprep.subr.bf16.mxu0 0
  %1086 = vmatpush1.bf16.msra.mxu0 0
  %1087 = vmatprep.subr.bf16.mxu0 0
  %1088 = vmatpush1.bf16.msra.mxu0 0
  %1089 = vmatprep.subr.bf16.mxu0 0
  %1090 = vmatpush1.bf16.msra.mxu0 0
  %1091 = vmatprep.subr.bf16.mxu0 0
  %1092 = vmatpush1.bf16.msra.mxu0 0
  %1093 = vmatprep.subr.bf16.mxu0 0
  %1094 = vmatpush1.bf16.msra.mxu0 0
  %1095 = vmatprep.subr.bf16.mxu0 0
  %1096 = vmatpush1.bf16.msra.mxu0 0
  %1097 = vmatprep.subr.bf16.mxu0 0
  %1098 = vmatpush1.bf16.msra.mxu0 0
  %1099 = vmatprep.subr.bf16.mxu0 0
  %1100 = vmatpush1.bf16.msra.mxu0 0
  %1101 = vmatprep.subr.bf16.mxu0 0
  %1102 = vmatpush1.bf16.msra.mxu0 0
  %1103 = vmatprep.subr.bf16.mxu0 0
  %1104 = vmatpush1.bf16.msra.mxu0 0
  %1105 = vmatprep.subr.bf16.mxu0 0
  %1106 = vmatpush1.bf16.msra.mxu0 0
  %1107 = vmatprep.mubr.bf16.mxu0 0
  %1108 = vmatmul.mubr.bf16.gmra.mrb[0].mxu0 %v1067
  %v1109 = vpop.f32.mrb[0].mxu0
  %v1110 = vadd.f32 0.0, %v1109
  %v1111 = vpop.f32.mrb[0].mxu0
  %v1112 = vpop.f32.mrb[0].mxu0
  %v1113 = vadd.f32 0.0, %v1112
  %v1114 = vpop.f32.mrb[0].mxu0
  %1115 = vmatprep.mubr.bf16.mxu0 0
  %1116 = vmatmul.mubr.bf16.gmra.mrb[0].mxu0 %v1070
  %v1117 = vpop.f32.mrb[0].mxu0
  %v1118 = vadd.f32 0.0, %v1117
  %v1119 = vpop.f32.mrb[0].mxu0
  %v1120 = vpop.f32.mrb[0].mxu0
  %v1121 = vpop.f32.mrb[0].mxu0
  %1122 = vdwg.mxu0
  %1126 = vrot.lane.b32.xlu0 %v1110, 16
  %v1127 = vpop.permute.xlu0 %1126
  %1128 = vrot.lane.b32.xlu0 %v1113, 16
  %v1129 = vpop.permute.xlu0 %1128
  %1130 = vrot.lane.b32.xlu0 %v1118, 16
  %v1131 = vpop.permute.xlu0 %1130
  %vm1135 = vcmask 195712
  %1136 = vst.msk [vmem:[#allocation3] sm:$0xff] %vm1135, %v1127
  %1137 = vst.msk [vmem:[#allocation3 + $0x8] sm:$0xff] %vm1135, %v1129
  %vm1138 = vcmask 189568
  %1139 = vst.msk [vmem:[#allocation3 + $0x10] sm:$0x3] %vm1138, %v1131
  %v1140 = vld [vmem:[#allocation2] sm:$0xff]
  %v1141 = vld [vmem:[#allocation2 + $0x8] sm:$0xff]
  %v1142 = vld [vmem:[#allocation2 + $0x10] sm:$0x3]
  %v1143 = vpack.c.bf16 %v1141, %v1140
  %v1144 = vpack.c.bf16 %v1142, %v1142
  %1147 = vrot.lane.b32.xlu0 %v1143, 104
  %v1148 = vpop.permute.xlu0 %1147
  %1149 = vrot.lane.b32.xlu0 %v1144, 104
  %v1150 = vpop.permute.xlu0 %1149
  %1151 = vrot.lane.b32.xlu0 %v1143, 72
  %v1152 = vpop.permute.xlu0 %1151
  %1153 = vrot.lane.b32.xlu0 %v1144, 72
  %v1154 = vpop.permute.xlu0 %1153
  %v1156 = vsel %vm597, %v1148, 0
  %v1159 = vsel %vm597, %v1150, 0
  %v1162 = vsel %vm597, %v1152, 0
  %v1165 = vsel %vm597, %v1154, 0
  %1167 = vmatprep.subr.bf16.mxu0 0
  %1168 = vmatpush1.bf16.xpose.msra.mxu0 %v1162
  %1169 = vmatprep.subr.bf16.mxu0 0
  %1170 = vmatpush1.bf16.xpose.msra.mxu0 %v1165
  %1171 = vmatprep.subr.bf16.mxu0 0
  %1172 = vmatpush1.bf16.xpose.msra.mxu0 0
  %1173 = vmatprep.subr.bf16.mxu0 0
  %1174 = vmatpush1.bf16.xpose.msra.mxu0 0
  %1175 = vmatprep.subr.bf16.mxu0 0
  %1176 = vmatpush1.bf16.xpose.msra.mxu0 0
  %1177 = vmatprep.subr.bf16.mxu0 0
  %1178 = vmatpush1.bf16.xpose.msra.mxu0 0
  %1179 = vmatprep.subr.bf16.mxu0 0
  %1180 = vmatpush1.bf16.xpose.msra.mxu0 0
  %1181 = vmatprep.subr.bf16.mxu0 0
  %1182 = vmatpush1.bf16.xpose.msra.mxu0 0
  %1183 = vmatprep.subr.bf16.mxu0 0
  %1184 = vmatpush1.bf16.xpose.msra.mxu0 0
  %1185 = vmatprep.subr.bf16.mxu0 0
  %1186 = vmatpush1.bf16.xpose.msra.mxu0 0
  %1187 = vmatprep.subr.bf16.mxu0 0
  %1188 = vmatpush1.bf16.xpose.msra.mxu0 0
  %1189 = vmatprep.subr.bf16.mxu0 0
  %1190 = vmatpush1.bf16.xpose.msra.mxu0 0
  %1191 = vmatprep.subr.bf16.mxu0 0
  %1192 = vmatpush1.bf16.xpose.msra.mxu0 0
  %1193 = vmatprep.subr.bf16.mxu0 0
  %1194 = vmatpush1.bf16.xpose.msra.mxu0 0
  %1195 = vmatprep.subr.bf16.mxu0 0
  %1196 = vmatpush1.bf16.xpose.msra.mxu0 0
  %1197 = vmatprep.subr.bf16.mxu0 0
  %1198 = vmatpush1.bf16.xpose.msra.mxu0 0
  %1199 = vmatprep.mubr.bf16.mxu0 0
  %1200 = vmatmul.mubr.bf16.gmra.mrb[0].mxu0 %v1156
  %v1201 = vpop.f32.mrb[0].mxu0
  %v1202 = vadd.f32 %v505, %v1201
  %v1203 = vpop.f32.mrb[0].mxu0
  %v1204 = vpop.f32.mrb[0].mxu0
  %v1205 = vadd.f32 %v506, %v1204
  %v1206 = vpop.f32.mrb[0].mxu0
  %1207 = vmatprep.mubr.bf16.mxu0 0
  %1208 = vmatmul.mubr.bf16.gmra.mrb[0].mxu0 %v1159
  %v1209 = vpop.f32.mrb[0].mxu0
  %v1210 = vadd.f32 %v507, %v1209
  %v1211 = vpop.f32.mrb[0].mxu0
  %v1212 = vpop.f32.mrb[0].mxu0
  %v1213 = vpop.f32.mrb[0].mxu0
  %1214 = vdwg.mxu0
  %v1215 = vsel %vm658, %v1202, -inf
  %1216 = vmax.xlane.f32.xlu0 %v1215
  %v1217 = vpop.xlane.xlu0 %1216
  %v1218 = vsel %vm658, %v1205, -inf
  %1219 = vmax.xlane.f32.xlu0 %v1218
  %v1220 = vpop.xlane.xlu0 %1219
  %v1221 = vsel %vm665, %v1210, -inf
  %1222 = vmax.xlane.f32.xlu0 %v1221
  %v1223 = vpop.xlane.xlu0 %1222
  %v1224 = vsub.f32 %v1202, %v1217
  %v1225 = vsub.f32 %v1205, %v1220
  %v1226 = vsub.f32 %v1210, %v1223
  %v1227 = vmul.f32 %v1224, 1.442695
  %v1228 = vpow.pop %v1227
  %v1229 = vmul.f32 %v1225, 1.442695
  %v1230 = vpow.pop %v1229
  %v1231 = vmul.f32 %v1226, 1.442695
  %v1232 = vpow.pop %v1231
  %v1233 = vsel %vm658, %v1228, 0.0
  %1234 = vadd.xlane.f32.xlu0 %v1233
  %v1235 = vpop.xlane.xlu0 %1234
  %v1236 = vsel %vm658, %v1230, 0.0
  %1237 = vadd.xlane.f32.xlu0 %v1236
  %v1238 = vpop.xlane.xlu0 %1237
  %v1239 = vsel %vm665, %v1232, 0.0
  %1240 = vadd.xlane.f32.xlu0 %v1239
  %v1241 = vpop.xlane.xlu0 %1240
  %v1242 = vrcp.pop %v1235
  %v1243 = vmul.f32 %v1228, %v1242
  %v1244 = vrcp.pop %v1238
  %v1245 = vmul.f32 %v1230, %v1244
  %v1246 = vrcp.pop %v1241
  %v1247 = vmul.f32 %v1232, %v1246
  %v1248 = vpack.c.bf16 %v1245, %v1243
  %v1249 = vpack.c.bf16 %v1247, %v1247
  %1250 = vrot.lane.b32.xlu0 %v1143, 40
  %v1251 = vpop.permute.xlu0 %1250
  %1252 = vrot.lane.b32.xlu0 %v1144, 40
  %v1253 = vpop.permute.xlu0 %1252
  %v1256 = vsel %vm658, %v1248, 0
  %v1259 = vsel %vm658, %v1249, 0
  %v1262 = vsel %vm706, %v1253, 0
  %1264 = vmatprep.subr.bf16.mxu0 0
  %1265 = vmatpush1.bf16.msra.mxu0 %v1251
  %1266 = vmatprep.subr.bf16.mxu0 0
  %1267 = vmatpush1.bf16.msra.mxu0 %v1262
  %1268 = vmatprep.subr.bf16.mxu0 0
  %1269 = vmatpush1.bf16.msra.mxu0 0
  %1270 = vmatprep.subr.bf16.mxu0 0
  %1271 = vmatpush1.bf16.msra.mxu0 0
  %1272 = vmatprep.subr.bf16.mxu0 0
  %1273 = vmatpush1.bf16.msra.mxu0 0
  %1274 = vmatprep.subr.bf16.mxu0 0
  %1275 = vmatpush1.bf16.msra.mxu0 0
  %1276 = vmatprep.subr.bf16.mxu0 0
  %1277 = vmatpush1.bf16.msra.mxu0 0
  %1278 = vmatprep.subr.bf16.mxu0 0
  %1279 = vmatpush1.bf16.msra.mxu0 0
  %1280 = vmatprep.subr.bf16.mxu0 0
  %1281 = vmatpush1.bf16.msra.mxu0 0
  %1282 = vmatprep.subr.bf16.mxu0 0
  %1283 = vmatpush1.bf16.msra.mxu0 0
  %1284 = vmatprep.subr.bf16.mxu0 0
  %1285 = vmatpush1.bf16.msra.mxu0 0
  %1286 = vmatprep.subr.bf16.mxu0 0
  %1287 = vmatpush1.bf16.msra.mxu0 0
  %1288 = vmatprep.subr.bf16.mxu0 0
  %1289 = vmatpush1.bf16.msra.mxu0 0
  %1290 = vmatprep.subr.bf16.mxu0 0
  %1291 = vmatpush1.bf16.msra.mxu0 0
  %1292 = vmatprep.subr.bf16.mxu0 0
  %1293 = vmatpush1.bf16.msra.mxu0 0
  %1294 = vmatprep.subr.bf16.mxu0 0
  %1295 = vmatpush1.bf16.msra.mxu0 0
  %1296 = vmatprep.mubr.bf16.mxu0 0
  %1297 = vmatmul.mubr.bf16.gmra.mrb[0].mxu0 %v1256
  %v1298 = vpop.f32.mrb[0].mxu0
  %v1299 = vadd.f32 0.0, %v1298
  %v1300 = vpop.f32.mrb[0].mxu0
  %v1301 = vpop.f32.mrb[0].mxu0
  %v1302 = vadd.f32 0.0, %v1301
  %v1303 = vpop.f32.mrb[0].mxu0
  %1304 = vmatprep.mubr.bf16.mxu0 0
  %1305 = vmatmul.mubr.bf16.gmra.mrb[0].mxu0 %v1259
  %v1306 = vpop.f32.mrb[0].mxu0
  %v1307 = vadd.f32 0.0, %v1306
  %v1308 = vpop.f32.mrb[0].mxu0
  %v1309 = vpop.f32.mrb[0].mxu0
  %v1310 = vpop.f32.mrb[0].mxu0
  %1311 = vdwg.mxu0
  %1315 = vrot.lane.b32.xlu0 %v1299, 24
  %v1316 = vpop.permute.xlu0 %1315
  %1317 = vrot.lane.b32.xlu0 %v1302, 24
  %v1318 = vpop.permute.xlu0 %1317
  %1319 = vrot.lane.b32.xlu0 %v1307, 24
  %v1320 = vpop.permute.xlu0 %1319
  %vm1324 = vcmask 261312
  %1325 = vst.msk [vmem:[#allocation3] sm:$0xff] %vm1324, %v1316
  %1326 = vst.msk [vmem:[#allocation3 + $0x8] sm:$0xff] %vm1324, %v1318
  %vm1327 = vcmask 255168
  %1328 = vst.msk [vmem:[#allocation3 + $0x10] sm:$0x3] %vm1327, %v1320
  %v1329 = vld [vmem:[#allocation3] sm:$0xff]
  %v1330 = vld [vmem:[#allocation3 + $0x8] sm:$0xff]
  %v1331 = vld [vmem:[#allocation3 + $0x10] sm:$0x3]
  %v1332 = vld [vmem:[%s10] sm:$0xf]
  %v1333 = vld [vmem:[%s10 + $0x4] sm:$0xf]
  %v1334 = vld [vmem:[%s10 + $0x8] sm:$0xf]
  %v1335 = vld [vmem:[%s10 + $0xc] sm:$0xf]
  %v1336 = vpack.c.bf16 %v1330, %v1329
  %v1337 = vpack.c.bf16 %v1331, %v1331
  %v1338 = vld [vmem:[%s14 + $0x6] ss:$0 sm:$0xff]
  %v1343 = vunpack.c.l.b16 %v1332
  %v1344 = vunpack.c.l.b16 %v1333
  %v1345 = vunpack.c.l.b16 %v1334
  %v1346 = vunpack.c.l.b16 %v1335
  %v1347 = vpack.c.b16 %v1344, %v1343
  %v1348 = vpack.c.b16 %v1346, %v1345
  %v1352 = vsel %vm493, %v1336, 0
  %v1355 = vsel %vm493, %v1337, 0
  %1357 = vmatprep.subr.bf16.mxu0 0
  %1358 = vmatpush1.bf16.msra.mxu0 %v1347
  %1359 = vmatprep.subr.bf16.mxu0 0
  %1360 = vmatpush1.bf16.msra.mxu0 %v1348
  %1361 = vmatprep.subr.bf16.mxu0 0
  %1362 = vmatpush1.bf16.msra.mxu0 0
  %1363 = vmatprep.subr.bf16.mxu0 0
  %1364 = vmatpush1.bf16.msra.mxu0 0
  %1365 = vmatprep.subr.bf16.mxu0 0
  %1366 = vmatpush1.bf16.msra.mxu0 0
  %1367 = vmatprep.subr.bf16.mxu0 0
  %1368 = vmatpush1.bf16.msra.mxu0 0
  %1369 = vmatprep.subr.bf16.mxu0 0
  %1370 = vmatpush1.bf16.msra.mxu0 0
  %1371 = vmatprep.subr.bf16.mxu0 0
  %1372 = vmatpush1.bf16.msra.mxu0 0
  %1373 = vmatprep.subr.bf16.mxu0 0
  %1374 = vmatpush1.bf16.msra.mxu0 0
  %1375 = vmatprep.subr.bf16.mxu0 0
  %1376 = vmatpush1.bf16.msra.mxu0 0
  %1377 = vmatprep.subr.bf16.mxu0 0
  %1378 = vmatpush1.bf16.msra.mxu0 0
  %1379 = vmatprep.subr.bf16.mxu0 0
  %1380 = vmatpush1.bf16.msra.mxu0 0
  %1381 = vmatprep.subr.bf16.mxu0 0
  %1382 = vmatpush1.bf16.msra.mxu0 0
  %1383 = vmatprep.subr.bf16.mxu0 0
  %1384 = vmatpush1.bf16.msra.mxu0 0
  %1385 = vmatprep.subr.bf16.mxu0 0
  %1386 = vmatpush1.bf16.msra.mxu0 0
  %1387 = vmatprep.subr.bf16.mxu0 0
  %1388 = vmatpush1.bf16.msra.mxu0 0
  %1389 = vmatprep.mubr.bf16.mxu0 0
  %1390 = vmatmul.mubr.bf16.gmra.mrb[0].mxu0 %v1352
  %v1391 = vpop.f32.mrb[0].mxu0
  %v1392 = vadd.f32 %v1338, %v1391
  %v1393 = vpop.f32.mrb[0].mxu0
  %v1394 = vpop.f32.mrb[0].mxu0
  %v1395 = vadd.f32 %v1338, %v1394
  %v1396 = vpop.f32.mrb[0].mxu0
  %1397 = vmatprep.mubr.bf16.mxu0 0
  %1398 = vmatmul.mubr.bf16.gmra.mrb[0].mxu0 %v1355
  %v1399 = vpop.f32.mrb[0].mxu0
  %v1400 = vadd.f32 %v1338, %v1399
  %v1401 = vpop.f32.mrb[0].mxu0
  %v1402 = vpop.f32.mrb[0].mxu0
  %v1403 = vpop.f32.mrb[0].mxu0
  %1404 = vdwg.mxu0
  %v1405 = vadd.f32 %v502, %v1392
  %v1406 = vadd.f32 %v503, %v1395
  %v1407 = vadd.f32 %v504, %v1400
  %v1408 = vld [vmem:[%s14 + $0x7] ss:$0 sm:$0xff]
  %v1409 = vld [vmem:[%s14 + $0x10] ss:$0 sm:$0xff]
  %v1410 = vsel %vm493, %v1405, 0.0
  %1411 = vadd.xlane.f32.xlu0 %v1410
  %v1412 = vpop.xlane.xlu0 %1411
  %v1413 = vsel %vm493, %v1406, 0.0
  %1414 = vadd.xlane.f32.xlu0 %v1413
  %v1415 = vpop.xlane.xlu0 %1414
  %v1416 = vsel %vm491, %v1407, 0.0
  %1417 = vadd.xlane.f32.xlu0 %v1416
  %v1418 = vpop.xlane.xlu0 %1417
  %v1419 = vrcp.pop 32.0
  %v1420 = vmul.f32 %v1412, %v1419
  %v1421 = vmul.f32 %v1415, %v1419
  %v1422 = vmul.f32 %v1418, %v1419
  %v1423 = vsub.f32 %v1405, %v1420
  %v1424 = vsub.f32 %v1406, %v1421
  %v1425 = vsub.f32 %v1407, %v1422
  %v1426 = vmul.f32 %v1423, %v1423
  %v1427 = vmul.f32 %v1424, %v1424
  %v1428 = vmul.f32 %v1425, %v1425
  %v1429 = vsel %vm493, %v1426, 0.0
  %1430 = vadd.xlane.f32.xlu0 %v1429
  %v1431 = vpop.xlane.xlu0 %1430
  %v1432 = vsel %vm493, %v1427, 0.0
  %1433 = vadd.xlane.f32.xlu0 %v1432
  %v1434 = vpop.xlane.xlu0 %1433
  %v1435 = vsel %vm491, %v1428, 0.0
  %1436 = vadd.xlane.f32.xlu0 %v1435
  %v1437 = vpop.xlane.xlu0 %1436
  %v1438 = vmul.f32 %v1431, %v1419
  %v1439 = vmul.f32 %v1434, %v1419
  %v1440 = vmul.f32 %v1437, %v1419
  %v1441 = vadd.f32 %v1438, 1e-05
  %v1442 = vadd.f32 %v1439, 1e-05
  %v1443 = vadd.f32 %v1440, 1e-05
  %v1444 = vrsqrt.pop %v1441
  %v1445 = vrsqrt.pop %v1442
  %v1446 = vrsqrt.pop %v1443
  %v1447 = vmul.f32 %v1423, %v1444
  %v1448 = vmul.f32 %v1424, %v1445
  %v1449 = vmul.f32 %v1425, %v1446
  %v1450 = vmul.f32 %v1447, %v1408
  %v1451 = vmul.f32 %v1448, %v1408
  %v1452 = vmul.f32 %v1449, %v1408
  %v1453 = vadd.f32 %v1450, %v1409
  %v1454 = vadd.f32 %v1451, %v1409
  %v1455 = vadd.f32 %v1452, %v1409
  %v1456 = vld [vmem:[%s11] sm:$0xf]
  %v1457 = vld [vmem:[%s11 + $0x4] sm:$0xf]
  %v1458 = vld [vmem:[%s11 + $0x8] sm:$0xf]
  %v1459 = vld [vmem:[%s11 + $0xc] sm:$0xf]
  %v1460 = vpack.c.bf16 %v1454, %v1453
  %v1461 = vpack.c.bf16 %v1455, %v1455
  %v1462 = vld [vmem:[%s14 + $0x11] ss:$0 sm:$0xff]
  %v1467 = vunpack.c.l.b16 %v1456
  %v1468 = vunpack.c.l.b16 %v1457
  %v1469 = vunpack.c.l.b16 %v1458
  %v1470 = vunpack.c.l.b16 %v1459
  %v1471 = vpack.c.b16 %v1468, %v1467
  %v1472 = vpack.c.b16 %v1470, %v1469
  %v1476 = vsel %vm493, %v1460, 0
  %v1479 = vsel %vm493, %v1461, 0
  %1481 = vmatprep.subr.bf16.mxu0 0
  %1482 = vmatpush1.bf16.msra.mxu0 %v1471
  %1483 = vmatprep.subr.bf16.mxu0 0
  %1484 = vmatpush1.bf16.msra.mxu0 %v1472
  %1485 = vmatprep.subr.bf16.mxu0 0
  %1486 = vmatpush1.bf16.msra.mxu0 0
  %1487 = vmatprep.subr.bf16.mxu0 0
  %1488 = vmatpush1.bf16.msra.mxu0 0
  %1489 = vmatprep.subr.bf16.mxu0 0
  %1490 = vmatpush1.bf16.msra.mxu0 0
  %1491 = vmatprep.subr.bf16.mxu0 0
  %1492 = vmatpush1.bf16.msra.mxu0 0
  %1493 = vmatprep.subr.bf16.mxu0 0
  %1494 = vmatpush1.bf16.msra.mxu0 0
  %1495 = vmatprep.subr.bf16.mxu0 0
  %1496 = vmatpush1.bf16.msra.mxu0 0
  %1497 = vmatprep.subr.bf16.mxu0 0
  %1498 = vmatpush1.bf16.msra.mxu0 0
  %1499 = vmatprep.subr.bf16.mxu0 0
  %1500 = vmatpush1.bf16.msra.mxu0 0
  %1501 = vmatprep.subr.bf16.mxu0 0
  %1502 = vmatpush1.bf16.msra.mxu0 0
  %1503 = vmatprep.subr.bf16.mxu0 0
  %1504 = vmatpush1.bf16.msra.mxu0 0
  %1505 = vmatprep.subr.bf16.mxu0 0
  %1506 = vmatpush1.bf16.msra.mxu0 0
  %1507 = vmatprep.subr.bf16.mxu0 0
  %1508 = vmatpush1.bf16.msra.mxu0 0
  %1509 = vmatprep.subr.bf16.mxu0 0
  %1510 = vmatpush1.bf16.msra.mxu0 0
  %1511 = vmatprep.subr.bf16.mxu0 0
  %1512 = vmatpush1.bf16.msra.mxu0 0
  %1513 = vmatprep.mubr.bf16.mxu0 0
  %1514 = vmatmul.mubr.bf16.gmra.mrb[0].mxu0 %v1476
  %v1515 = vpop.f32.mrb[0].mxu0
  %v1516 = vadd.f32 %v1462, %v1515
  %v1517 = vpop.f32.mrb[0].mxu0
  %v1518 = vpop.f32.mrb[0].mxu0
  %v1519 = vadd.f32 %v1462, %v1518
  %v1520 = vpop.f32.mrb[0].mxu0
  %1521 = vmatprep.mubr.bf16.mxu0 0
  %1522 = vmatmul.mubr.bf16.gmra.mrb[0].mxu0 %v1479
  %v1523 = vpop.f32.mrb[0].mxu0
  %v1524 = vadd.f32 %v1462, %v1523
  %v1525 = vpop.f32.mrb[0].mxu0
  %v1526 = vpop.f32.mrb[0].mxu0
  %v1527 = vpop.f32.mrb[0].mxu0
  %1528 = vdwg.mxu0
  %v1529 = vmax.f32 %v1516, 0.0
  %v1530 = vmax.f32 %v1519, 0.0
  %v1531 = vmax.f32 %v1524, 0.0
  %v1532 = vld [vmem:[%s12] sm:$0xf]
  %v1533 = vld [vmem:[%s12 + $0x4] sm:$0xf]
  %v1534 = vld [vmem:[%s12 + $0x8] sm:$0xf]
  %v1535 = vld [vmem:[%s12 + $0xc] sm:$0xf]
  %v1536 = vld [vmem:[%s12 + $0x10] sm:$0xf]
  %v1537 = vld [vmem:[%s12 + $0x14] sm:$0xf]
  %v1538 = vld [vmem:[%s12 + $0x18] sm:$0xf]
  %v1539 = vld [vmem:[%s12 + $0x1c] sm:$0xf]
  %v1540 = vld [vmem:[%s12 + $0x20] sm:$0xf]
  %v1541 = vld [vmem:[%s12 + $0x24] sm:$0xf]
  %v1542 = vld [vmem:[%s12 + $0x28] sm:$0xf]
  %v1543 = vld [vmem:[%s12 + $0x2c] sm:$0xf]
  %v1544 = vld [vmem:[%s12 + $0x30] sm:$0xf]
  %v1545 = vld [vmem:[%s12 + $0x34] sm:$0xf]
  %v1546 = vld [vmem:[%s12 + $0x38] sm:$0xf]
  %v1547 = vld [vmem:[%s12 + $0x3c] sm:$0xf]
  %v1548 = vpack.c.bf16 %v1530, %v1529
  %v1549 = vpack.c.bf16 %v1531, %v1531
  %v1550 = vld [vmem:[%s14 + $0x12] ss:$0 sm:$0xff]
  %v1567 = vunpack.c.l.b16 %v1532
  %v1568 = vunpack.c.l.b16 %v1533
  %v1569 = vunpack.c.l.b16 %v1534
  %v1570 = vunpack.c.l.b16 %v1535
  %v1571 = vunpack.c.l.b16 %v1536
  %v1572 = vunpack.c.l.b16 %v1537
  %v1573 = vunpack.c.l.b16 %v1538
  %v1574 = vunpack.c.l.b16 %v1539
  %v1575 = vunpack.c.l.b16 %v1540
  %v1576 = vunpack.c.l.b16 %v1541
  %v1577 = vunpack.c.l.b16 %v1542
  %v1578 = vunpack.c.l.b16 %v1543
  %v1579 = vunpack.c.l.b16 %v1544
  %v1580 = vunpack.c.l.b16 %v1545
  %v1581 = vunpack.c.l.b16 %v1546
  %v1582 = vunpack.c.l.b16 %v1547
  %v1583 = vpack.c.b16 %v1568, %v1567
  %v1584 = vpack.c.b16 %v1570, %v1569
  %v1585 = vpack.c.b16 %v1572, %v1571
  %v1586 = vpack.c.b16 %v1574, %v1573
  %v1587 = vpack.c.b16 %v1576, %v1575
  %v1588 = vpack.c.b16 %v1578, %v1577
  %v1589 = vpack.c.b16 %v1580, %v1579
  %v1590 = vpack.c.b16 %v1582, %v1581
  %1599 = vmatprep.subr.bf16.mxu0 0
  %1600 = vmatpush1.bf16.msra.mxu0 %v1583
  %1601 = vmatprep.subr.bf16.mxu0 0
  %1602 = vmatpush1.bf16.msra.mxu0 %v1584
  %1603 = vmatprep.subr.bf16.mxu0 0
  %1604 = vmatpush1.bf16.msra.mxu0 %v1585
  %1605 = vmatprep.subr.bf16.mxu0 0
  %1606 = vmatpush1.bf16.msra.mxu0 %v1586
  %1607 = vmatprep.subr.bf16.mxu0 0
  %1608 = vmatpush1.bf16.msra.mxu0 %v1587
  %1609 = vmatprep.subr.bf16.mxu0 0
  %1610 = vmatpush1.bf16.msra.mxu0 %v1588
  %1611 = vmatprep.subr.bf16.mxu0 0
  %1612 = vmatpush1.bf16.msra.mxu0 %v1589
  %1613 = vmatprep.subr.bf16.mxu0 0
  %1614 = vmatpush1.bf16.msra.mxu0 %v1590
  %1615 = vmatprep.subr.bf16.mxu0 0
  %1616 = vmatpush1.bf16.msra.mxu0 0
  %1617 = vmatprep.subr.bf16.mxu0 0
  %1618 = vmatpush1.bf16.msra.mxu0 0
  %1619 = vmatprep.subr.bf16.mxu0 0
  %1620 = vmatpush1.bf16.msra.mxu0 0
  %1621 = vmatprep.subr.bf16.mxu0 0
  %1622 = vmatpush1.bf16.msra.mxu0 0
  %1623 = vmatprep.subr.bf16.mxu0 0
  %1624 = vmatpush1.bf16.msra.mxu0 0
  %1625 = vmatprep.subr.bf16.mxu0 0
  %1626 = vmatpush1.bf16.msra.mxu0 0
  %1627 = vmatprep.subr.bf16.mxu0 0
  %1628 = vmatpush1.bf16.msra.mxu0 0
  %1629 = vmatprep.subr.bf16.mxu0 0
  %1630 = vmatpush1.bf16.msra.mxu0 0
  %1631 = vmatprep.mubr.bf16.mxu0 0
  %1632 = vmatmul.mubr.bf16.gmra.mrb[0].mxu0 %v1548
  %v1633 = vpop.f32.mrb[0].mxu0
  %v1634 = vadd.f32 %v1550, %v1633
  %v1635 = vpop.f32.mrb[0].mxu0
  %v1636 = vpop.f32.mrb[0].mxu0
  %v1637 = vadd.f32 %v1550, %v1636
  %v1638 = vpop.f32.mrb[0].mxu0
  %1639 = vmatprep.mubr.bf16.mxu0 0
  %1640 = vmatmul.mubr.bf16.gmra.mrb[0].mxu0 %v1549
  %v1641 = vpop.f32.mrb[0].mxu0
  %v1642 = vadd.f32 %v1550, %v1641
  %v1643 = vpop.f32.mrb[0].mxu0
  %v1644 = vpop.f32.mrb[0].mxu0
  %v1645 = vpop.f32.mrb[0].mxu0
  %1646 = vdwg.mxu0
  %v1647 = vadd.f32 %v1453, %v1634
  %v1648 = vadd.f32 %v1454, %v1637
  %v1649 = vadd.f32 %v1455, %v1642
  %v1650 = vld [vmem:[%s14 + $0x13] ss:$0 sm:$0xff]
  %v1651 = vld [vmem:[%s14 + $0x14] ss:$0 sm:$0xff]
  %v1652 = vsel %vm493, %v1647, 0.0
  %1653 = vadd.xlane.f32.xlu0 %v1652
  %v1654 = vpop.xlane.xlu0 %1653
  %v1655 = vsel %vm493, %v1648, 0.0
  %1656 = vadd.xlane.f32.xlu0 %v1655
  %v1657 = vpop.xlane.xlu0 %1656
  %v1658 = vsel %vm491, %v1649, 0.0
  %1659 = vadd.xlane.f32.xlu0 %v1658
  %v1660 = vpop.xlane.xlu0 %1659
  %v1661 = vmul.f32 %v1654, %v1419
  %v1662 = vmul.f32 %v1657, %v1419
  %v1663 = vmul.f32 %v1660, %v1419
  %v1664 = vsub.f32 %v1647, %v1661
  %v1665 = vsub.f32 %v1648, %v1662
  %v1666 = vsub.f32 %v1649, %v1663
  %v1667 = vmul.f32 %v1664, %v1664
  %v1668 = vmul.f32 %v1665, %v1665
  %v1669 = vmul.f32 %v1666, %v1666
  %v1670 = vsel %vm493, %v1667, 0.0
  %1671 = vadd.xlane.f32.xlu0 %v1670
  %v1672 = vpop.xlane.xlu0 %1671
  %v1673 = vsel %vm493, %v1668, 0.0
  %1674 = vadd.xlane.f32.xlu0 %v1673
  %v1675 = vpop.xlane.xlu0 %1674
  %v1676 = vsel %vm491, %v1669, 0.0
  %1677 = vadd.xlane.f32.xlu0 %v1676
  %v1678 = vpop.xlane.xlu0 %1677
  %v1679 = vmul.f32 %v1672, %v1419
  %v1680 = vmul.f32 %v1675, %v1419
  %v1681 = vmul.f32 %v1678, %v1419
  %v1682 = vadd.f32 %v1679, 1e-05
  %v1683 = vadd.f32 %v1680, 1e-05
  %v1684 = vadd.f32 %v1681, 1e-05
  %v1685 = vrsqrt.pop %v1682
  %v1686 = vrsqrt.pop %v1683
  %v1687 = vrsqrt.pop %v1684
  %v1688 = vmul.f32 %v1664, %v1685
  %v1689 = vmul.f32 %v1665, %v1686
  %v1690 = vmul.f32 %v1666, %v1687
  %v1691 = vmul.f32 %v1688, %v1650
  %v1692 = vmul.f32 %v1689, %v1650
  %v1693 = vmul.f32 %v1690, %v1650
  %v1694 = vadd.f32 %v1691, %v1651
  %v1695 = vadd.f32 %v1692, %v1651
  %v1696 = vadd.f32 %v1693, %v1651
  %s1697 = scalar_lea.vmem %s9, 16
  %v1698 = vld [vmem:[%s1697] sm:$0xf]
  %v1699 = vld [vmem:[%s1697 + $0x4] sm:$0xf]
  %v1700 = vld [vmem:[%s1697 + $0x8] sm:$0xf]
  %v1701 = vld [vmem:[%s1697 + $0xc] sm:$0xf]
  %v1702 = vpack.c.bf16 %v1695, %v1694
  %v1703 = vpack.c.bf16 %v1696, %v1696
  %v1704 = vld [vmem:[%s14 + $0x15] ss:$0 sm:$0xff]
  %v1709 = vunpack.c.l.b16 %v1698
  %v1710 = vunpack.c.l.b16 %v1699
  %v1711 = vunpack.c.l.b16 %v1700
  %v1712 = vunpack.c.l.b16 %v1701
  %v1713 = vpack.c.b16 %v1710, %v1709
  %v1714 = vpack.c.b16 %v1712, %v1711
  %v1718 = vsel %vm493, %v1702, 0
  %v1721 = vsel %vm493, %v1703, 0
  %1723 = vmatprep.subr.bf16.mxu0 0
  %1724 = vmatpush1.bf16.msra.mxu0 %v1713
  %1725 = vmatprep.subr.bf16.mxu0 0
  %1726 = vmatpush1.bf16.msra.mxu0 %v1714
  %1727 = vmatprep.subr.bf16.mxu0 0
  %1728 = vmatpush1.bf16.msra.mxu0 0
  %1729 = vmatprep.subr.bf16.mxu0 0
  %1730 = vmatpush1.bf16.msra.mxu0 0
  %1731 = vmatprep.subr.bf16.mxu0 0
  %1732 = vmatpush1.bf16.msra.mxu0 0
  %1733 = vmatprep.subr.bf16.mxu0 0
  %1734 = vmatpush1.bf16.msra.mxu0 0
  %1735 = vmatprep.subr.bf16.mxu0 0
  %1736 = vmatpush1.bf16.msra.mxu0 0
  %1737 = vmatprep.subr.bf16.mxu0 0
  %1738 = vmatpush1.bf16.msra.mxu0 0
  %1739 = vmatprep.subr.bf16.mxu0 0
  %1740 = vmatpush1.bf16.msra.mxu0 0
  %1741 = vmatprep.subr.bf16.mxu0 0
  %1742 = vmatpush1.bf16.msra.mxu0 0
  %1743 = vmatprep.subr.bf16.mxu0 0
  %1744 = vmatpush1.bf16.msra.mxu0 0
  %1745 = vmatprep.subr.bf16.mxu0 0
  %1746 = vmatpush1.bf16.msra.mxu0 0
  %1747 = vmatprep.subr.bf16.mxu0 0
  %1748 = vmatpush1.bf16.msra.mxu0 0
  %1749 = vmatprep.subr.bf16.mxu0 0
  %1750 = vmatpush1.bf16.msra.mxu0 0
  %1751 = vmatprep.subr.bf16.mxu0 0
  %1752 = vmatpush1.bf16.msra.mxu0 0
  %1753 = vmatprep.subr.bf16.mxu0 0
  %1754 = vmatpush1.bf16.msra.mxu0 0
  %1755 = vmatprep.mubr.bf16.mxu0 0
  %1756 = vmatmul.mubr.bf16.gmra.mrb[0].mxu0 %v1718
  %v1757 = vpop.f32.mrb[0].mxu0
  %v1758 = vadd.f32 %v1704, %v1757
  %v1759 = vpop.f32.mrb[0].mxu0
  %v1760 = vpop.f32.mrb[0].mxu0
  %v1761 = vadd.f32 %v1704, %v1760
  %v1762 = vpop.f32.mrb[0].mxu0
  %1763 = vmatprep.mubr.bf16.mxu0 0
  %1764 = vmatmul.mubr.bf16.gmra.mrb[0].mxu0 %v1721
  %v1765 = vpop.f32.mrb[0].mxu0
  %v1766 = vadd.f32 %v1704, %v1765
  %v1767 = vpop.f32.mrb[0].mxu0
  %v1768 = vpop.f32.mrb[0].mxu0
  %v1769 = vpop.f32.mrb[0].mxu0
  %1770 = vdwg.mxu0
  %1771 = vst.msk [vmem:[#allocation2] sm:$0xff] %vm581, %v1758
  %1772 = vst.msk [vmem:[#allocation2 + $0x8] sm:$0xff] %vm581, %v1761
  %1773 = vst.msk [vmem:[#allocation2 + $0x10] sm:$0x3] %vm584, %v1766
  %v1774 = vld [vmem:[#allocation2] sm:$0xff]
  %v1775 = vld [vmem:[#allocation2 + $0x8] sm:$0xff]
  %v1776 = vld [vmem:[#allocation2 + $0x10] sm:$0x3]
  %v1777 = vpack.c.bf16 %v1775, %v1774
  %v1778 = vpack.c.bf16 %v1776, %v1776
  %1781 = vrot.lane.b32.xlu0 %v1777, 96
  %v1782 = vpop.permute.xlu0 %1781
  %1783 = vrot.lane.b32.xlu0 %v1778, 96
  %v1784 = vpop.permute.xlu0 %1783
  %v1786 = vsel %vm597, %v1777, 0
  %v1789 = vsel %vm597, %v1778, 0
  %v1792 = vsel %vm597, %v1782, 0
  %v1795 = vsel %vm597, %v1784, 0
  %1797 = vmatprep.subr.bf16.mxu0 0
  %1798 = vmatpush1.bf16.xpose.msra.mxu0 %v1792
  %1799 = vmatprep.subr.bf16.mxu0 0
  %1800 = vmatpush1.bf16.xpose.msra.mxu0 %v1795
  %1801 = vmatprep.subr.bf16.mxu0 0
  %1802 = vmatpush1.bf16.xpose.msra.mxu0 0
  %1803 = vmatprep.subr.bf16.mxu0 0
  %1804 = vmatpush1.bf16.xpose.msra.mxu0 0
  %1805 = vmatprep.subr.bf16.mxu0 0
  %1806 = vmatpush1.bf16.xpose.msra.mxu0 0
  %1807 = vmatprep.subr.bf16.mxu0 0
  %1808 = vmatpush1.bf16.xpose.msra.mxu0 0
  %1809 = vmatprep.subr.bf16.mxu0 0
  %1810 = vmatpush1.bf16.xpose.msra.mxu0 0
  %1811 = vmatprep.subr.bf16.mxu0 0
  %1812 = vmatpush1.bf16.xpose.msra.mxu0 0
  %1813 = vmatprep.subr.bf16.mxu0 0
  %1814 = vmatpush1.bf16.xpose.msra.mxu0 0
  %1815 = vmatprep.subr.bf16.mxu0 0
  %1816 = vmatpush1.bf16.xpose.msra.mxu0 0
  %1817 = vmatprep.subr.bf16.mxu0 0
  %1818 = vmatpush1.bf16.xpose.msra.mxu0 0
  %1819 = vmatprep.subr.bf16.mxu0 0
  %1820 = vmatpush1.bf16.xpose.msra.mxu0 0
  %1821 = vmatprep.subr.bf16.mxu0 0
  %1822 = vmatpush1.bf16.xpose.msra.mxu0 0
  %1823 = vmatprep.subr.bf16.mxu0 0
  %1824 = vmatpush1.bf16.xpose.msra.mxu0 0
  %1825 = vmatprep.subr.bf16.mxu0 0
  %1826 = vmatpush1.bf16.xpose.msra.mxu0 0
  %1827 = vmatprep.subr.bf16.mxu0 0
  %1828 = vmatpush1.bf16.xpose.msra.mxu0 0
  %1829 = vmatprep.mubr.bf16.mxu0 0
  %1830 = vmatmul.mubr.bf16.gmra.mrb[0].mxu0 %v1786
  %v1831 = vpop.f32.mrb[0].mxu0
  %v1832 = vadd.f32 %v505, %v1831
  %v1833 = vpop.f32.mrb[0].mxu0
  %v1834 = vpop.f32.mrb[0].mxu0
  %v1835 = vadd.f32 %v506, %v1834
  %v1836 = vpop.f32.mrb[0].mxu0
  %1837 = vmatprep.mubr.bf16.mxu0 0
  %1838 = vmatmul.mubr.bf16.gmra.mrb[0].mxu0 %v1789
  %v1839 = vpop.f32.mrb[0].mxu0
  %v1840 = vadd.f32 %v507, %v1839
  %v1841 = vpop.f32.mrb[0].mxu0
  %v1842 = vpop.f32.mrb[0].mxu0
  %v1843 = vpop.f32.mrb[0].mxu0
  %1844 = vdwg.mxu0
  %v1845 = vsel %vm658, %v1832, -inf
  %1846 = vmax.xlane.f32.xlu0 %v1845
  %v1847 = vpop.xlane.xlu0 %1846
  %v1848 = vsel %vm658, %v1835, -inf
  %1849 = vmax.xlane.f32.xlu0 %v1848
  %v1850 = vpop.xlane.xlu0 %1849
  %v1851 = vsel %vm665, %v1840, -inf
  %1852 = vmax.xlane.f32.xlu0 %v1851
  %v1853 = vpop.xlane.xlu0 %1852
  %v1854 = vsub.f32 %v1832, %v1847
  %v1855 = vsub.f32 %v1835, %v1850
  %v1856 = vsub.f32 %v1840, %v1853
  %v1857 = vmul.f32 %v1854, 1.442695
  %v1858 = vpow.pop %v1857
  %v1859 = vmul.f32 %v1855, 1.442695
  %v1860 = vpow.pop %v1859
  %v1861 = vmul.f32 %v1856, 1.442695
  %v1862 = vpow.pop %v1861
  %v1863 = vsel %vm658, %v1858, 0.0
  %1864 = vadd.xlane.f32.xlu0 %v1863
  %v1865 = vpop.xlane.xlu0 %1864
  %v1866 = vsel %vm658, %v1860, 0.0
  %1867 = vadd.xlane.f32.xlu0 %v1866
  %v1868 = vpop.xlane.xlu0 %1867
  %v1869 = vsel %vm665, %v1862, 0.0
  %1870 = vadd.xlane.f32.xlu0 %v1869
  %v1871 = vpop.xlane.xlu0 %1870
  %v1872 = vrcp.pop %v1865
  %v1873 = vmul.f32 %v1858, %v1872
  %v1874 = vrcp.pop %v1868
  %v1875 = vmul.f32 %v1860, %v1874
  %v1876 = vrcp.pop %v1871
  %v1877 = vmul.f32 %v1862, %v1876
  %v1878 = vpack.c.bf16 %v1875, %v1873
  %v1879 = vpack.c.bf16 %v1877, %v1877
  %1880 = vrot.lane.b32.xlu0 %v1777, 64
  %v1881 = vpop.permute.xlu0 %1880
  %1882 = vrot.lane.b32.xlu0 %v1778, 64
  %v1883 = vpop.permute.xlu0 %1882
  %v1886 = vsel %vm658, %v1878, 0
  %v1889 = vsel %vm658, %v1879, 0
  %v1892 = vsel %vm706, %v1883, 0
  %1894 = vmatprep.subr.bf16.mxu0 0
  %1895 = vmatpush1.bf16.msra.mxu0 %v1881
  %1896 = vmatprep.subr.bf16.mxu0 0
  %1897 = vmatpush1.bf16.msra.mxu0 %v1892
  %1898 = vmatprep.subr.bf16.mxu0 0
  %1899 = vmatpush1.bf16.msra.mxu0 0
  %1900 = vmatprep.subr.bf16.mxu0 0
  %1901 = vmatpush1.bf16.msra.mxu0 0
  %1902 = vmatprep.subr.bf16.mxu0 0
  %1903 = vmatpush1.bf16.msra.mxu0 0
  %1904 = vmatprep.subr.bf16.mxu0 0
  %1905 = vmatpush1.bf16.msra.mxu0 0
  %1906 = vmatprep.subr.bf16.mxu0 0
  %1907 = vmatpush1.bf16.msra.mxu0 0
  %1908 = vmatprep.subr.bf16.mxu0 0
  %1909 = vmatpush1.bf16.msra.mxu0 0
  %1910 = vmatprep.subr.bf16.mxu0 0
  %1911 = vmatpush1.bf16.msra.mxu0 0
  %1912 = vmatprep.subr.bf16.mxu0 0
  %1913 = vmatpush1.bf16.msra.mxu0 0
  %1914 = vmatprep.subr.bf16.mxu0 0
  %1915 = vmatpush1.bf16.msra.mxu0 0
  %1916 = vmatprep.subr.bf16.mxu0 0
  %1917 = vmatpush1.bf16.msra.mxu0 0
  %1918 = vmatprep.subr.bf16.mxu0 0
  %1919 = vmatpush1.bf16.msra.mxu0 0
  %1920 = vmatprep.subr.bf16.mxu0 0
  %1921 = vmatpush1.bf16.msra.mxu0 0
  %1922 = vmatprep.subr.bf16.mxu0 0
  %1923 = vmatpush1.bf16.msra.mxu0 0
  %1924 = vmatprep.subr.bf16.mxu0 0
  %1925 = vmatpush1.bf16.msra.mxu0 0
  %1926 = vmatprep.mubr.bf16.mxu0 0
  %1927 = vmatmul.mubr.bf16.gmra.mrb[0].mxu0 %v1886
  %v1928 = vpop.f32.mrb[0].mxu0
  %v1929 = vadd.f32 0.0, %v1928
  %v1930 = vpop.f32.mrb[0].mxu0
  %v1931 = vpop.f32.mrb[0].mxu0
  %v1932 = vadd.f32 0.0, %v1931
  %v1933 = vpop.f32.mrb[0].mxu0
  %1934 = vmatprep.mubr.bf16.mxu0 0
  %1935 = vmatmul.mubr.bf16.gmra.mrb[0].mxu0 %v1889
  %v1936 = vpop.f32.mrb[0].mxu0
  %v1937 = vadd.f32 0.0, %v1936
  %v1938 = vpop.f32.mrb[0].mxu0
  %v1939 = vpop.f32.mrb[0].mxu0
  %v1940 = vpop.f32.mrb[0].mxu0
  %1941 = vdwg.mxu0
  %1942 = vst.msk [vmem:[#allocation3] sm:$0xff] %vm597, %v1929
  %1943 = vst.msk [vmem:[#allocation3 + $0x8] sm:$0xff] %vm597, %v1932
  %1944 = vst.msk [vmem:[#allocation3 + $0x10] sm:$0x3] %vm760, %v1937
  %v1945 = vld [vmem:[#allocation2] sm:$0xff]
  %v1946 = vld [vmem:[#allocation2 + $0x8] sm:$0xff]
  %v1947 = vld [vmem:[#allocation2 + $0x10] sm:$0x3]
  %v1948 = vpack.c.bf16 %v1946, %v1945
  %v1949 = vpack.c.bf16 %v1947, %v1947
  %1952 = vrot.lane.b32.xlu0 %v1948, 120
  %v1953 = vpop.permute.xlu0 %1952
  %1954 = vrot.lane.b32.xlu0 %v1949, 120
  %v1955 = vpop.permute.xlu0 %1954
  %1956 = vrot.lane.b32.xlu0 %v1948, 88
  %v1957 = vpop.permute.xlu0 %1956
  %1958 = vrot.lane.b32.xlu0 %v1949, 88
  %v1959 = vpop.permute.xlu0 %1958
  %v1961 = vsel %vm597, %v1953, 0
  %v1964 = vsel %vm597, %v1955, 0
  %v1967 = vsel %vm597, %v1957, 0
  %v1970 = vsel %vm597, %v1959, 0
  %1972 = vmatprep.subr.bf16.mxu0 0
  %1973 = vmatpush1.bf16.xpose.msra.mxu0 %v1967
  %1974 = vmatprep.subr.bf16.mxu0 0
  %1975 = vmatpush1.bf16.xpose.msra.mxu0 %v1970
  %1976 = vmatprep.subr.bf16.mxu0 0
  %1977 = vmatpush1.bf16.xpose.msra.mxu0 0
  %1978 = vmatprep.subr.bf16.mxu0 0
  %1979 = vmatpush1.bf16.xpose.msra.mxu0 0
  %1980 = vmatprep.subr.bf16.mxu0 0
  %1981 = vmatpush1.bf16.xpose.msra.mxu0 0
  %1982 = vmatprep.subr.bf16.mxu0 0
  %1983 = vmatpush1.bf16.xpose.msra.mxu0 0
  %1984 = vmatprep.subr.bf16.mxu0 0
  %1985 = vmatpush1.bf16.xpose.msra.mxu0 0
  %1986 = vmatprep.subr.bf16.mxu0 0
  %1987 = vmatpush1.bf16.xpose.msra.mxu0 0
  %1988 = vmatprep.subr.bf16.mxu0 0
  %1989 = vmatpush1.bf16.xpose.msra.mxu0 0
  %1990 = vmatprep.subr.bf16.mxu0 0
  %1991 = vmatpush1.bf16.xpose.msra.mxu0 0
  %1992 = vmatprep.subr.bf16.mxu0 0
  %1993 = vmatpush1.bf16.xpose.msra.mxu0 0
  %1994 = vmatprep.subr.bf16.mxu0 0
  %1995 = vmatpush1.bf16.xpose.msra.mxu0 0
  %1996 = vmatprep.subr.bf16.mxu0 0
  %1997 = vmatpush1.bf16.xpose.msra.mxu0 0
  %1998 = vmatprep.subr.bf16.mxu0 0
  %1999 = vmatpush1.bf16.xpose.msra.mxu0 0
  %2000 = vmatprep.subr.bf16.mxu0 0
  %2001 = vmatpush1.bf16.xpose.msra.mxu0 0
  %2002 = vmatprep.subr.bf16.mxu0 0
  %2003 = vmatpush1.bf16.xpose.msra.mxu0 0
  %2004 = vmatprep.mubr.bf16.mxu0 0
  %2005 = vmatmul.mubr.bf16.gmra.mrb[0].mxu0 %v1961
  %v2006 = vpop.f32.mrb[0].mxu0
  %v2007 = vadd.f32 %v505, %v2006
  %v2008 = vpop.f32.mrb[0].mxu0
  %v2009 = vpop.f32.mrb[0].mxu0
  %v2010 = vadd.f32 %v506, %v2009
  %v2011 = vpop.f32.mrb[0].mxu0
  %2012 = vmatprep.mubr.bf16.mxu0 0
  %2013 = vmatmul.mubr.bf16.gmra.mrb[0].mxu0 %v1964
  %v2014 = vpop.f32.mrb[0].mxu0
  %v2015 = vadd.f32 %v507, %v2014
  %v2016 = vpop.f32.mrb[0].mxu0
  %v2017 = vpop.f32.mrb[0].mxu0
  %v2018 = vpop.f32.mrb[0].mxu0
  %2019 = vdwg.mxu0
  %v2020 = vsel %vm658, %v2007, -inf
  %2021 = vmax.xlane.f32.xlu0 %v2020
  %v2022 = vpop.xlane.xlu0 %2021
  %v2023 = vsel %vm658, %v2010, -inf
  %2024 = vmax.xlane.f32.xlu0 %v2023
  %v2025 = vpop.xlane.xlu0 %2024
  %v2026 = vsel %vm665, %v2015, -inf
  %2027 = vmax.xlane.f32.xlu0 %v2026
  %v2028 = vpop.xlane.xlu0 %2027
  %v2029 = vsub.f32 %v2007, %v2022
  %v2030 = vsub.f32 %v2010, %v2025
  %v2031 = vsub.f32 %v2015, %v2028
  %v2032 = vmul.f32 %v2029, 1.442695
  %v2033 = vpow.pop %v2032
  %v2034 = vmul.f32 %v2030, 1.442695
  %v2035 = vpow.pop %v2034
  %v2036 = vmul.f32 %v2031, 1.442695
  %v2037 = vpow.pop %v2036
  %v2038 = vsel %vm658, %v2033, 0.0
  %2039 = vadd.xlane.f32.xlu0 %v2038
  %v2040 = vpop.xlane.xlu0 %2039
  %v2041 = vsel %vm658, %v2035, 0.0
  %2042 = vadd.xlane.f32.xlu0 %v2041
  %v2043 = vpop.xlane.xlu0 %2042
  %v2044 = vsel %vm665, %v2037, 0.0
  %2045 = vadd.xlane.f32.xlu0 %v2044
  %v2046 = vpop.xlane.xlu0 %2045
  %v2047 = vrcp.pop %v2040
  %v2048 = vmul.f32 %v2033, %v2047
  %v2049 = vrcp.pop %v2043
  %v2050 = vmul.f32 %v2035, %v2049
  %v2051 = vrcp.pop %v2046
  %v2052 = vmul.f32 %v2037, %v2051
  %v2053 = vpack.c.bf16 %v2050, %v2048
  %v2054 = vpack.c.bf16 %v2052, %v2052
  %2055 = vrot.lane.b32.xlu0 %v1948, 56
  %v2056 = vpop.permute.xlu0 %2055
  %2057 = vrot.lane.b32.xlu0 %v1949, 56
  %v2058 = vpop.permute.xlu0 %2057
  %v2061 = vsel %vm658, %v2053, 0
  %v2064 = vsel %vm658, %v2054, 0
  %v2067 = vsel %vm706, %v2058, 0
  %2069 = vmatprep.subr.bf16.mxu0 0
  %2070 = vmatpush1.bf16.msra.mxu0 %v2056
  %2071 = vmatprep.subr.bf16.mxu0 0
  %2072 = vmatpush1.bf16.msra.mxu0 %v2067
  %2073 = vmatprep.subr.bf16.mxu0 0
  %2074 = vmatpush1.bf16.msra.mxu0 0
  %2075 = vmatprep.subr.bf16.mxu0 0
  %2076 = vmatpush1.bf16.msra.mxu0 0
  %2077 = vmatprep.subr.bf16.mxu0 0
  %2078 = vmatpush1.bf16.msra.mxu0 0
  %2079 = vmatprep.subr.bf16.mxu0 0
  %2080 = vmatpush1.bf16.msra.mxu0 0
  %2081 = vmatprep.subr.bf16.mxu0 0
  %2082 = vmatpush1.bf16.msra.mxu0 0
  %2083 = vmatprep.subr.bf16.mxu0 0
  %2084 = vmatpush1.bf16.msra.mxu0 0
  %2085 = vmatprep.subr.bf16.mxu0 0
  %2086 = vmatpush1.bf16.msra.mxu0 0
  %2087 = vmatprep.subr.bf16.mxu0 0
  %2088 = vmatpush1.bf16.msra.mxu0 0
  %2089 = vmatprep.subr.bf16.mxu0 0
  %2090 = vmatpush1.bf16.msra.mxu0 0
  %2091 = vmatprep.subr.bf16.mxu0 0
  %2092 = vmatpush1.bf16.msra.mxu0 0
  %2093 = vmatprep.subr.bf16.mxu0 0
  %2094 = vmatpush1.bf16.msra.mxu0 0
  %2095 = vmatprep.subr.bf16.mxu0 0
  %2096 = vmatpush1.bf16.msra.mxu0 0
  %2097 = vmatprep.subr.bf16.mxu0 0
  %2098 = vmatpush1.bf16.msra.mxu0 0
  %2099 = vmatprep.subr.bf16.mxu0 0
  %2100 = vmatpush1.bf16.msra.mxu0 0
  %2101 = vmatprep.mubr.bf16.mxu0 0
  %2102 = vmatmul.mubr.bf16.gmra.mrb[0].mxu0 %v2061
  %v2103 = vpop.f32.mrb[0].mxu0
  %v2104 = vadd.f32 0.0, %v2103
  %v2105 = vpop.f32.mrb[0].mxu0
  %v2106 = vpop.f32.mrb[0].mxu0
  %v2107 = vadd.f32 0.0, %v2106
  %v2108 = vpop.f32.mrb[0].mxu0
  %2109 = vmatprep.mubr.bf16.mxu0 0
  %2110 = vmatmul.mubr.bf16.gmra.mrb[0].mxu0 %v2064
  %v2111 = vpop.f32.mrb[0].mxu0
  %v2112 = vadd.f32 0.0, %v2111
  %v2113 = vpop.f32.mrb[0].mxu0
  %v2114 = vpop.f32.mrb[0].mxu0
  %v2115 = vpop.f32.mrb[0].mxu0
  %2116 = vdwg.mxu0
  %2120 = vrot.lane.b32.xlu0 %v2104, 8
  %v2121 = vpop.permute.xlu0 %2120
  %2122 = vrot.lane.b32.xlu0 %v2107, 8
  %v2123 = vpop.permute.xlu0 %2122
  %2124 = vrot.lane.b32.xlu0 %v2112, 8
  %v2125 = vpop.permute.xlu0 %2124
  %2129 = vst.msk [vmem:[#allocation3] sm:$0xff] %vm946, %v2121
  %2130 = vst.msk [vmem:[#allocation3 + $0x8] sm:$0xff] %vm946, %v2123
  %2131 = vst.msk [vmem:[#allocation3 + $0x10] sm:$0x3] %vm949, %v2125
  %v2132 = vld [vmem:[#allocation2] sm:$0xff]
  %v2133 = vld [vmem:[#allocation2 + $0x8] sm:$0xff]
  %v2134 = vld [vmem:[#allocation2 + $0x10] sm:$0x3]
  %v2135 = vpack.c.bf16 %v2133, %v2132
  %v2136 = vpack.c.bf16 %v2134, %v2134
  %2139 = vrot.lane.b32.xlu0 %v2135, 112
  %v2140 = vpop.permute.xlu0 %2139
  %2141 = vrot.lane.b32.xlu0 %v2136, 112
  %v2142 = vpop.permute.xlu0 %2141
  %2143 = vrot.lane.b32.xlu0 %v2135, 80
  %v2144 = vpop.permute.xlu0 %2143
  %2145 = vrot.lane.b32.xlu0 %v2136, 80
  %v2146 = vpop.permute.xlu0 %2145
  %v2148 = vsel %vm597, %v2140, 0
  %v2151 = vsel %vm597, %v2142, 0
  %v2154 = vsel %vm597, %v2144, 0
  %v2157 = vsel %vm597, %v2146, 0
  %2159 = vmatprep.subr.bf16.mxu0 0
  %2160 = vmatpush1.bf16.xpose.msra.mxu0 %v2154
  %2161 = vmatprep.subr.bf16.mxu0 0
  %2162 = vmatpush1.bf16.xpose.msra.mxu0 %v2157
  %2163 = vmatprep.subr.bf16.mxu0 0
  %2164 = vmatpush1.bf16.xpose.msra.mxu0 0
  %2165 = vmatprep.subr.bf16.mxu0 0
  %2166 = vmatpush1.bf16.xpose.msra.mxu0 0
  %2167 = vmatprep.subr.bf16.mxu0 0
  %2168 = vmatpush1.bf16.xpose.msra.mxu0 0
  %2169 = vmatprep.subr.bf16.mxu0 0
  %2170 = vmatpush1.bf16.xpose.msra.mxu0 0
  %2171 = vmatprep.subr.bf16.mxu0 0
  %2172 = vmatpush1.bf16.xpose.msra.mxu0 0
  %2173 = vmatprep.subr.bf16.mxu0 0
  %2174 = vmatpush1.bf16.xpose.msra.mxu0 0
  %2175 = vmatprep.subr.bf16.mxu0 0
  %2176 = vmatpush1.bf16.xpose.msra.mxu0 0
  %2177 = vmatprep.subr.bf16.mxu0 0
  %2178 = vmatpush1.bf16.xpose.msra.mxu0 0
  %2179 = vmatprep.subr.bf16.mxu0 0
  %2180 = vmatpush1.bf16.xpose.msra.mxu0 0
  %2181 = vmatprep.subr.bf16.mxu0 0
  %2182 = vmatpush1.bf16.xpose.msra.mxu0 0
  %2183 = vmatprep.subr.bf16.mxu0 0
  %2184 = vmatpush1.bf16.xpose.msra.mxu0 0
  %2185 = vmatprep.subr.bf16.mxu0 0
  %2186 = vmatpush1.bf16.xpose.msra.mxu0 0
  %2187 = vmatprep.subr.bf16.mxu0 0
  %2188 = vmatpush1.bf16.xpose.msra.mxu0 0
  %2189 = vmatprep.subr.bf16.mxu0 0
  %2190 = vmatpush1.bf16.xpose.msra.mxu0 0
  %2191 = vmatprep.mubr.bf16.mxu0 0
  %2192 = vmatmul.mubr.bf16.gmra.mrb[0].mxu0 %v2148
  %v2193 = vpop.f32.mrb[0].mxu0
  %v2194 = vadd.f32 %v505, %v2193
  %v2195 = vpop.f32.mrb[0].mxu0
  %v2196 = vpop.f32.mrb[0].mxu0
  %v2197 = vadd.f32 %v506, %v2196
  %v2198 = vpop.f32.mrb[0].mxu0
  %2199 = vmatprep.mubr.bf16.mxu0 0
  %2200 = vmatmul.mubr.bf16.gmra.mrb[0].mxu0 %v2151
  %v2201 = vpop.f32.mrb[0].mxu0
  %v2202 = vadd.f32 %v507, %v2201
  %v2203 = vpop.f32.mrb[0].mxu0
  %v2204 = vpop.f32.mrb[0].mxu0
  %v2205 = vpop.f32.mrb[0].mxu0
  %2206 = vdwg.mxu0
  %v2207 = vsel %vm658, %v2194, -inf
  %2208 = vmax.xlane.f32.xlu0 %v2207
  %v2209 = vpop.xlane.xlu0 %2208
  %v2210 = vsel %vm658, %v2197, -inf
  %2211 = vmax.xlane.f32.xlu0 %v2210
  %v2212 = vpop.xlane.xlu0 %2211
  %v2213 = vsel %vm665, %v2202, -inf
  %2214 = vmax.xlane.f32.xlu0 %v2213
  %v2215 = vpop.xlane.xlu0 %2214
  %v2216 = vsub.f32 %v2194, %v2209
  %v2217 = vsub.f32 %v2197, %v2212
  %v2218 = vsub.f32 %v2202, %v2215
  %v2219 = vmul.f32 %v2216, 1.442695
  %v2220 = vpow.pop %v2219
  %v2221 = vmul.f32 %v2217, 1.442695
  %v2222 = vpow.pop %v2221
  %v2223 = vmul.f32 %v2218, 1.442695
  %v2224 = vpow.pop %v2223
  %v2225 = vsel %vm658, %v2220, 0.0
  %2226 = vadd.xlane.f32.xlu0 %v2225
  %v2227 = vpop.xlane.xlu0 %2226
  %v2228 = vsel %vm658, %v2222, 0.0
  %2229 = vadd.xlane.f32.xlu0 %v2228
  %v2230 = vpop.xlane.xlu0 %2229
  %v2231 = vsel %vm665, %v2224, 0.0
  %2232 = vadd.xlane.f32.xlu0 %v2231
  %v2233 = vpop.xlane.xlu0 %2232
  %v2234 = vrcp.pop %v2227
  %v2235 = vmul.f32 %v2220, %v2234
  %v2236 = vrcp.pop %v2230
  %v2237 = vmul.f32 %v2222, %v2236
  %v2238 = vrcp.pop %v2233
  %v2239 = vmul.f32 %v2224, %v2238
  %v2240 = vpack.c.bf16 %v2237, %v2235
  %v2241 = vpack.c.bf16 %v2239, %v2239
  %2242 = vrot.lane.b32.xlu0 %v2135, 48
  %v2243 = vpop.permute.xlu0 %2242
  %2244 = vrot.lane.b32.xlu0 %v2136, 48
  %v2245 = vpop.permute.xlu0 %2244
  %v2248 = vsel %vm658, %v2240, 0
  %v2251 = vsel %vm658, %v2241, 0
  %v2254 = vsel %vm706, %v2245, 0
  %2256 = vmatprep.subr.bf16.mxu0 0
  %2257 = vmatpush1.bf16.msra.mxu0 %v2243
  %2258 = vmatprep.subr.bf16.mxu0 0
  %2259 = vmatpush1.bf16.msra.mxu0 %v2254
  %2260 = vmatprep.subr.bf16.mxu0 0
  %2261 = vmatpush1.bf16.msra.mxu0 0
  %2262 = vmatprep.subr.bf16.mxu0 0
  %2263 = vmatpush1.bf16.msra.mxu0 0
  %2264 = vmatprep.subr.bf16.mxu0 0
  %2265 = vmatpush1.bf16.msra.mxu0 0
  %2266 = vmatprep.subr.bf16.mxu0 0
  %2267 = vmatpush1.bf16.msra.mxu0 0
  %2268 = vmatprep.subr.bf16.mxu0 0
  %2269 = vmatpush1.bf16.msra.mxu0 0
  %2270 = vmatprep.subr.bf16.mxu0 0
  %2271 = vmatpush1.bf16.msra.mxu0 0
  %2272 = vmatprep.subr.bf16.mxu0 0
  %2273 = vmatpush1.bf16.msra.mxu0 0
  %2274 = vmatprep.subr.bf16.mxu0 0
  %2275 = vmatpush1.bf16.msra.mxu0 0
  %2276 = vmatprep.subr.bf16.mxu0 0
  %2277 = vmatpush1.bf16.msra.mxu0 0
  %2278 = vmatprep.subr.bf16.mxu0 0
  %2279 = vmatpush1.bf16.msra.mxu0 0
  %2280 = vmatprep.subr.bf16.mxu0 0
  %2281 = vmatpush1.bf16.msra.mxu0 0
  %2282 = vmatprep.subr.bf16.mxu0 0
  %2283 = vmatpush1.bf16.msra.mxu0 0
  %2284 = vmatprep.subr.bf16.mxu0 0
  %2285 = vmatpush1.bf16.msra.mxu0 0
  %2286 = vmatprep.subr.bf16.mxu0 0
  %2287 = vmatpush1.bf16.msra.mxu0 0
  %2288 = vmatprep.mubr.bf16.mxu0 0
  %2289 = vmatmul.mubr.bf16.gmra.mrb[0].mxu0 %v2248
  %v2290 = vpop.f32.mrb[0].mxu0
  %v2291 = vadd.f32 0.0, %v2290
  %v2292 = vpop.f32.mrb[0].mxu0
  %v2293 = vpop.f32.mrb[0].mxu0
  %v2294 = vadd.f32 0.0, %v2293
  %v2295 = vpop.f32.mrb[0].mxu0
  %2296 = vmatprep.mubr.bf16.mxu0 0
  %2297 = vmatmul.mubr.bf16.gmra.mrb[0].mxu0 %v2251
  %v2298 = vpop.f32.mrb[0].mxu0
  %v2299 = vadd.f32 0.0, %v2298
  %v2300 = vpop.f32.mrb[0].mxu0
  %v2301 = vpop.f32.mrb[0].mxu0
  %v2302 = vpop.f32.mrb[0].mxu0
  %2303 = vdwg.mxu0
  %2307 = vrot.lane.b32.xlu0 %v2291, 16
  %v2308 = vpop.permute.xlu0 %2307
  %2309 = vrot.lane.b32.xlu0 %v2294, 16
  %v2310 = vpop.permute.xlu0 %2309
  %2311 = vrot.lane.b32.xlu0 %v2299, 16
  %v2312 = vpop.permute.xlu0 %2311
  %2316 = vst.msk [vmem:[#allocation3] sm:$0xff] %vm1135, %v2308
  %2317 = vst.msk [vmem:[#allocation3 + $0x8] sm:$0xff] %vm1135, %v2310
  %2318 = vst.msk [vmem:[#allocation3 + $0x10] sm:$0x3] %vm1138, %v2312
  %v2319 = vld [vmem:[#allocation2] sm:$0xff]
  %v2320 = vld [vmem:[#allocation2 + $0x8] sm:$0xff]
  %v2321 = vld [vmem:[#allocation2 + $0x10] sm:$0x3]
  %v2322 = vpack.c.bf16 %v2320, %v2319
  %v2323 = vpack.c.bf16 %v2321, %v2321
  %2326 = vrot.lane.b32.xlu0 %v2322, 104
  %v2327 = vpop.permute.xlu0 %2326
  %2328 = vrot.lane.b32.xlu0 %v2323, 104
  %v2329 = vpop.permute.xlu0 %2328
  %2330 = vrot.lane.b32.xlu0 %v2322, 72
  %v2331 = vpop.permute.xlu0 %2330
  %2332 = vrot.lane.b32.xlu0 %v2323, 72
  %v2333 = vpop.permute.xlu0 %2332
  %v2335 = vsel %vm597, %v2327, 0
  %v2338 = vsel %vm597, %v2329, 0
  %v2341 = vsel %vm597, %v2331, 0
  %v2344 = vsel %vm597, %v2333, 0
  %2346 = vmatprep.subr.bf16.mxu0 0
  %2347 = vmatpush1.bf16.xpose.msra.mxu0 %v2341
  %2348 = vmatprep.subr.bf16.mxu0 0
  %2349 = vmatpush1.bf16.xpose.msra.mxu0 %v2344
  %2350 = vmatprep.subr.bf16.mxu0 0
  %2351 = vmatpush1.bf16.xpose.msra.mxu0 0
  %2352 = vmatprep.subr.bf16.mxu0 0
  %2353 = vmatpush1.bf16.xpose.msra.mxu0 0
  %2354 = vmatprep.subr.bf16.mxu0 0
  %2355 = vmatpush1.bf16.xpose.msra.mxu0 0
  %2356 = vmatprep.subr.bf16.mxu0 0
  %2357 = vmatpush1.bf16.xpose.msra.mxu0 0
  %2358 = vmatprep.subr.bf16.mxu0 0
  %2359 = vmatpush1.bf16.xpose.msra.mxu0 0
  %2360 = vmatprep.subr.bf16.mxu0 0
  %2361 = vmatpush1.bf16.xpose.msra.mxu0 0
  %2362 = vmatprep.subr.bf16.mxu0 0
  %2363 = vmatpush1.bf16.xpose.msra.mxu0 0
  %2364 = vmatprep.subr.bf16.mxu0 0
  %2365 = vmatpush1.bf16.xpose.msra.mxu0 0
  %2366 = vmatprep.subr.bf16.mxu0 0
  %2367 = vmatpush1.bf16.xpose.msra.mxu0 0
  %2368 = vmatprep.subr.bf16.mxu0 0
  %2369 = vmatpush1.bf16.xpose.msra.mxu0 0
  %2370 = vmatprep.subr.bf16.mxu0 0
  %2371 = vmatpush1.bf16.xpose.msra.mxu0 0
  %2372 = vmatprep.subr.bf16.mxu0 0
  %2373 = vmatpush1.bf16.xpose.msra.mxu0 0
  %2374 = vmatprep.subr.bf16.mxu0 0
  %2375 = vmatpush1.bf16.xpose.msra.mxu0 0
  %2376 = vmatprep.subr.bf16.mxu0 0
  %2377 = vmatpush1.bf16.xpose.msra.mxu0 0
  %2378 = vmatprep.mubr.bf16.mxu0 0
  %2379 = vmatmul.mubr.bf16.gmra.mrb[0].mxu0 %v2335
  %v2380 = vpop.f32.mrb[0].mxu0
  %v2381 = vadd.f32 %v505, %v2380
  %v2382 = vpop.f32.mrb[0].mxu0
  %v2383 = vpop.f32.mrb[0].mxu0
  %v2384 = vadd.f32 %v506, %v2383
  %v2385 = vpop.f32.mrb[0].mxu0
  %2386 = vmatprep.mubr.bf16.mxu0 0
  %2387 = vmatmul.mubr.bf16.gmra.mrb[0].mxu0 %v2338
  %v2388 = vpop.f32.mrb[0].mxu0
  %v2389 = vadd.f32 %v507, %v2388
  %v2390 = vpop.f32.mrb[0].mxu0
  %v2391 = vpop.f32.mrb[0].mxu0
  %v2392 = vpop.f32.mrb[0].mxu0
  %2393 = vdwg.mxu0
  %v2394 = vsel %vm658, %v2381, -inf
  %2395 = vmax.xlane.f32.xlu0 %v2394
  %v2396 = vpop.xlane.xlu0 %2395
  %v2397 = vsel %vm658, %v2384, -inf
  %2398 = vmax.xlane.f32.xlu0 %v2397
  %v2399 = vpop.xlane.xlu0 %2398
  %v2400 = vsel %vm665, %v2389, -inf
  %2401 = vmax.xlane.f32.xlu0 %v2400
  %v2402 = vpop.xlane.xlu0 %2401
  %v2403 = vsub.f32 %v2381, %v2396
  %v2404 = vsub.f32 %v2384, %v2399
  %v2405 = vsub.f32 %v2389, %v2402
  %v2406 = vmul.f32 %v2403, 1.442695
  %v2407 = vpow.pop %v2406
  %v2408 = vmul.f32 %v2404, 1.442695
  %v2409 = vpow.pop %v2408
  %v2410 = vmul.f32 %v2405, 1.442695
  %v2411 = vpow.pop %v2410
  %v2412 = vsel %vm658, %v2407, 0.0
  %2413 = vadd.xlane.f32.xlu0 %v2412
  %v2414 = vpop.xlane.xlu0 %2413
  %v2415 = vsel %vm658, %v2409, 0.0
  %2416 = vadd.xlane.f32.xlu0 %v2415
  %v2417 = vpop.xlane.xlu0 %2416
  %v2418 = vsel %vm665, %v2411, 0.0
  %2419 = vadd.xlane.f32.xlu0 %v2418
  %v2420 = vpop.xlane.xlu0 %2419
  %v2421 = vrcp.pop %v2414
  %v2422 = vmul.f32 %v2407, %v2421
  %v2423 = vrcp.pop %v2417
  %v2424 = vmul.f32 %v2409, %v2423
  %v2425 = vrcp.pop %v2420
  %v2426 = vmul.f32 %v2411, %v2425
  %v2427 = vpack.c.bf16 %v2424, %v2422
  %v2428 = vpack.c.bf16 %v2426, %v2426
  %2429 = vrot.lane.b32.xlu0 %v2322, 40
  %v2430 = vpop.permute.xlu0 %2429
  %2431 = vrot.lane.b32.xlu0 %v2323, 40
  %v2432 = vpop.permute.xlu0 %2431
  %v2435 = vsel %vm658, %v2427, 0
  %v2438 = vsel %vm658, %v2428, 0
  %v2441 = vsel %vm706, %v2432, 0
  %2443 = vmatprep.subr.bf16.mxu0 0
  %2444 = vmatpush1.bf16.msra.mxu0 %v2430
  %2445 = vmatprep.subr.bf16.mxu0 0
  %2446 = vmatpush1.bf16.msra.mxu0 %v2441
  %2447 = vmatprep.subr.bf16.mxu0 0
  %2448 = vmatpush1.bf16.msra.mxu0 0
  %2449 = vmatprep.subr.bf16.mxu0 0
  %2450 = vmatpush1.bf16.msra.mxu0 0
  %2451 = vmatprep.subr.bf16.mxu0 0
  %2452 = vmatpush1.bf16.msra.mxu0 0
  %2453 = vmatprep.subr.bf16.mxu0 0
  %2454 = vmatpush1.bf16.msra.mxu0 0
  %2455 = vmatprep.subr.bf16.mxu0 0
  %2456 = vmatpush1.bf16.msra.mxu0 0
  %2457 = vmatprep.subr.bf16.mxu0 0
  %2458 = vmatpush1.bf16.msra.mxu0 0
  %2459 = vmatprep.subr.bf16.mxu0 0
  %2460 = vmatpush1.bf16.msra.mxu0 0
  %2461 = vmatprep.subr.bf16.mxu0 0
  %2462 = vmatpush1.bf16.msra.mxu0 0
  %2463 = vmatprep.subr.bf16.mxu0 0
  %2464 = vmatpush1.bf16.msra.mxu0 0
  %2465 = vmatprep.subr.bf16.mxu0 0
  %2466 = vmatpush1.bf16.msra.mxu0 0
  %2467 = vmatprep.subr.bf16.mxu0 0
  %2468 = vmatpush1.bf16.msra.mxu0 0
  %2469 = vmatprep.subr.bf16.mxu0 0
  %2470 = vmatpush1.bf16.msra.mxu0 0
  %2471 = vmatprep.subr.bf16.mxu0 0
  %2472 = vmatpush1.bf16.msra.mxu0 0
  %2473 = vmatprep.subr.bf16.mxu0 0
  %2474 = vmatpush1.bf16.msra.mxu0 0
  %2475 = vmatprep.mubr.bf16.mxu0 0
  %2476 = vmatmul.mubr.bf16.gmra.mrb[0].mxu0 %v2435
  %v2477 = vpop.f32.mrb[0].mxu0
  %v2478 = vadd.f32 0.0, %v2477
  %v2479 = vpop.f32.mrb[0].mxu0
  %v2480 = vpop.f32.mrb[0].mxu0
  %v2481 = vadd.f32 0.0, %v2480
  %v2482 = vpop.f32.mrb[0].mxu0
  %2483 = vmatprep.mubr.bf16.mxu0 0
  %2484 = vmatmul.mubr.bf16.gmra.mrb[0].mxu0 %v2438
  %v2485 = vpop.f32.mrb[0].mxu0
  %v2486 = vadd.f32 0.0, %v2485
  %v2487 = vpop.f32.mrb[0].mxu0
  %v2488 = vpop.f32.mrb[0].mxu0
  %v2489 = vpop.f32.mrb[0].mxu0
  %2490 = vdwg.mxu0
  %2494 = vrot.lane.b32.xlu0 %v2478, 24
  %v2495 = vpop.permute.xlu0 %2494
  %2496 = vrot.lane.b32.xlu0 %v2481, 24
  %v2497 = vpop.permute.xlu0 %2496
  %2498 = vrot.lane.b32.xlu0 %v2486, 24
  %v2499 = vpop.permute.xlu0 %2498
  %2503 = vst.msk [vmem:[#allocation3] sm:$0xff] %vm1324, %v2495
  %2504 = vst.msk [vmem:[#allocation3 + $0x8] sm:$0xff] %vm1324, %v2497
  %2505 = vst.msk [vmem:[#allocation3 + $0x10] sm:$0x3] %vm1327, %v2499
  %v2506 = vld [vmem:[#allocation3] sm:$0xff]
  %v2507 = vld [vmem:[#allocation3 + $0x8] sm:$0xff]
  %v2508 = vld [vmem:[#allocation3 + $0x10] sm:$0x3]
  %s2509 = scalar_lea.vmem %s10, 16
  %v2510 = vld [vmem:[%s2509] sm:$0xf]
  %v2511 = vld [vmem:[%s2509 + $0x4] sm:$0xf]
  %v2512 = vld [vmem:[%s2509 + $0x8] sm:$0xf]
  %v2513 = vld [vmem:[%s2509 + $0xc] sm:$0xf]
  %v2514 = vpack.c.bf16 %v2507, %v2506
  %v2515 = vpack.c.bf16 %v2508, %v2508
  %v2516 = vld [vmem:[%s14 + $0x16] ss:$0 sm:$0xff]
  %v2521 = vunpack.c.l.b16 %v2510
  %v2522 = vunpack.c.l.b16 %v2511
  %v2523 = vunpack.c.l.b16 %v2512
  %v2524 = vunpack.c.l.b16 %v2513
  %v2525 = vpack.c.b16 %v2522, %v2521
  %v2526 = vpack.c.b16 %v2524, %v2523
  %v2530 = vsel %vm493, %v2514, 0
  %v2533 = vsel %vm493, %v2515, 0
  %2535 = vmatprep.subr.bf16.mxu0 0
  %2536 = vmatpush1.bf16.msra.mxu0 %v2525
  %2537 = vmatprep.subr.bf16.mxu0 0
  %2538 = vmatpush1.bf16.msra.mxu0 %v2526
  %2539 = vmatprep.subr.bf16.mxu0 0
  %2540 = vmatpush1.bf16.msra.mxu0 0
  %2541 = vmatprep.subr.bf16.mxu0 0
  %2542 = vmatpush1.bf16.msra.mxu0 0
  %2543 = vmatprep.subr.bf16.mxu0 0
  %2544 = vmatpush1.bf16.msra.mxu0 0
  %2545 = vmatprep.subr.bf16.mxu0 0
  %2546 = vmatpush1.bf16.msra.mxu0 0
  %2547 = vmatprep.subr.bf16.mxu0 0
  %2548 = vmatpush1.bf16.msra.mxu0 0
  %2549 = vmatprep.subr.bf16.mxu0 0
  %2550 = vmatpush1.bf16.msra.mxu0 0
  %2551 = vmatprep.subr.bf16.mxu0 0
  %2552 = vmatpush1.bf16.msra.mxu0 0
  %2553 = vmatprep.subr.bf16.mxu0 0
  %2554 = vmatpush1.bf16.msra.mxu0 0
  %2555 = vmatprep.subr.bf16.mxu0 0
  %2556 = vmatpush1.bf16.msra.mxu0 0
  %2557 = vmatprep.subr.bf16.mxu0 0
  %2558 = vmatpush1.bf16.msra.mxu0 0
  %2559 = vmatprep.subr.bf16.mxu0 0
  %2560 = vmatpush1.bf16.msra.mxu0 0
  %2561 = vmatprep.subr.bf16.mxu0 0
  %2562 = vmatpush1.bf16.msra.mxu0 0
  %2563 = vmatprep.subr.bf16.mxu0 0
  %2564 = vmatpush1.bf16.msra.mxu0 0
  %2565 = vmatprep.subr.bf16.mxu0 0
  %2566 = vmatpush1.bf16.msra.mxu0 0
  %2567 = vmatprep.mubr.bf16.mxu0 0
  %2568 = vmatmul.mubr.bf16.gmra.mrb[0].mxu0 %v2530
  %v2569 = vpop.f32.mrb[0].mxu0
  %v2570 = vadd.f32 %v2516, %v2569
  %v2571 = vpop.f32.mrb[0].mxu0
  %v2572 = vpop.f32.mrb[0].mxu0
  %v2573 = vadd.f32 %v2516, %v2572
  %v2574 = vpop.f32.mrb[0].mxu0
  %2575 = vmatprep.mubr.bf16.mxu0 0
  %2576 = vmatmul.mubr.bf16.gmra.mrb[0].mxu0 %v2533
  %v2577 = vpop.f32.mrb[0].mxu0
  %v2578 = vadd.f32 %v2516, %v2577
  %v2579 = vpop.f32.mrb[0].mxu0
  %v2580 = vpop.f32.mrb[0].mxu0
  %v2581 = vpop.f32.mrb[0].mxu0
  %2582 = vdwg.mxu0
  %v2583 = vadd.f32 %v1694, %v2570
  %v2584 = vadd.f32 %v1695, %v2573
  %v2585 = vadd.f32 %v1696, %v2578
  %v2586 = vld [vmem:[%s14 + $0x17] ss:$0 sm:$0xff]
  %v2587 = vld [vmem:[%s14 + $0x20] ss:$0 sm:$0xff]
  %v2588 = vsel %vm493, %v2583, 0.0
  %2589 = vadd.xlane.f32.xlu0 %v2588
  %v2590 = vpop.xlane.xlu0 %2589
  %v2591 = vsel %vm493, %v2584, 0.0
  %2592 = vadd.xlane.f32.xlu0 %v2591
  %v2593 = vpop.xlane.xlu0 %2592
  %v2594 = vsel %vm491, %v2585, 0.0
  %2595 = vadd.xlane.f32.xlu0 %v2594
  %v2596 = vpop.xlane.xlu0 %2595
  %v2597 = vmul.f32 %v2590, %v1419
  %v2598 = vmul.f32 %v2593, %v1419
  %v2599 = vmul.f32 %v2596, %v1419
  %v2600 = vsub.f32 %v2583, %v2597
  %v2601 = vsub.f32 %v2584, %v2598
  %v2602 = vsub.f32 %v2585, %v2599
  %v2603 = vmul.f32 %v2600, %v2600
  %v2604 = vmul.f32 %v2601, %v2601
  %v2605 = vmul.f32 %v2602, %v2602
  %v2606 = vsel %vm493, %v2603, 0.0
  %2607 = vadd.xlane.f32.xlu0 %v2606
  %v2608 = vpop.xlane.xlu0 %2607
  %v2609 = vsel %vm493, %v2604, 0.0
  %2610 = vadd.xlane.f32.xlu0 %v2609
  %v2611 = vpop.xlane.xlu0 %2610
  %v2612 = vsel %vm491, %v2605, 0.0
  %2613 = vadd.xlane.f32.xlu0 %v2612
  %v2614 = vpop.xlane.xlu0 %2613
  %v2615 = vmul.f32 %v2608, %v1419
  %v2616 = vmul.f32 %v2611, %v1419
  %v2617 = vmul.f32 %v2614, %v1419
  %v2618 = vadd.f32 %v2615, 1e-05
  %v2619 = vadd.f32 %v2616, 1e-05
  %v2620 = vadd.f32 %v2617, 1e-05
  %v2621 = vrsqrt.pop %v2618
  %v2622 = vrsqrt.pop %v2619
  %v2623 = vrsqrt.pop %v2620
  %v2624 = vmul.f32 %v2600, %v2621
  %v2625 = vmul.f32 %v2601, %v2622
  %v2626 = vmul.f32 %v2602, %v2623
  %v2627 = vmul.f32 %v2624, %v2586
  %v2628 = vmul.f32 %v2625, %v2586
  %v2629 = vmul.f32 %v2626, %v2586
  %v2630 = vadd.f32 %v2627, %v2587
  %v2631 = vadd.f32 %v2628, %v2587
  %v2632 = vadd.f32 %v2629, %v2587
  %s2633 = scalar_lea.vmem %s11, 16
  %v2634 = vld [vmem:[%s2633] sm:$0xf]
  %v2635 = vld [vmem:[%s2633 + $0x4] sm:$0xf]
  %v2636 = vld [vmem:[%s2633 + $0x8] sm:$0xf]
  %v2637 = vld [vmem:[%s2633 + $0xc] sm:$0xf]
  %v2638 = vpack.c.bf16 %v2631, %v2630
  %v2639 = vpack.c.bf16 %v2632, %v2632
  %v2640 = vld [vmem:[%s14 + $0x21] ss:$0 sm:$0xff]
  %v2645 = vunpack.c.l.b16 %v2634
  %v2646 = vunpack.c.l.b16 %v2635
  %v2647 = vunpack.c.l.b16 %v2636
  %v2648 = vunpack.c.l.b16 %v2637
  %v2649 = vpack.c.b16 %v2646, %v2645
  %v2650 = vpack.c.b16 %v2648, %v2647
  %v2654 = vsel %vm493, %v2638, 0
  %v2657 = vsel %vm493, %v2639, 0
  %2659 = vmatprep.subr.bf16.mxu0 0
  %2660 = vmatpush1.bf16.msra.mxu0 %v2649
  %2661 = vmatprep.subr.bf16.mxu0 0
  %2662 = vmatpush1.bf16.msra.mxu0 %v2650
  %2663 = vmatprep.subr.bf16.mxu0 0
  %2664 = vmatpush1.bf16.msra.mxu0 0
  %2665 = vmatprep.subr.bf16.mxu0 0
  %2666 = vmatpush1.bf16.msra.mxu0 0
  %2667 = vmatprep.subr.bf16.mxu0 0
  %2668 = vmatpush1.bf16.msra.mxu0 0
  %2669 = vmatprep.subr.bf16.mxu0 0
  %2670 = vmatpush1.bf16.msra.mxu0 0
  %2671 = vmatprep.subr.bf16.mxu0 0
  %2672 = vmatpush1.bf16.msra.mxu0 0
  %2673 = vmatprep.subr.bf16.mxu0 0
  %2674 = vmatpush1.bf16.msra.mxu0 0
  %2675 = vmatprep.subr.bf16.mxu0 0
  %2676 = vmatpush1.bf16.msra.mxu0 0
  %2677 = vmatprep.subr.bf16.mxu0 0
  %2678 = vmatpush1.bf16.msra.mxu0 0
  %2679 = vmatprep.subr.bf16.mxu0 0
  %2680 = vmatpush1.bf16.msra.mxu0 0
  %2681 = vmatprep.subr.bf16.mxu0 0
  %2682 = vmatpush1.bf16.msra.mxu0 0
  %2683 = vmatprep.subr.bf16.mxu0 0
  %2684 = vmatpush1.bf16.msra.mxu0 0
  %2685 = vmatprep.subr.bf16.mxu0 0
  %2686 = vmatpush1.bf16.msra.mxu0 0
  %2687 = vmatprep.subr.bf16.mxu0 0
  %2688 = vmatpush1.bf16.msra.mxu0 0
  %2689 = vmatprep.subr.bf16.mxu0 0
  %2690 = vmatpush1.bf16.msra.mxu0 0
  %2691 = vmatprep.mubr.bf16.mxu0 0
  %2692 = vmatmul.mubr.bf16.gmra.mrb[0].mxu0 %v2654
  %v2693 = vpop.f32.mrb[0].mxu0
  %v2694 = vadd.f32 %v2640, %v2693
  %v2695 = vpop.f32.mrb[0].mxu0
  %v2696 = vpop.f32.mrb[0].mxu0
  %v2697 = vadd.f32 %v2640, %v2696
  %v2698 = vpop.f32.mrb[0].mxu0
  %2699 = vmatprep.mubr.bf16.mxu0 0
  %2700 = vmatmul.mubr.bf16.gmra.mrb[0].mxu0 %v2657
  %v2701 = vpop.f32.mrb[0].mxu0
  %v2702 = vadd.f32 %v2640, %v2701
  %v2703 = vpop.f32.mrb[0].mxu0
  %v2704 = vpop.f32.mrb[0].mxu0
  %v2705 = vpop.f32.mrb[0].mxu0
  %2706 = vdwg.mxu0
  %v2707 = vmax.f32 %v2694, 0.0
  %v2708 = vmax.f32 %v2697, 0.0
  %v2709 = vmax.f32 %v2702, 0.0
  %s2710 = scalar_lea.vmem %s12, 64
  %v2711 = vld [vmem:[%s2710] sm:$0xf]
  %v2712 = vld [vmem:[%s2710 + $0x4] sm:$0xf]
  %v2713 = vld [vmem:[%s2710 + $0x8] sm:$0xf]
  %v2714 = vld [vmem:[%s2710 + $0xc] sm:$0xf]
  %v2715 = vld [vmem:[%s2710 + $0x10] sm:$0xf]
  %v2716 = vld [vmem:[%s2710 + $0x14] sm:$0xf]
  %v2717 = vld [vmem:[%s2710 + $0x18] sm:$0xf]
  %v2718 = vld [vmem:[%s2710 + $0x1c] sm:$0xf]
  %v2719 = vld [vmem:[%s2710 + $0x20] sm:$0xf]
  %v2720 = vld [vmem:[%s2710 + $0x24] sm:$0xf]
  %v2721 = vld [vmem:[%s2710 + $0x28] sm:$0xf]
  %v2722 = vld [vmem:[%s2710 + $0x2c] sm:$0xf]
  %v2723 = vld [vmem:[%s2710 + $0x30] sm:$0xf]
  %v2724 = vld [vmem:[%s2710 + $0x34] sm:$0xf]
  %v2725 = vld [vmem:[%s2710 + $0x38] sm:$0xf]
  %v2726 = vld [vmem:[%s2710 + $0x3c] sm:$0xf]
  %v2727 = vpack.c.bf16 %v2708, %v2707
  %v2728 = vpack.c.bf16 %v2709, %v2709
  %v2729 = vld [vmem:[%s14 + $0x22] ss:$0 sm:$0xff]
  %v2746 = vunpack.c.l.b16 %v2711
  %v2747 = vunpack.c.l.b16 %v2712
  %v2748 = vunpack.c.l.b16 %v2713
  %v2749 = vunpack.c.l.b16 %v2714
  %v2750 = vunpack.c.l.b16 %v2715
  %v2751 = vunpack.c.l.b16 %v2716
  %v2752 = vunpack.c.l.b16 %v2717
  %v2753 = vunpack.c.l.b16 %v2718
  %v2754 = vunpack.c.l.b16 %v2719
  %v2755 = vunpack.c.l.b16 %v2720
  %v2756 = vunpack.c.l.b16 %v2721
  %v2757 = vunpack.c.l.b16 %v2722
  %v2758 = vunpack.c.l.b16 %v2723
  %v2759 = vunpack.c.l.b16 %v2724
  %v2760 = vunpack.c.l.b16 %v2725
  %v2761 = vunpack.c.l.b16 %v2726
  %v2762 = vpack.c.b16 %v2747, %v2746
  %v2763 = vpack.c.b16 %v2749, %v2748
  %v2764 = vpack.c.b16 %v2751, %v2750
  %v2765 = vpack.c.b16 %v2753, %v2752
  %v2766 = vpack.c.b16 %v2755, %v2754
  %v2767 = vpack.c.b16 %v2757, %v2756
  %v2768 = vpack.c.b16 %v2759, %v2758
  %v2769 = vpack.c.b16 %v2761, %v2760
  %2778 = vmatprep.subr.bf16.mxu0 0
  %2779 = vmatpush1.bf16.msra.mxu0 %v2762
  %2780 = vmatprep.subr.bf16.mxu0 0
  %2781 = vmatpush1.bf16.msra.mxu0 %v2763
  %2782 = vmatprep.subr.bf16.mxu0 0
  %2783 = vmatpush1.bf16.msra.mxu0 %v2764
  %2784 = vmatprep.subr.bf16.mxu0 0
  %2785 = vmatpush1.bf16.msra.mxu0 %v2765
  %2786 = vmatprep.subr.bf16.mxu0 0
  %2787 = vmatpush1.bf16.msra.mxu0 %v2766
  %2788 = vmatprep.subr.bf16.mxu0 0
  %2789 = vmatpush1.bf16.msra.mxu0 %v2767
  %2790 = vmatprep.subr.bf16.mxu0 0
  %2791 = vmatpush1.bf16.msra.mxu0 %v2768
  %2792 = vmatprep.subr.bf16.mxu0 0
  %2793 = vmatpush1.bf16.msra.mxu0 %v2769
  %2794 = vmatprep.subr.bf16.mxu0 0
  %2795 = vmatpush1.bf16.msra.mxu0 0
  %2796 = vmatprep.subr.bf16.mxu0 0
  %2797 = vmatpush1.bf16.msra.mxu0 0
  %2798 = vmatprep.subr.bf16.mxu0 0
  %2799 = vmatpush1.bf16.msra.mxu0 0
  %2800 = vmatprep.subr.bf16.mxu0 0
  %2801 = vmatpush1.bf16.msra.mxu0 0
  %2802 = vmatprep.subr.bf16.mxu0 0
  %2803 = vmatpush1.bf16.msra.mxu0 0
  %2804 = vmatprep.subr.bf16.mxu0 0
  %2805 = vmatpush1.bf16.msra.mxu0 0
  %2806 = vmatprep.subr.bf16.mxu0 0
  %2807 = vmatpush1.bf16.msra.mxu0 0
  %2808 = vmatprep.subr.bf16.mxu0 0
  %2809 = vmatpush1.bf16.msra.mxu0 0
  %2810 = vmatprep.mubr.bf16.mxu0 0
  %2811 = vmatmul.mubr.bf16.gmra.mrb[0].mxu0 %v2727
  %v2812 = vpop.f32.mrb[0].mxu0
  %v2813 = vadd.f32 %v2729, %v2812
  %v2814 = vpop.f32.mrb[0].mxu0
  %v2815 = vpop.f32.mrb[0].mxu0
  %v2816 = vadd.f32 %v2729, %v2815
  %v2817 = vpop.f32.mrb[0].mxu0
  %2818 = vmatprep.mubr.bf16.mxu0 0
  %2819 = vmatmul.mubr.bf16.gmra.mrb[0].mxu0 %v2728
  %v2820 = vpop.f32.mrb[0].mxu0
  %v2821 = vadd.f32 %v2729, %v2820
  %v2822 = vpop.f32.mrb[0].mxu0
  %v2823 = vpop.f32.mrb[0].mxu0
  %v2824 = vpop.f32.mrb[0].mxu0
  %2825 = vdwg.mxu0
  %v2826 = vadd.f32 %v2630, %v2813
  %v2827 = vadd.f32 %v2631, %v2816
  %v2828 = vadd.f32 %v2632, %v2821
  %v2829 = vld [vmem:[%s14 + $0x23] ss:$0 sm:$0xff]
  %v2830 = vld [vmem:[%s14 + $0x24] ss:$0 sm:$0xff]
  %v2831 = vsel %vm493, %v2826, 0.0
  %2832 = vadd.xlane.f32.xlu0 %v2831
  %v2833 = vpop.xlane.xlu0 %2832
  %v2834 = vsel %vm493, %v2827, 0.0
  %2835 = vadd.xlane.f32.xlu0 %v2834
  %v2836 = vpop.xlane.xlu0 %2835
  %v2837 = vsel %vm491, %v2828, 0.0
  %2838 = vadd.xlane.f32.xlu0 %v2837
  %v2839 = vpop.xlane.xlu0 %2838
  %v2840 = vmul.f32 %v2833, %v1419
  %v2841 = vmul.f32 %v2836, %v1419
  %v2842 = vmul.f32 %v2839, %v1419
  %v2843 = vsub.f32 %v2826, %v2840
  %v2844 = vsub.f32 %v2827, %v2841
  %v2845 = vsub.f32 %v2828, %v2842
  %v2846 = vmul.f32 %v2843, %v2843
  %v2847 = vmul.f32 %v2844, %v2844
  %v2848 = vmul.f32 %v2845, %v2845
  %v2849 = vsel %vm493, %v2846, 0.0
  %2850 = vadd.xlane.f32.xlu0 %v2849
  %v2851 = vpop.xlane.xlu0 %2850
  %v2852 = vsel %vm493, %v2847, 0.0
  %2853 = vadd.xlane.f32.xlu0 %v2852
  %v2854 = vpop.xlane.xlu0 %2853
  %v2855 = vsel %vm491, %v2848, 0.0
  %2856 = vadd.xlane.f32.xlu0 %v2855
  %v2857 = vpop.xlane.xlu0 %2856
  %v2858 = vmul.f32 %v2851, %v1419
  %v2859 = vmul.f32 %v2854, %v1419
  %v2860 = vmul.f32 %v2857, %v1419
  %v2861 = vadd.f32 %v2858, 1e-05
  %v2862 = vadd.f32 %v2859, 1e-05
  %v2863 = vadd.f32 %v2860, 1e-05
  %v2864 = vrsqrt.pop %v2861
  %v2865 = vrsqrt.pop %v2862
  %v2866 = vrsqrt.pop %v2863
  %v2867 = vmul.f32 %v2843, %v2864
  %v2868 = vmul.f32 %v2844, %v2865
  %v2869 = vmul.f32 %v2845, %v2866
  %v2870 = vmul.f32 %v2867, %v2829
  %v2871 = vmul.f32 %v2868, %v2829
  %v2872 = vmul.f32 %v2869, %v2829
  %v2873 = vadd.f32 %v2870, %v2830
  %v2874 = vadd.f32 %v2871, %v2830
  %v2875 = vadd.f32 %v2872, %v2830
  %v2876 = vld [vmem:[%s13] sm:$0xf]
  %v2877 = vld [vmem:[%s13 + $0x4] sm:$0xf]
  %v2878 = vld [vmem:[%s13 + $0x8] sm:$0xf]
  %v2879 = vld [vmem:[%s13 + $0xc] sm:$0xf]
  %v2880 = vpack.c.bf16 %v2874, %v2873
  %v2881 = vpack.c.bf16 %v2875, %v2875
  %v2882 = vld [vmem:[%s14 + $0x4] ss:$0 sm:$0xff]
  %v2887 = vunpack.c.l.b16 %v2876
  %v2888 = vunpack.c.l.b16 %v2877
  %v2889 = vunpack.c.l.b16 %v2878
  %v2890 = vunpack.c.l.b16 %v2879
  %v2891 = vpack.c.b16 %v2888, %v2887
  %v2892 = vpack.c.b16 %v2890, %v2889
  %v2896 = vsel %vm493, %v2880, 0
  %v2899 = vsel %vm493, %v2881, 0
  %2901 = vmatprep.subr.bf16.mxu0 0
  %2902 = vmatpush1.bf16.msra.mxu0 %v2891
  %2903 = vmatprep.subr.bf16.mxu0 0
  %2904 = vmatpush1.bf16.msra.mxu0 %v2892
  %2905 = vmatprep.subr.bf16.mxu0 0
  %2906 = vmatpush1.bf16.msra.mxu0 0
  %2907 = vmatprep.subr.bf16.mxu0 0
  %2908 = vmatpush1.bf16.msra.mxu0 0
  %2909 = vmatprep.subr.bf16.mxu0 0
  %2910 = vmatpush1.bf16.msra.mxu0 0
  %2911 = vmatprep.subr.bf16.mxu0 0
  %2912 = vmatpush1.bf16.msra.mxu0 0
  %2913 = vmatprep.subr.bf16.mxu0 0
  %2914 = vmatpush1.bf16.msra.mxu0 0
  %2915 = vmatprep.subr.bf16.mxu0 0
  %2916 = vmatpush1.bf16.msra.mxu0 0
  %2917 = vmatprep.subr.bf16.mxu0 0
  %2918 = vmatpush1.bf16.msra.mxu0 0
  %2919 = vmatprep.subr.bf16.mxu0 0
  %2920 = vmatpush1.bf16.msra.mxu0 0
  %2921 = vmatprep.subr.bf16.mxu0 0
  %2922 = vmatpush1.bf16.msra.mxu0 0
  %2923 = vmatprep.subr.bf16.mxu0 0
  %2924 = vmatpush1.bf16.msra.mxu0 0
  %2925 = vmatprep.subr.bf16.mxu0 0
  %2926 = vmatpush1.bf16.msra.mxu0 0
  %2927 = vmatprep.subr.bf16.mxu0 0
  %2928 = vmatpush1.bf16.msra.mxu0 0
  %2929 = vmatprep.subr.bf16.mxu0 0
  %2930 = vmatpush1.bf16.msra.mxu0 0
  %2931 = vmatprep.subr.bf16.mxu0 0
  %2932 = vmatpush1.bf16.msra.mxu0 0
  %2933 = vmatprep.mubr.bf16.mxu0 0
  %2934 = vmatmul.mubr.bf16.gmra.mrb[0].mxu0 %v2896
  %v2935 = vpop.f32.mrb[0].mxu0
  %v2936 = vadd.f32 %v2882, %v2935
  %v2937 = vpop.f32.mrb[0].mxu0
  %v2938 = vpop.f32.mrb[0].mxu0
  %v2939 = vadd.f32 %v2882, %v2938
  %v2940 = vpop.f32.mrb[0].mxu0
  %2941 = vmatprep.mubr.bf16.mxu0 0
  %2942 = vmatmul.mubr.bf16.gmra.mrb[0].mxu0 %v2899
  %v2943 = vpop.f32.mrb[0].mxu0
  %v2944 = vadd.f32 %v2882, %v2943
  %v2945 = vpop.f32.mrb[0].mxu0
  %v2946 = vpop.f32.mrb[0].mxu0
  %v2947 = vpop.f32.mrb[0].mxu0
  %2948 = vdwg.mxu0
  %2949 = vst [vmem:[%s15] sm:$0xff] %v2936
  %2950 = vst [vmem:[%s15 + $0x8] sm:$0xff] %v2939
  %2951 = vst [vmem:[%s15 + $0x10] sm:$0x3] %v2944
  // Predicated region
  $region62: #{transformer_diffusion_forward.1} parent=0 // pred_check
    _
  $region63: #{transformer_diffusion_forward.1} parent=0 // pred_check_branch
    %2953 = sbr.rel (0) target = $region65
  $region64: #{transformer_diffusion_forward.1} parent=0 // pred_region
    _
  $region65: #{transformer_diffusion_forward.1} parent=0 // pred_fallthru
    _
  // Predicated region
  $region66: #{transformer_diffusion_forward.1} parent=0 // pred_check
    _
  $region67: #{transformer_diffusion_forward.1} parent=0 // pred_check_branch
    %2955 = sbr.rel (0) target = $region69
  $region68: #{transformer_diffusion_forward.1} parent=0 // pred_region
    _
  $region69: #{transformer_diffusion_forward.1} parent=0 // pred_fallthru
    _

</llo_original>
